<compile_context>
chip_gen: v7x
topology: tpu7x:2x2x1
jax: 0.10.0
libtpu: 0.0.40
codegen_flags: <defaults>
</compile_context>

<pallas_src>
import functools

import jax
import jax.numpy as jnp
from jax.experimental import pallas as pl
from jax.experimental.pallas import tpu as pltpu


# ----------------------------- Pallas kernel ------------------------------- #

def _vis_kernel(x_ref,
                w1_ref, b1_ref, w2_ref, b2_ref, w3_ref, b3_ref,
                w4_ref, b4_ref, w5_ref, b5_ref,
                out_ref, *, bf16_tail):
    """Fused pointwise MLP 3 -> 64 -> 128 -> 256 -> 128 -> 1 in transposed
    orientation.  x_ref is a (3, tn) tile (channels x points); out_ref is the
    lane-dense (1, tn) sigmoid output tile."""
    # Layer 1 (3 -> 64): VPU broadcasted multiply-adds, f32.
    h = (w1_ref[:, 0:1] * x_ref[0:1, :]
         + w1_ref[:, 1:2] * x_ref[1:2, :]
         + w1_ref[:, 2:3] * x_ref[2:3, :]
         + b1_ref[...])
    h = jnp.maximum(h, 0.0)                                       # (64, tn) f32

    if bf16_tail:
        # v6e / v7x: bf16 VALUs -> bias-add + ReLU in bf16; the relu output is
        # already the bf16 operand of the next MXU matmul (no extra cast pass).
        h = h.astype(jnp.bfloat16)
        h = jnp.maximum(
            jnp.dot(w2_ref[...], h, preferred_element_type=jnp.float32
                    ).astype(jnp.bfloat16) + b2_ref[...], 0)      # (128, tn) bf16
        h = jnp.maximum(
            jnp.dot(w3_ref[...], h, preferred_element_type=jnp.float32
                    ).astype(jnp.bfloat16) + b3_ref[...], 0)      # (256, tn) bf16
        h = jnp.maximum(
            jnp.dot(w4_ref[...], h, preferred_element_type=jnp.float32
                    ).astype(jnp.bfloat16) + b4_ref[...], 0)      # (128, tn) bf16
    else:
        # v5e: no bf16 VPU -> keep the elementwise tail in f32.
        h = jnp.dot(w2_ref[...], h.astype(jnp.bfloat16),
                    preferred_element_type=jnp.float32) + b2_ref[...]
        h = jnp.maximum(h, 0.0)                                   # (128, tn) f32
        h = jnp.dot(w3_ref[...], h.astype(jnp.bfloat16),
                    preferred_element_type=jnp.float32) + b3_ref[...]
        h = jnp.maximum(h, 0.0)                                   # (256, tn) f32
        h = jnp.dot(w4_ref[...], h.astype(jnp.bfloat16),
                    preferred_element_type=jnp.float32) + b4_ref[...]
        h = jnp.maximum(h, 0.0)                                   # (128, tn) f32

    # Layer 5 (128 -> 1): VPU multiply + sublane reduce (keeps it off the MXU).
    logits = jnp.sum(h.astype(jnp.float32) * w5_ref[...],
                     axis=0, keepdims=True) + b5_ref[...]         # (1, tn) f32
    out_ref[...] = jax.nn.sigmoid(logits).astype(out_ref.dtype)


# ------------------------------ wrapper ------------------------------------ #

def _default_bf16_tail():
    """bf16 elementwise tail only on generations with bf16 VALUs (v6e / v7x)."""
    try:
        kind = jax.devices()[0].device_kind.lower()
    except Exception:
        return False
    return ("v6" in kind) or ("v7" in kind)


def _prep_kernel_params(folded_params, *, bf16_tail):
    """Lay out folded (W:(Cin,Cout), b:(Cout,)) params for the transposed kernel."""
    (w1, b1), (w2, b2), (w3, b3), (w4, b4), (w5, b5) = folded_params
    mid_b = jnp.bfloat16 if bf16_tail else jnp.float32
    return [
        w1.T.astype(jnp.float32),                 # (64, 3)   VPU layer, f32
        b1.reshape(-1, 1).astype(jnp.float32),    # (64, 1)
        w2.T.astype(jnp.bfloat16),                # (128, 64) MXU operand
        b2.reshape(-1, 1).astype(mid_b),          # (128, 1)
        w3.T.astype(jnp.bfloat16),                # (256, 128)
        b3.reshape(-1, 1).astype(mid_b),          # (256, 1)
        w4.T.astype(jnp.bfloat16),                # (128, 256)
        b4.reshape(-1, 1).astype(mid_b),          # (128, 1)
        w5.astype(jnp.float32),                   # (128, 1)  VPU/XLU layer, f32
        b5.reshape(-1, 1).astype(jnp.float32),    # (1, 1)
    ]


def _choose_tile(bs, n, tn_req):
    """Pick a lane-aligned point tile, clamped only to the 128-padded N, while
    keeping the number of 'parallel' grid steps >= 2 and even when possible
    (v7x megacore balance; no-op on single-TC v5e/v6e)."""
    n128 = pl.cdiv(n, 128) * 128
    tn = max(128, 128 * (tn_req // 128))
    tn = min(tn, n128)

    def n_steps(t):
        return bs * pl.cdiv(n, t)

    while tn > 128 and (n_steps(tn) < 2 or n_steps(tn) % 2 != 0):
        tn = max(128, 128 * ((tn // 2) // 128))
    return tn


def visibility_forward(x, folded_params, *, tn=2048, bf16_tail=None):
    """
    Args:
      x: (bs, 3, N) float32 points (PyTorch NCW convention).
      folded_params: list of 5 (W, b) pairs, W: (C_in, C_out), b: (C_out,),
        with eval-mode BatchNorm already folded into layers 1-4.
    Returns:
      (bs, N) visibility scores in (0, 1).
    """
    bs, c, n = x.shape
    assert c == 3
    if bf16_tail is None:
        bf16_tail = _default_bf16_tail()

    x = x.astype(jnp.float32)
    tn = _choose_tile(bs, n, tn)
    num_tiles = pl.cdiv(n, tn)   # ragged last tile handled by Pallas (no host pad)

    args = _prep_kernel_params(folded_params, bf16_tail=bf16_tail)

    grid = (bs, num_tiles)
    const_spec = lambda a: pl.BlockSpec(a.shape, lambda b, j: (0, 0))
    in_specs = [pl.BlockSpec((None, 3, tn), lambda b, j: (b, 0, j))]
    in_specs += [const_spec(a) for a in args]

    # VMEM budget: live per-tile activations (f32 accumulators + bf16 copies)
    # with ~2x headroom, capped well under v7x's 64 MiB physical VMEM.
    per_point_bytes = (64 + 128 + 256 + 128) * (4 + 2)
    vmem_bytes = int(min(48 * 2**20, max(16 * 2**20, 2 * tn * per_point_bytes)))

    out = pl.pallas_call(
        functools.partial(_vis_kernel, bf16_tail=bf16_tail),
        out_shape=jax.ShapeDtypeStruct((bs, 1, n), jnp.float32),
        grid_spec=pltpu.PrefetchScalarGridSpec(
            num_scalar_prefetch=0,
            grid=grid,
            in_specs=in_specs,
            out_specs=pl.BlockSpec((None, 1, tn), lambda b, j: (b, 0, j)),
        ),
        compiler_params=pltpu.CompilerParams(
            dimension_semantics=("parallel", "parallel"),
            vmem_limit_bytes=vmem_bytes),
    )(x, *args)

    return out.reshape(bs, n)


# --------------------------- parameter setup -------------------------------- #

def _init_params(key):
    """Deterministic synthetic parameters matching VisibilityModule.__init__."""
    chans = [3, 64, 128, 256, 128, 1]
    params = []      # raw conv params: W (C_in, C_out), b (C_out,)
    bn_params = []   # (gamma, beta, running_mean, running_var) for layers 1-4
    for li in range(5):
        cin, cout = chans[li], chans[li + 1]
        key, kw, kb = jax.random.split(key, 3)
        w = jax.random.normal(kw, (cin, cout), jnp.float32) * 0.1
        b = jax.random.normal(kb, (cout,), jnp.float32) * 0.05
        params.append((w, b))
        if li < 4:
            key, kg, kbt, km, kv = jax.random.split(key, 5)
            gamma = 1.0 + 0.1 * jax.random.normal(kg, (cout,), jnp.float32)
            beta = 0.1 * jax.random.normal(kbt, (cout,), jnp.float32)
            mean = 0.1 * jax.random.normal(km, (cout,), jnp.float32)
            var = 1.0 + 0.1 * jax.random.uniform(kv, (cout,), jnp.float32)
            bn_params.append((gamma, beta, mean, var))
    return params, bn_params


def _fold_bn(params, bn_params, eps=1e-5):
    """Fold eval-mode BatchNorm1d into the preceding Conv1d(k=1).
    # TODO(synk): training-mode BN (batch statistics) is not implemented."""
    folded = []
    for li, (w, b) in enumerate(params):
        if li < 4:
            gamma, beta, mean, var = bn_params[li]
            scale = gamma / jnp.sqrt(var + eps)          # (C_out,)
            w_f = w * scale[None, :]
            b_f = (b - mean) * scale + beta
        else:
            w_f, b_f = w, b
        folded.append((w_f, b_f))
    return folded


def _reference_forward(x, folded_params, *, bf16_matmul=False, bf16_tail=False):
    """Pure-JAX reference.  bf16_matmul mimics the kernel's bf16 MXU operands on
    layers 2-4; bf16_tail additionally mimics the bf16 bias-add/ReLU glue."""
    bs, c, n = x.shape
    h = jnp.transpose(x, (0, 2, 1)).reshape(bs * n, c).astype(jnp.float32)
    for li, (w, b) in enumerate(folded_params):
        if bf16_matmul and 1 <= li <= 3:
            acc = jnp.dot(h.astype(jnp.bfloat16), w.astype(jnp.bfloat16),
                          preferred_element_type=jnp.float32)
            if bf16_tail:
                h = jnp.maximum(acc.astype(jnp.bfloat16) + b.astype(jnp.bfloat16), 0)
            else:
                h = jnp.maximum(acc + b, 0.0)
        else:
            h = jnp.dot(h.astype(jnp.float32), w) + b
            if li < 4:
                h = jnp.maximum(h, 0.0)
    return jax.nn.sigmoid(h.astype(jnp.float32)).reshape(bs, n)


# --------------------------------- main ------------------------------------- #

if __name__ == "__main__":
    key = jax.random.PRNGKey(0)
    k_param, k_x = jax.random.split(key)

    params, bn_params = _init_params(k_param)
    folded = _fold_bn(params, bn_params)

    bs, num_points = 2, 1024                 # x is (2, 3, 1024)
    x = jax.random.normal(k_x, (bs, 3, num_points), jnp.float32)

    bf16_tail = _default_bf16_tail()
    scores = visibility_forward(x, folded, tn=2048, bf16_tail=bf16_tail)
    scores = jax.block_until_ready(scores)

    ref_matched = _reference_forward(x, folded, bf16_matmul=True, bf16_tail=bf16_tail)
    ref_f32 = _reference_forward(x, folded)

    assert scores.shape == (bs, num_points)
    assert bool(jnp.all(jnp.isfinite(scores)))
    # Tight check against the precision-matched reference; loose check vs f32.
    assert jnp.allclose(scores, ref_matched, atol=5e-3, rtol=0.0)
    assert jnp.allclose(scores, ref_f32, atol=5e-2, rtol=0.0)

    print("KERNEL_OK")
</pallas_src>

<mosaic_0001>
module attributes {stable_mosaic.version = 11 : i64} {
  func.func @_vis_kernel(%arg0: i32, %arg1: i32, %arg2: memref<1x3x1024xf32, #tpu.memory_space<vmem>>, %arg3: memref<64x3xf32, #tpu.memory_space<vmem>>, %arg4: memref<64x1xf32, #tpu.memory_space<vmem>>, %arg5: memref<128x64xbf16, #tpu.memory_space<vmem>>, %arg6: memref<128x1xf32, #tpu.memory_space<vmem>>, %arg7: memref<256x128xbf16, #tpu.memory_space<vmem>>, %arg8: memref<256x1xf32, #tpu.memory_space<vmem>>, %arg9: memref<128x256xbf16, #tpu.memory_space<vmem>>, %arg10: memref<128x1xf32, #tpu.memory_space<vmem>>, %arg11: memref<128x1xf32, #tpu.memory_space<vmem>>, %arg12: memref<1x1xf32, #tpu.memory_space<vmem>>, %arg13: memref<1x1x1024xf32, #tpu.memory_space<vmem>>) attributes {dimension_semantics = [#tpu.dimension_semantics<parallel>, #tpu.dimension_semantics<parallel>], iteration_bounds = array<i64: 2, 1>, scalar_prefetch = 0 : i64, scratch_operands = 0 : i64, tpu.core_type = #tpu.core_type<tc>, window_params = [{transform_indices = @transform_0, window_bounds = array<i64: 1, 3, 1024>}, {pipeline_mode = #tpu.pipeline_mode<synchronous>, transform_indices = @transform_1, window_bounds = array<i64: 64, 3>}, {pipeline_mode = #tpu.pipeline_mode<synchronous>, transform_indices = @transform_2, window_bounds = array<i64: 64, 1>}, {pipeline_mode = #tpu.pipeline_mode<synchronous>, transform_indices = @transform_3, window_bounds = array<i64: 128, 64>}, {pipeline_mode = #tpu.pipeline_mode<synchronous>, transform_indices = @transform_4, window_bounds = array<i64: 128, 1>}, {pipeline_mode = #tpu.pipeline_mode<synchronous>, transform_indices = @transform_5, window_bounds = array<i64: 256, 128>}, {pipeline_mode = #tpu.pipeline_mode<synchronous>, transform_indices = @transform_6, window_bounds = array<i64: 256, 1>}, {pipeline_mode = #tpu.pipeline_mode<synchronous>, transform_indices = @transform_7, window_bounds = array<i64: 128, 256>}, {pipeline_mode = #tpu.pipeline_mode<synchronous>, transform_indices = @transform_8, window_bounds = array<i64: 128, 1>}, {pipeline_mode = #tpu.pipeline_mode<synchronous>, transform_indices = @transform_9, window_bounds = array<i64: 128, 1>}, {pipeline_mode = #tpu.pipeline_mode<synchronous>, transform_indices = @transform_10, window_bounds = array<i64: 1, 1>}, {transform_indices = @transform_11, window_bounds = array<i64: 1, 1, 1024>}]} {
    %c0 = arith.constant 0 : index
    %c0_0 = arith.constant 0 : index
    %0 = vector.load %arg3[%c0, %c0_0] : memref<64x3xf32, #tpu.memory_space<vmem>>, vector<64x1xf32>
    %c0_1 = arith.constant 0 : index
    %c0_2 = arith.constant 0 : index
    %c0_3 = arith.constant 0 : index
    %1 = vector.load %arg2[%c0_1, %c0_2, %c0_3] : memref<1x3x1024xf32, #tpu.memory_space<vmem>>, vector<1x1x1024xf32>
    %2 = vector.shape_cast %1 : vector<1x1x1024xf32> to vector<1x1024xf32>
    %3 = vector.broadcast %0 : vector<64x1xf32> to vector<64x1024xf32>
    %4 = vector.broadcast %2 : vector<1x1024xf32> to vector<64x1024xf32>
    %5 = arith.mulf %3, %4 : vector<64x1024xf32>
    %c0_4 = arith.constant 0 : index
    %c1 = arith.constant 1 : index
    %6 = vector.load %arg3[%c0_4, %c1] : memref<64x3xf32, #tpu.memory_space<vmem>>, vector<64x1xf32>
    %c0_5 = arith.constant 0 : index
    %c1_6 = arith.constant 1 : index
    %c0_7 = arith.constant 0 : index
    %7 = vector.load %arg2[%c0_5, %c1_6, %c0_7] : memref<1x3x1024xf32, #tpu.memory_space<vmem>>, vector<1x1x1024xf32>
    %8 = vector.shape_cast %7 : vector<1x1x1024xf32> to vector<1x1024xf32>
    %9 = vector.broadcast %6 : vector<64x1xf32> to vector<64x1024xf32>
    %10 = vector.broadcast %8 : vector<1x1024xf32> to vector<64x1024xf32>
    %11 = arith.mulf %9, %10 : vector<64x1024xf32>
    %12 = arith.addf %5, %11 : vector<64x1024xf32>
    %c0_8 = arith.constant 0 : index
    %c2 = arith.constant 2 : index
    %13 = vector.load %arg3[%c0_8, %c2] : memref<64x3xf32, #tpu.memory_space<vmem>>, vector<64x1xf32>
    %c0_9 = arith.constant 0 : index
    %c2_10 = arith.constant 2 : index
    %c0_11 = arith.constant 0 : index
    %14 = vector.load %arg2[%c0_9, %c2_10, %c0_11] : memref<1x3x1024xf32, #tpu.memory_space<vmem>>, vector<1x1x1024xf32>
    %15 = vector.shape_cast %14 : vector<1x1x1024xf32> to vector<1x1024xf32>
    %16 = vector.broadcast %13 : vector<64x1xf32> to vector<64x1024xf32>
    %17 = vector.broadcast %15 : vector<1x1024xf32> to vector<64x1024xf32>
    %18 = arith.mulf %16, %17 : vector<64x1024xf32>
    %19 = arith.addf %12, %18 : vector<64x1024xf32>
    %c0_12 = arith.constant 0 : index
    %c0_13 = arith.constant 0 : index
    %20 = vector.load %arg4[%c0_12, %c0_13] : memref<64x1xf32, #tpu.memory_space<vmem>>, vector<64x1xf32>
    %21 = vector.broadcast %20 : vector<64x1xf32> to vector<64x1024xf32>
    %22 = arith.addf %19, %21 : vector<64x1024xf32>
    %cst = arith.constant 0.000000e+00 : f32
    %23 = vector.broadcast %cst : f32 to vector<64x1024xf32>
    %24 = arith.maximumf %22, %23 : vector<64x1024xf32>
    %c0_14 = arith.constant 0 : index
    %c0_15 = arith.constant 0 : index
    %25 = vector.load %arg5[%c0_14, %c0_15] : memref<128x64xbf16, #tpu.memory_space<vmem>>, vector<128x64xbf16>
    %26 = arith.truncf %24 : vector<64x1024xf32> to vector<64x1024xbf16>
    %cst_16 = arith.constant dense<0.000000e+00> : vector<128x1024xf32>
    %27 = tpu.matmul %25, %26, %cst_16 {dimension_numbers = #tpu.dot_dimension_numbers<[1], [0], [0], [1], [0, 0, 1, 1], [], []>} : vector<128x64xbf16>, vector<64x1024xbf16>, vector<128x1024xf32> -> vector<128x1024xf32>
    %c0_17 = arith.constant 0 : index
    %c0_18 = arith.constant 0 : index
    %28 = vector.load %arg6[%c0_17, %c0_18] : memref<128x1xf32, #tpu.memory_space<vmem>>, vector<128x1xf32>
    %29 = vector.broadcast %28 : vector<128x1xf32> to vector<128x1024xf32>
    %30 = arith.addf %27, %29 : vector<128x1024xf32>
    %cst_19 = arith.constant 0.000000e+00 : f32
    %31 = vector.broadcast %cst_19 : f32 to vector<128x1024xf32>
    %32 = arith.maximumf %30, %31 : vector<128x1024xf32>
    %c0_20 = arith.constant 0 : index
    %c0_21 = arith.constant 0 : index
    %33 = vector.load %arg7[%c0_20, %c0_21] : memref<256x128xbf16, #tpu.memory_space<vmem>>, vector<256x128xbf16>
    %34 = arith.truncf %32 : vector<128x1024xf32> to vector<128x1024xbf16>
    %cst_22 = arith.constant dense<0.000000e+00> : vector<256x1024xf32>
    %35 = tpu.matmul %33, %34, %cst_22 {dimension_numbers = #tpu.dot_dimension_numbers<[1], [0], [0], [1], [0, 0, 1, 1], [], []>} : vector<256x128xbf16>, vector<128x1024xbf16>, vector<256x1024xf32> -> vector<256x1024xf32>
    %c0_23 = arith.constant 0 : index
    %c0_24 = arith.constant 0 : index
    %36 = vector.load %arg8[%c0_23, %c0_24] : memref<256x1xf32, #tpu.memory_space<vmem>>, vector<256x1xf32>
    %37 = vector.broadcast %36 : vector<256x1xf32> to vector<256x1024xf32>
    %38 = arith.addf %35, %37 : vector<256x1024xf32>
    %cst_25 = arith.constant 0.000000e+00 : f32
    %39 = vector.broadcast %cst_25 : f32 to vector<256x1024xf32>
    %40 = arith.maximumf %38, %39 : vector<256x1024xf32>
    %c0_26 = arith.constant 0 : index
    %c0_27 = arith.constant 0 : index
    %41 = vector.load %arg9[%c0_26, %c0_27] : memref<128x256xbf16, #tpu.memory_space<vmem>>, vector<128x256xbf16>
    %42 = arith.truncf %40 : vector<256x1024xf32> to vector<256x1024xbf16>
    %cst_28 = arith.constant dense<0.000000e+00> : vector<128x1024xf32>
    %43 = tpu.matmul %41, %42, %cst_28 {dimension_numbers = #tpu.dot_dimension_numbers<[1], [0], [0], [1], [0, 0, 1, 1], [], []>} : vector<128x256xbf16>, vector<256x1024xbf16>, vector<128x1024xf32> -> vector<128x1024xf32>
    %c0_29 = arith.constant 0 : index
    %c0_30 = arith.constant 0 : index
    %44 = vector.load %arg10[%c0_29, %c0_30] : memref<128x1xf32, #tpu.memory_space<vmem>>, vector<128x1xf32>
    %45 = vector.broadcast %44 : vector<128x1xf32> to vector<128x1024xf32>
    %46 = arith.addf %43, %45 : vector<128x1024xf32>
    %cst_31 = arith.constant 0.000000e+00 : f32
    %47 = vector.broadcast %cst_31 : f32 to vector<128x1024xf32>
    %48 = arith.maximumf %46, %47 : vector<128x1024xf32>
    %c0_32 = arith.constant 0 : index
    %c0_33 = arith.constant 0 : index
    %49 = vector.load %arg11[%c0_32, %c0_33] : memref<128x1xf32, #tpu.memory_space<vmem>>, vector<128x1xf32>
    %50 = vector.broadcast %49 : vector<128x1xf32> to vector<128x1024xf32>
    %51 = arith.mulf %48, %50 : vector<128x1024xf32>
    %cst_34 = arith.constant dense<0.000000e+00> : vector<1024xf32>
    %52 = vector.multi_reduction <add>, %51, %cst_34 [0] : vector<128x1024xf32> to vector<1024xf32>
    %53 = vector.shape_cast %52 : vector<1024xf32> to vector<1x1024xf32>
    %c0_35 = arith.constant 0 : index
    %c0_36 = arith.constant 0 : index
    %54 = vector.load %arg12[%c0_35, %c0_36] : memref<1x1xf32, #tpu.memory_space<vmem>>, vector<1x1xf32>
    %55 = vector.broadcast %54 : vector<1x1xf32> to vector<1x1024xf32>
    %56 = arith.addf %53, %55 : vector<1x1024xf32>
    %57 = arith.negf %56 : vector<1x1024xf32>
    %58 = math.exp %57 : vector<1x1024xf32>
    %cst_37 = arith.constant 1.000000e+00 : f32
    %59 = vector.broadcast %cst_37 : f32 to vector<1x1024xf32>
    %60 = arith.addf %59, %58 : vector<1x1024xf32>
    %61 = arith.divf %59, %60 : vector<1x1024xf32>
    %c0_38 = arith.constant 0 : index
    %c0_39 = arith.constant 0 : index
    %c0_40 = arith.constant 0 : index
    %62 = vector.load %arg13[%c0_38, %c0_39, %c0_40] : memref<1x1x1024xf32, #tpu.memory_space<vmem>>, vector<1x1x1024xf32>
    %63 = vector.shape_cast %62 : vector<1x1x1024xf32> to vector<1x1024xf32>
    %64 = vector.shape_cast %61 : vector<1x1024xf32> to vector<1x1x1024xf32>
    tpu.vector_store %arg13[%c0_38, %c0_39, %c0_40], %64 {strides = array<i32>} : memref<1x1x1024xf32, #tpu.memory_space<vmem>>, vector<1x1x1024xf32>,
    return
  }
  func.func @transform_0(%arg0: i32, %arg1: i32) -> (i32, i32, i32) {
    %c0_i32 = arith.constant 0 : i32
    %c0_i32_0 = arith.constant 0 : i32
    return %arg0, %c0_i32, %arg1 : i32, i32, i32
  }
  func.func @transform_1(%arg0: i32, %arg1: i32) -> (i32, i32) {
    %c0_i32 = arith.constant 0 : i32
    %c0_i32_0 = arith.constant 0 : i32
    %c0_i32_1 = arith.constant 0 : i32
    return %c0_i32, %c0_i32_0 : i32, i32
  }
  func.func @transform_2(%arg0: i32, %arg1: i32) -> (i32, i32) {
    %c0_i32 = arith.constant 0 : i32
    %c0_i32_0 = arith.constant 0 : i32
    %c0_i32_1 = arith.constant 0 : i32
    return %c0_i32, %c0_i32_0 : i32, i32
  }
  func.func @transform_3(%arg0: i32, %arg1: i32) -> (i32, i32) {
    %c0_i32 = arith.constant 0 : i32
    %c0_i32_0 = arith.constant 0 : i32
    %c0_i32_1 = arith.constant 0 : i32
    return %c0_i32, %c0_i32_0 : i32, i32
  }
  func.func @transform_4(%arg0: i32, %arg1: i32) -> (i32, i32) {
    %c0_i32 = arith.constant 0 : i32
    %c0_i32_0 = arith.constant 0 : i32
    %c0_i32_1 = arith.constant 0 : i32
    return %c0_i32, %c0_i32_0 : i32, i32
  }
  func.func @transform_5(%arg0: i32, %arg1: i32) -> (i32, i32) {
    %c0_i32 = arith.constant 0 : i32
    %c0_i32_0 = arith.constant 0 : i32
    %c0_i32_1 = arith.constant 0 : i32
    return %c0_i32, %c0_i32_0 : i32, i32
  }
  func.func @transform_6(%arg0: i32, %arg1: i32) -> (i32, i32) {
    %c0_i32 = arith.constant 0 : i32
    %c0_i32_0 = arith.constant 0 : i32
    %c0_i32_1 = arith.constant 0 : i32
    return %c0_i32, %c0_i32_0 : i32, i32
  }
  func.func @transform_7(%arg0: i32, %arg1: i32) -> (i32, i32) {
    %c0_i32 = arith.constant 0 : i32
    %c0_i32_0 = arith.constant 0 : i32
    %c0_i32_1 = arith.constant 0 : i32
    return %c0_i32, %c0_i32_0 : i32, i32
  }
  func.func @transform_8(%arg0: i32, %arg1: i32) -> (i32, i32) {
    %c0_i32 = arith.constant 0 : i32
    %c0_i32_0 = arith.constant 0 : i32
    %c0_i32_1 = arith.constant 0 : i32
    return %c0_i32, %c0_i32_0 : i32, i32
  }
  func.func @transform_9(%arg0: i32, %arg1: i32) -> (i32, i32) {
    %c0_i32 = arith.constant 0 : i32
    %c0_i32_0 = arith.constant 0 : i32
    %c0_i32_1 = arith.constant 0 : i32
    return %c0_i32, %c0_i32_0 : i32, i32
  }
  func.func @transform_10(%arg0: i32, %arg1: i32) -> (i32, i32) {
    %c0_i32 = arith.constant 0 : i32
    %c0_i32_0 = arith.constant 0 : i32
    %c0_i32_1 = arith.constant 0 : i32
    return %c0_i32, %c0_i32_0 : i32, i32
  }
  func.func @transform_11(%arg0: i32, %arg1: i32) -> (i32, i32, i32) {
    %c0_i32 = arith.constant 0 : i32
    %c0_i32_0 = arith.constant 0 : i32
    return %arg0, %c0_i32, %arg1 : i32, i32, i32
  }
}

</mosaic_0001>

<llo_original>
// kernel: tpu_custom_call.1
$region0: #{tpu_custom_call.1}
  #allocation0 [shape = 'u32[]', space=smem, size = 0x4, offset = 0x4, fixed_abs, tag = 'smem constant byte address 0x4 - core index']
  #allocation1 [shape = 'u32[144,128]{1,0:T(1,128)}', space=vmem, size = 0x12000, scoped, tag = 'internal scratch']
  #allocation2 [shape = 'f32[1,1]{1,0:T(1,128)S(1)}', space=vmem, size = 0x200, scoped, tag = 'scoped memory for tpu_custom_call.1']
  %s0 = inlined_call_operand.vmem [shape: f32[2,3,1024], index: 0, kind: input, shape index: {}]
  %s1 = inlined_call_operand.vmem [shape: f32[64,3], index: 1, kind: input, shape index: {}]
  %s2 = inlined_call_operand.vmem [shape: f32[64,1], index: 2, kind: input, shape index: {}]
  %s3 = inlined_call_operand.vmem [shape: bf16[128,64], index: 3, kind: input, shape index: {}]
  %s4 = inlined_call_operand.vmem [shape: f32[128,1], index: 4, kind: input, shape index: {}]
  %s5 = inlined_call_operand.vmem [shape: bf16[256,128], index: 5, kind: input, shape index: {}]
  %s6 = inlined_call_operand.vmem [shape: f32[256,1], index: 6, kind: input, shape index: {}]
  %s7 = inlined_call_operand.vmem [shape: bf16[128,256], index: 7, kind: input, shape index: {}]
  %s8 = inlined_call_operand.vmem [shape: f32[128,1], index: 8, kind: input, shape index: {}]
  %s9 = inlined_call_operand.vmem [shape: f32[128,1], index: 9, kind: input, shape index: {}]
  %s10 = inlined_call_operand.<no memory space> [shape: f32[1,1], index: 10, kind: input, shape index: {}]
  %s11 = inlined_call_operand.hbm [shape: f32[2,1,1024], index: 11, kind: output, shape index: {}]
  %s12 = sld [smem:[#allocation0]]
  $region77: #{tpu_custom_call.1} parent=0
    _
  %s14 = ssub.s32 1, %s12
  %s15 = scalar_select 0, %s14, %s12
  %v16 = vstv %s10
  %17 = vst [vmem:[#allocation2] sm:$0x1] %v16
  $region1: #{tpu_custom_call.1} parent=0
    #allocation3 [shape = 'u8[8192]{0}', space=vmem, size = 0x2000, scoped, tag = 'output window, operand 0']
    #allocation4 [shape = 's32[2]{0}', space=sflag, size = 0x8, scoped, tag = 'scoped memory for tpu_custom_call.1']
    %18 = vsyncpa [#allocation4], 0
    %s19 = scalar_lea.sflag [#allocation4], 1
    %20 = vsyncpa %s19, 0
    loop: start=0, step=1, limit=4
    $region2: #{tpu_custom_call.1} parent=1 // loop_pre_header
      _
    $region3: #{tpu_custom_call.1} parent=1 // loop_header
      %s22 = sphi 0, %s26
      %p23 = scmp.ge.s32.totalorder %s22, 4
      %s29 = sphi 0, %s41
      %s30 = sphi 0, %s37
      %s31 = sphi 0, %s29
      %s32 = sphi 0, %s30
      %s33 = sphi 0, %s31
      %s34 = sphi 0, %s32
      %s46 = sphi 0, %s48
      %s49 = sphi 0, %s46
      %s50 = sphi 0, %s49
      %s66 = sphi 0, %s50
      %s70 = sphi 0, %s70
      %s72 = sphi 0, %s70
      %s73 = sphi 0, %s72
      %s87 = sphi 0, %s73
      %s91 = sphi 0, %s91
      %s93 = sphi 0, %s91
      %s94 = sphi 0, %s93
      %s108 = sphi 0, %s94
      %s112 = sphi 0, %s112
      %s114 = sphi 0, %s112
      %s115 = sphi 0, %s114
      %s129 = sphi 0, %s115
      %s133 = sphi 0, %s133
      %s135 = sphi 0, %s133
      %s136 = sphi 0, %s135
      %s150 = sphi 0, %s136
      %s154 = sphi 0, %s154
      %s156 = sphi 0, %s154
      %s157 = sphi 0, %s156
      %s171 = sphi 0, %s157
      %s175 = sphi 0, %s175
      %s177 = sphi 0, %s175
      %s178 = sphi 0, %s177
      %s192 = sphi 0, %s178
      %s196 = sphi 0, %s196
      %s198 = sphi 0, %s196
      %s199 = sphi 0, %s198
      %s213 = sphi 0, %s199
      %s217 = sphi 0, %s217
      %s219 = sphi 0, %s217
      %s220 = sphi 0, %s219
      %s234 = sphi 0, %s220
      %s238 = sphi 0, %s238
      %s240 = sphi 0, %s238
      %s241 = sphi 0, %s240
      %s255 = sphi 0, %s241
      %s259 = sphi 0, %s259
      %s261 = sphi 0, %s259
      %s262 = sphi 0, %s261
      %s276 = sphi 0, %s262
      %s284 = sphi 0, %s286
      %s287 = sphi 0, %s284
      %s288 = sphi 0, %s287
      %s304 = sphi 0, %s288
    $region4: #{tpu_custom_call.1} parent=1 // loop_header_branch
      %25 = sbr.rel (%p23) target = $region8
    $region5: #{tpu_custom_call.1} parent=1 // loop_body
      %s27 = ssub.s32 %s22, 1
      %s28 = ssub.s32 %s22, 2
      %s35 = sadd.s32 1, %s30
      %p36 = scmp.ge.s32.totalorder %s35, 1
      %s37 = scalar_select %p36, 0, %s35
      %s38 = sadd.s32 1, %s29
      %s39 = scalar_select %p36, %s38, %s29
      %p40 = scmp.ge.s32.totalorder %s39, 2
      %s41 = scalar_select %p40, 0, %s39
      %s42 = ssub.s32 %s29, %s41
      %s43 = ssub.s32 %s30, %s37
      %s44 = sor.u32 %s42, %s43
      %p45 = scmp.eq.s32.totalorder %s44, 0
      %s47 = sadd.s32 %s46, 1
      %s48 = scalar_select %p45, %s46, %s47
      %p51 = pneg %p45
      %p52 = scmp.eq.s32.totalorder %s22, 1
      %p53 = por %p51, %p52
      %p54 = scmp.ne.s32.totalorder %s46, %s49
      %p55 = scmp.eq.s32.totalorder %s22, 0
      %p56 = por %p54, %p55
      %p57 = scmp.ne.s32.totalorder %s46, %s49
      %p58 = scmp.eq.s32.totalorder %s27, 1
      %p59 = por %p57, %p58
      %p60 = scmp.ne.s32.totalorder %s49, %s50
      %p61 = scmp.eq.s32.totalorder %s27, 0
      %p62 = por %p60, %p61
      %p63 = scmp.ne.s32.totalorder %s49, %s50
      %p64 = scmp.eq.s32.totalorder %s28, 1
      %p65 = por %p63, %p64
      %p67 = scmp.ne.s32.totalorder %s50, %s66
      %p68 = scmp.eq.s32.totalorder %s28, 0
      %p69 = por %p67, %p68
      %s71 = sadd.s32 %s70, 1
      %p74 = scmp.eq.s32.totalorder %s22, 1
      %p75 = scmp.ne.s32.totalorder %s70, %s72
      %p76 = scmp.eq.s32.totalorder %s22, 0
      %p77 = por %p75, %p76
      %p78 = scmp.ne.s32.totalorder %s70, %s72
      %p79 = scmp.eq.s32.totalorder %s27, 1
      %p80 = por %p78, %p79
      %p81 = scmp.ne.s32.totalorder %s72, %s73
      %p82 = scmp.eq.s32.totalorder %s27, 0
      %p83 = por %p81, %p82
      %p84 = scmp.ne.s32.totalorder %s72, %s73
      %p85 = scmp.eq.s32.totalorder %s28, 1
      %p86 = por %p84, %p85
      %p88 = scmp.ne.s32.totalorder %s73, %s87
      %p89 = scmp.eq.s32.totalorder %s28, 0
      %p90 = por %p88, %p89
      %s92 = sadd.s32 %s91, 1
      %p95 = scmp.eq.s32.totalorder %s22, 1
      %p96 = scmp.ne.s32.totalorder %s91, %s93
      %p97 = scmp.eq.s32.totalorder %s22, 0
      %p98 = por %p96, %p97
      %p99 = scmp.ne.s32.totalorder %s91, %s93
      %p100 = scmp.eq.s32.totalorder %s27, 1
      %p101 = por %p99, %p100
      %p102 = scmp.ne.s32.totalorder %s93, %s94
      %p103 = scmp.eq.s32.totalorder %s27, 0
      %p104 = por %p102, %p103
      %p105 = scmp.ne.s32.totalorder %s93, %s94
      %p106 = scmp.eq.s32.totalorder %s28, 1
      %p107 = por %p105, %p106
      %p109 = scmp.ne.s32.totalorder %s94, %s108
      %p110 = scmp.eq.s32.totalorder %s28, 0
      %p111 = por %p109, %p110
      %s113 = sadd.s32 %s112, 1
      %p116 = scmp.eq.s32.totalorder %s22, 1
      %p117 = scmp.ne.s32.totalorder %s112, %s114
      %p118 = scmp.eq.s32.totalorder %s22, 0
      %p119 = por %p117, %p118
      %p120 = scmp.ne.s32.totalorder %s112, %s114
      %p121 = scmp.eq.s32.totalorder %s27, 1
      %p122 = por %p120, %p121
      %p123 = scmp.ne.s32.totalorder %s114, %s115
      %p124 = scmp.eq.s32.totalorder %s27, 0
      %p125 = por %p123, %p124
      %p126 = scmp.ne.s32.totalorder %s114, %s115
      %p127 = scmp.eq.s32.totalorder %s28, 1
      %p128 = por %p126, %p127
      %p130 = scmp.ne.s32.totalorder %s115, %s129
      %p131 = scmp.eq.s32.totalorder %s28, 0
      %p132 = por %p130, %p131
      %s134 = sadd.s32 %s133, 1
      %p137 = scmp.eq.s32.totalorder %s22, 1
      %p138 = scmp.ne.s32.totalorder %s133, %s135
      %p139 = scmp.eq.s32.totalorder %s22, 0
      %p140 = por %p138, %p139
      %p141 = scmp.ne.s32.totalorder %s133, %s135
      %p142 = scmp.eq.s32.totalorder %s27, 1
      %p143 = por %p141, %p142
      %p144 = scmp.ne.s32.totalorder %s135, %s136
      %p145 = scmp.eq.s32.totalorder %s27, 0
      %p146 = por %p144, %p145
      %p147 = scmp.ne.s32.totalorder %s135, %s136
      %p148 = scmp.eq.s32.totalorder %s28, 1
      %p149 = por %p147, %p148
      %p151 = scmp.ne.s32.totalorder %s136, %s150
      %p152 = scmp.eq.s32.totalorder %s28, 0
      %p153 = por %p151, %p152
      %s155 = sadd.s32 %s154, 1
      %p158 = scmp.eq.s32.totalorder %s22, 1
      %p159 = scmp.ne.s32.totalorder %s154, %s156
      %p160 = scmp.eq.s32.totalorder %s22, 0
      %p161 = por %p159, %p160
      %p162 = scmp.ne.s32.totalorder %s154, %s156
      %p163 = scmp.eq.s32.totalorder %s27, 1
      %p164 = por %p162, %p163
      %p165 = scmp.ne.s32.totalorder %s156, %s157
      %p166 = scmp.eq.s32.totalorder %s27, 0
      %p167 = por %p165, %p166
      %p168 = scmp.ne.s32.totalorder %s156, %s157
      %p169 = scmp.eq.s32.totalorder %s28, 1
      %p170 = por %p168, %p169
      %p172 = scmp.ne.s32.totalorder %s157, %s171
      %p173 = scmp.eq.s32.totalorder %s28, 0
      %p174 = por %p172, %p173
      %s176 = sadd.s32 %s175, 1
      %p179 = scmp.eq.s32.totalorder %s22, 1
      %p180 = scmp.ne.s32.totalorder %s175, %s177
      %p181 = scmp.eq.s32.totalorder %s22, 0
      %p182 = por %p180, %p181
      %p183 = scmp.ne.s32.totalorder %s175, %s177
      %p184 = scmp.eq.s32.totalorder %s27, 1
      %p185 = por %p183, %p184
      %p186 = scmp.ne.s32.totalorder %s177, %s178
      %p187 = scmp.eq.s32.totalorder %s27, 0
      %p188 = por %p186, %p187
      %p189 = scmp.ne.s32.totalorder %s177, %s178
      %p190 = scmp.eq.s32.totalorder %s28, 1
      %p191 = por %p189, %p190
      %p193 = scmp.ne.s32.totalorder %s178, %s192
      %p194 = scmp.eq.s32.totalorder %s28, 0
      %p195 = por %p193, %p194
      %s197 = sadd.s32 %s196, 1
      %p200 = scmp.eq.s32.totalorder %s22, 1
      %p201 = scmp.ne.s32.totalorder %s196, %s198
      %p202 = scmp.eq.s32.totalorder %s22, 0
      %p203 = por %p201, %p202
      %p204 = scmp.ne.s32.totalorder %s196, %s198
      %p205 = scmp.eq.s32.totalorder %s27, 1
      %p206 = por %p204, %p205
      %p207 = scmp.ne.s32.totalorder %s198, %s199
      %p208 = scmp.eq.s32.totalorder %s27, 0
      %p209 = por %p207, %p208
      %p210 = scmp.ne.s32.totalorder %s198, %s199
      %p211 = scmp.eq.s32.totalorder %s28, 1
      %p212 = por %p210, %p211
      %p214 = scmp.ne.s32.totalorder %s199, %s213
      %p215 = scmp.eq.s32.totalorder %s28, 0
      %p216 = por %p214, %p215
      %s218 = sadd.s32 %s217, 1
      %p221 = scmp.eq.s32.totalorder %s22, 1
      %p222 = scmp.ne.s32.totalorder %s217, %s219
      %p223 = scmp.eq.s32.totalorder %s22, 0
      %p224 = por %p222, %p223
      %p225 = scmp.ne.s32.totalorder %s217, %s219
      %p226 = scmp.eq.s32.totalorder %s27, 1
      %p227 = por %p225, %p226
      %p228 = scmp.ne.s32.totalorder %s219, %s220
      %p229 = scmp.eq.s32.totalorder %s27, 0
      %p230 = por %p228, %p229
      %p231 = scmp.ne.s32.totalorder %s219, %s220
      %p232 = scmp.eq.s32.totalorder %s28, 1
      %p233 = por %p231, %p232
      %p235 = scmp.ne.s32.totalorder %s220, %s234
      %p236 = scmp.eq.s32.totalorder %s28, 0
      %p237 = por %p235, %p236
      %s239 = sadd.s32 %s238, 1
      %p242 = scmp.eq.s32.totalorder %s22, 1
      %p243 = scmp.ne.s32.totalorder %s238, %s240
      %p244 = scmp.eq.s32.totalorder %s22, 0
      %p245 = por %p243, %p244
      %p246 = scmp.ne.s32.totalorder %s238, %s240
      %p247 = scmp.eq.s32.totalorder %s27, 1
      %p248 = por %p246, %p247
      %p249 = scmp.ne.s32.totalorder %s240, %s241
      %p250 = scmp.eq.s32.totalorder %s27, 0
      %p251 = por %p249, %p250
      %p252 = scmp.ne.s32.totalorder %s240, %s241
      %p253 = scmp.eq.s32.totalorder %s28, 1
      %p254 = por %p252, %p253
      %p256 = scmp.ne.s32.totalorder %s241, %s255
      %p257 = scmp.eq.s32.totalorder %s28, 0
      %p258 = por %p256, %p257
      %s260 = sadd.s32 %s259, 1
      %p263 = scmp.eq.s32.totalorder %s22, 1
      %p264 = scmp.ne.s32.totalorder %s259, %s261
      %p265 = scmp.eq.s32.totalorder %s22, 0
      %p266 = por %p264, %p265
      %p267 = scmp.ne.s32.totalorder %s259, %s261
      %p268 = scmp.eq.s32.totalorder %s27, 1
      %p269 = por %p267, %p268
      %p270 = scmp.ne.s32.totalorder %s261, %s262
      %p271 = scmp.eq.s32.totalorder %s27, 0
      %p272 = por %p270, %p271
      %p273 = scmp.ne.s32.totalorder %s261, %s262
      %p274 = scmp.eq.s32.totalorder %s28, 1
      %p275 = por %p273, %p274
      %p277 = scmp.ne.s32.totalorder %s262, %s276
      %p278 = scmp.eq.s32.totalorder %s28, 0
      %p279 = por %p277, %p278
      %s280 = ssub.s32 %s29, %s41
      %s281 = ssub.s32 %s30, %s37
      %s282 = sor.u32 %s280, %s281
      %p283 = scmp.eq.s32.totalorder %s282, 0
      %s285 = sadd.s32 %s284, 1
      %s286 = scalar_select %p283, %s284, %s285
      %p289 = pneg %p283
      %p290 = scmp.eq.s32.totalorder %s22, 1
      %p291 = por %p289, %p290
      %p292 = scmp.ne.s32.totalorder %s284, %s287
      %p293 = scmp.eq.s32.totalorder %s22, 0
      %p294 = por %p292, %p293
      %p295 = scmp.ne.s32.totalorder %s284, %s287
      %p296 = scmp.eq.s32.totalorder %s27, 1
      %p297 = por %p295, %p296
      %p298 = scmp.ne.s32.totalorder %s287, %s288
      %p299 = scmp.eq.s32.totalorder %s27, 0
      %p300 = por %p298, %p299
      %p301 = scmp.ne.s32.totalorder %s287, %s288
      %p302 = scmp.eq.s32.totalorder %s28, 1
      %p303 = por %p301, %p302
      %p305 = scmp.ne.s32.totalorder %s288, %s304
      %p306 = scmp.eq.s32.totalorder %s28, 0
      %p307 = por %p305, %p306
      %p308 = scmp.le.s32.totalorder 1, %s22
      %p309 = scmp.lt.s32.totalorder %s22, 3
      %p310 = pnand %p308, %p309
      %p311 = pneg %p310
      // Predicated region
      $region9: #{tpu_custom_call.1} parent=5 // pred_check
        _
      $region10: #{tpu_custom_call.1} parent=5 // pred_check_branch
        %313 = sbr.rel (%p310) target = $region12
      $region11: #{tpu_custom_call.1} parent=5 // pred_region
        %s314 = ssub.s32 %s22, 1
        // Predicated region
        $region13: #{tpu_custom_call.1} parent=11 // pred_check
          %p315 = pneg %p83
        $region14: #{tpu_custom_call.1} parent=11 // pred_check_branch
          %317 = sbr.rel (%p315) target = $region16
        $region15: #{tpu_custom_call.1} parent=11 // pred_region
          _
        $region16: #{tpu_custom_call.1} parent=11 // pred_fallthru
          _
        // Predicated region
        $region17: #{tpu_custom_call.1} parent=11 // pred_check
          %p318 = pneg %p104
        $region18: #{tpu_custom_call.1} parent=11 // pred_check_branch
          %320 = sbr.rel (%p318) target = $region20
        $region19: #{tpu_custom_call.1} parent=11 // pred_region
          _
        $region20: #{tpu_custom_call.1} parent=11 // pred_fallthru
          _
        // Predicated region
        $region21: #{tpu_custom_call.1} parent=11 // pred_check
          %p321 = pneg %p125
        $region22: #{tpu_custom_call.1} parent=11 // pred_check_branch
          %323 = sbr.rel (%p321) target = $region24
        $region23: #{tpu_custom_call.1} parent=11 // pred_region
          _
        $region24: #{tpu_custom_call.1} parent=11 // pred_fallthru
          _
        // Predicated region
        $region25: #{tpu_custom_call.1} parent=11 // pred_check
          %p324 = pneg %p146
        $region26: #{tpu_custom_call.1} parent=11 // pred_check_branch
          %326 = sbr.rel (%p324) target = $region28
        $region27: #{tpu_custom_call.1} parent=11 // pred_region
          _
        $region28: #{tpu_custom_call.1} parent=11 // pred_fallthru
          _
        // Predicated region
        $region29: #{tpu_custom_call.1} parent=11 // pred_check
          %p327 = pneg %p167
        $region30: #{tpu_custom_call.1} parent=11 // pred_check_branch
          %329 = sbr.rel (%p327) target = $region32
        $region31: #{tpu_custom_call.1} parent=11 // pred_region
          _
        $region32: #{tpu_custom_call.1} parent=11 // pred_fallthru
          _
        // Predicated region
        $region33: #{tpu_custom_call.1} parent=11 // pred_check
          %p330 = pneg %p188
        $region34: #{tpu_custom_call.1} parent=11 // pred_check_branch
          %332 = sbr.rel (%p330) target = $region36
        $region35: #{tpu_custom_call.1} parent=11 // pred_region
          _
        $region36: #{tpu_custom_call.1} parent=11 // pred_fallthru
          _
        // Predicated region
        $region37: #{tpu_custom_call.1} parent=11 // pred_check
          %p333 = pneg %p209
        $region38: #{tpu_custom_call.1} parent=11 // pred_check_branch
          %335 = sbr.rel (%p333) target = $region40
        $region39: #{tpu_custom_call.1} parent=11 // pred_region
          _
        $region40: #{tpu_custom_call.1} parent=11 // pred_fallthru
          _
        // Predicated region
        $region41: #{tpu_custom_call.1} parent=11 // pred_check
          %p336 = pneg %p230
        $region42: #{tpu_custom_call.1} parent=11 // pred_check_branch
          %338 = sbr.rel (%p336) target = $region44
        $region43: #{tpu_custom_call.1} parent=11 // pred_region
          _
        $region44: #{tpu_custom_call.1} parent=11 // pred_fallthru
          _
        // Predicated region
        $region45: #{tpu_custom_call.1} parent=11 // pred_check
          %p339 = pneg %p251
        $region46: #{tpu_custom_call.1} parent=11 // pred_check_branch
          %341 = sbr.rel (%p339) target = $region48
        $region47: #{tpu_custom_call.1} parent=11 // pred_region
          _
        $region48: #{tpu_custom_call.1} parent=11 // pred_fallthru
          _
        // Predicated region
        $region49: #{tpu_custom_call.1} parent=11 // pred_check
          %p342 = pneg %p272
        $region50: #{tpu_custom_call.1} parent=11 // pred_check_branch
          %344 = sbr.rel (%p342) target = $region52
        $region51: #{tpu_custom_call.1} parent=11 // pred_region
          _
        $region52: #{tpu_custom_call.1} parent=11 // pred_fallthru
          _
      $region12: #{tpu_custom_call.1} parent=5 // pred_fallthru
        _
      %p345 = scmp.lt.s32.totalorder %s22, 2
      // Predicated region
      $region53: #{tpu_custom_call.1} parent=5 // pred_check
        %p346 = pneg %p345
      $region54: #{tpu_custom_call.1} parent=5 // pred_check_branch
        %348 = sbr.rel (%p346) target = $region56
      $region55: #{tpu_custom_call.1} parent=5 // pred_region
        // Predicated region
        $region57: #{tpu_custom_call.1} parent=55 // pred_check
          %p349 = pneg %p56
        $region58: #{tpu_custom_call.1} parent=55 // pred_check_branch
          %351 = sbr.rel (%p349) target = $region60
        $region59: #{tpu_custom_call.1} parent=55 // pred_region
          %s352 = smul.u32 8, %s30
          %p353 = scmp.lt.s32.totalorder %s29, 1
          %s354 = scalar_select %p353, %s29, 1
          %p355 = scmp.lt.s32.totalorder %s352, 7
          %s356 = scalar_select %p355, %s352, 7
          %s357 = smul.addr %s354, 8
          %s358 = sadd.s32 %s356, %s357
          %s359 = smul.addr %s358, 4
          %s360 = scalar_lea.vmem %s0, %s359
          %s361 = smul.u32 8, %s30
        $region60: #{tpu_custom_call.1} parent=55 // pred_fallthru
          _
      $region56: #{tpu_custom_call.1} parent=5 // pred_fallthru
        _
      %p362 = scmp.le.s32.totalorder 1, %s22
      %p363 = scmp.lt.s32.totalorder %s22, 3
      %p364 = pnand %p362, %p363
      %p365 = pneg %p364
      // Predicated region
      $region61: #{tpu_custom_call.1} parent=5 // pred_check
        _
      $region62: #{tpu_custom_call.1} parent=5 // pred_check_branch
        %367 = sbr.rel (%p364) target = $region64
      $region63: #{tpu_custom_call.1} parent=5 // pred_region
        %s368 = ssub.s32 %s22, 1
        %s369 = smul.u32 8, %s32
        %p370 = scmp.lt.s32.totalorder %s31, 1
        %s371 = scalar_select %p370, %s31, 1
        %p372 = scmp.lt.s32.totalorder %s369, 7
        %s373 = scalar_select %p372, %s369, 7
        %s374 = smul.addr %s371, 8
        %s375 = sadd.s32 %s373, %s374
        %s376 = smul.addr %s375, 4
        %s377 = scalar_lea.vmem %s0, %s376
        %p378 = pneg %p62
        %p379 = pneg %p59
        %p380 = pneg %p83
        %p381 = pneg %p80
        %p382 = pneg %p104
        %p383 = pneg %p101
        %p384 = pneg %p125
        %p385 = pneg %p122
        %p386 = pneg %p146
        %p387 = pneg %p143
        %p388 = pneg %p167
        %p389 = pneg %p164
        %p390 = pneg %p188
        %p391 = pneg %p185
        %p392 = pneg %p209
        %p393 = pneg %p206
        %p394 = pneg %p230
        %p395 = pneg %p227
        %p396 = pneg %p251
        %p397 = pneg %p248
        %p398 = pneg %p272
        %p399 = pneg %p269
        %p400 = pneg %p300
        %p401 = pneg %p297
        %s402 = sand.u32 %s287, 1
        %s403 = scalar_lea.sflag [#allocation4], %s402
        %s404 = sand.u32 %s287, 1
        %s405 = smul.addr %s404, 8
        %s406 = scalar_lea.vmem [#allocation3], %s405
        %s407 = smul.u32 8, %s32
        %p408 = scmp.lt.s32.totalorder %s31, 1
        %s409 = scalar_select %p408, %s31, 1
        %p410 = scmp.lt.s32.totalorder %s407, 7
        %s411 = scalar_select %p410, %s407, 7
        %s412 = smul.addr %s409, 8
        %s413 = sadd.s32 %s411, %s412
        %s414 = smul.addr %s413, 4
        %s415 = scalar_lea.vmem %s0, %s414
        %s416 = smul.u32 8, %s32
        %s417 = smul.u32 8, %s32
        %v419 = vld [vmem:[%s1] sm:$0xff]
        %v420 = vld [vmem:[%s1 + $0x8] sm:$0xff]
        %v421 = vld [vmem:[%s1 + $0x10] sm:$0xff]
        %v422 = vld [vmem:[%s1 + $0x18] sm:$0xff]
        %v423 = vld [vmem:[%s1 + $0x20] sm:$0xff]
        %v424 = vld [vmem:[%s1 + $0x28] sm:$0xff]
        %v425 = vld [vmem:[%s1 + $0x30] sm:$0xff]
        %v426 = vld [vmem:[%s1 + $0x38] sm:$0xff]
        %v427 = vld [vmem:[%s415] ss:$4 sm:$0xff]
        %429 = vset.pattern.permute.xlu0 0
        %430 = vperm.xlu0 %429, %v419
        %v431 = vpop.permute.xlu0 %430
        %434 = vset.pattern.permute.xlu0 0
        %435 = vperm.xlu0 %434, %v420
        %v436 = vpop.permute.xlu0 %435
        %439 = vset.pattern.permute.xlu0 0
        %440 = vperm.xlu0 %439, %v421
        %v441 = vpop.permute.xlu0 %440
        %444 = vset.pattern.permute.xlu0 0
        %445 = vperm.xlu0 %444, %v422
        %v446 = vpop.permute.xlu0 %445
        %449 = vset.pattern.permute.xlu0 0
        %450 = vperm.xlu0 %449, %v423
        %v451 = vpop.permute.xlu0 %450
        %454 = vset.pattern.permute.xlu0 0
        %455 = vperm.xlu0 %454, %v424
        %v456 = vpop.permute.xlu0 %455
        %459 = vset.pattern.permute.xlu0 0
        %460 = vperm.xlu0 %459, %v425
        %v461 = vpop.permute.xlu0 %460
        %464 = vset.pattern.permute.xlu0 0
        %465 = vperm.xlu0 %464, %v426
        %v466 = vpop.permute.xlu0 %465
        %v469 = vlaneseq
        %v470 = vshrl.u32 %v469, 7
        %v471 = vsub.s32 0, %v470
        %v472 = vrot.slane %v427, %v471
        %v473 = vlaneseq
        %v474 = vshrl.u32 %v473, 7
        %v475 = vsub.s32 1, %v474
        %v476 = vrot.slane %v427, %v475
        %v477 = vlaneseq
        %v478 = vshrl.u32 %v477, 7
        %v479 = vsub.s32 2, %v478
        %v480 = vrot.slane %v427, %v479
        %v481 = vlaneseq
        %v482 = vshrl.u32 %v481, 7
        %v483 = vsub.s32 3, %v482
        %v484 = vrot.slane %v427, %v483
        %v485 = vlaneseq
        %v486 = vshrl.u32 %v485, 7
        %v487 = vsub.s32 4, %v486
        %v488 = vrot.slane %v427, %v487
        %v489 = vlaneseq
        %v490 = vshrl.u32 %v489, 7
        %v491 = vsub.s32 5, %v490
        %v492 = vrot.slane %v427, %v491
        %v493 = vlaneseq
        %v494 = vshrl.u32 %v493, 7
        %v495 = vsub.s32 6, %v494
        %v496 = vrot.slane %v427, %v495
        %v497 = vlaneseq
        %v498 = vshrl.u32 %v497, 7
        %v499 = vsub.s32 7, %v498
        %v500 = vrot.slane %v427, %v499
        %v509 = vmul.f32 %v431, %v472
        %v510 = vmul.f32 %v431, %v476
        %v511 = vmul.f32 %v431, %v480
        %v512 = vmul.f32 %v431, %v484
        %v513 = vmul.f32 %v431, %v488
        %v514 = vmul.f32 %v431, %v492
        %v515 = vmul.f32 %v431, %v496
        %v516 = vmul.f32 %v431, %v500
        %v517 = vmul.f32 %v436, %v472
        %v518 = vmul.f32 %v436, %v476
        %v519 = vmul.f32 %v436, %v480
        %v520 = vmul.f32 %v436, %v484
        %v521 = vmul.f32 %v436, %v488
        %v522 = vmul.f32 %v436, %v492
        %v523 = vmul.f32 %v436, %v496
        %v524 = vmul.f32 %v436, %v500
        %v525 = vmul.f32 %v441, %v472
        %v526 = vmul.f32 %v441, %v476
        %v527 = vmul.f32 %v441, %v480
        %v528 = vmul.f32 %v441, %v484
        %v529 = vmul.f32 %v441, %v488
        %v530 = vmul.f32 %v441, %v492
        %v531 = vmul.f32 %v441, %v496
        %v532 = vmul.f32 %v441, %v500
        %v533 = vmul.f32 %v446, %v472
        %v534 = vmul.f32 %v446, %v476
        %v535 = vmul.f32 %v446, %v480
        %v536 = vmul.f32 %v446, %v484
        %v537 = vmul.f32 %v446, %v488
        %v538 = vmul.f32 %v446, %v492
        %v539 = vmul.f32 %v446, %v496
        %v540 = vmul.f32 %v446, %v500
        %v541 = vmul.f32 %v451, %v472
        %v542 = vmul.f32 %v451, %v476
        %v543 = vmul.f32 %v451, %v480
        %v544 = vmul.f32 %v451, %v484
        %v545 = vmul.f32 %v451, %v488
        %v546 = vmul.f32 %v451, %v492
        %v547 = vmul.f32 %v451, %v496
        %v548 = vmul.f32 %v451, %v500
        %v549 = vmul.f32 %v456, %v472
        %v550 = vmul.f32 %v456, %v476
        %v551 = vmul.f32 %v456, %v480
        %v552 = vmul.f32 %v456, %v484
        %v553 = vmul.f32 %v456, %v488
        %v554 = vmul.f32 %v456, %v492
        %v555 = vmul.f32 %v456, %v496
        %v556 = vmul.f32 %v456, %v500
        %v557 = vmul.f32 %v461, %v472
        %v558 = vmul.f32 %v461, %v476
        %v559 = vmul.f32 %v461, %v480
        %v560 = vmul.f32 %v461, %v484
        %v561 = vmul.f32 %v461, %v488
        %v562 = vmul.f32 %v461, %v492
        %v563 = vmul.f32 %v461, %v496
        %v564 = vmul.f32 %v461, %v500
        %v565 = vmul.f32 %v466, %v472
        %v566 = vmul.f32 %v466, %v476
        %v567 = vmul.f32 %v466, %v480
        %v568 = vmul.f32 %v466, %v484
        %v569 = vmul.f32 %v466, %v488
        %v570 = vmul.f32 %v466, %v492
        %v571 = vmul.f32 %v466, %v496
        %v572 = vmul.f32 %v466, %v500
        %s573 = scalar_lea.vmem %s415, 1
        %v574 = vld [vmem:[%s573] ss:$4 sm:$0xff]
        %575 = vset.pattern.permute.xlu0 1
        %576 = vperm.xlu0 %575, %v419
        %v577 = vpop.permute.xlu0 %576
        %579 = vset.pattern.permute.xlu0 1
        %580 = vperm.xlu0 %579, %v420
        %v581 = vpop.permute.xlu0 %580
        %583 = vset.pattern.permute.xlu0 1
        %584 = vperm.xlu0 %583, %v421
        %v585 = vpop.permute.xlu0 %584
        %587 = vset.pattern.permute.xlu0 1
        %588 = vperm.xlu0 %587, %v422
        %v589 = vpop.permute.xlu0 %588
        %591 = vset.pattern.permute.xlu0 1
        %592 = vperm.xlu0 %591, %v423
        %v593 = vpop.permute.xlu0 %592
        %595 = vset.pattern.permute.xlu0 1
        %596 = vperm.xlu0 %595, %v424
        %v597 = vpop.permute.xlu0 %596
        %599 = vset.pattern.permute.xlu0 1
        %600 = vperm.xlu0 %599, %v425
        %v601 = vpop.permute.xlu0 %600
        %603 = vset.pattern.permute.xlu0 1
        %604 = vperm.xlu0 %603, %v426
        %v605 = vpop.permute.xlu0 %604
        %v608 = vlaneseq
        %v609 = vshrl.u32 %v608, 7
        %v610 = vsub.s32 0, %v609
        %v611 = vrot.slane %v574, %v610
        %v612 = vlaneseq
        %v613 = vshrl.u32 %v612, 7
        %v614 = vsub.s32 1, %v613
        %v615 = vrot.slane %v574, %v614
        %v616 = vlaneseq
        %v617 = vshrl.u32 %v616, 7
        %v618 = vsub.s32 2, %v617
        %v619 = vrot.slane %v574, %v618
        %v620 = vlaneseq
        %v621 = vshrl.u32 %v620, 7
        %v622 = vsub.s32 3, %v621
        %v623 = vrot.slane %v574, %v622
        %v624 = vlaneseq
        %v625 = vshrl.u32 %v624, 7
        %v626 = vsub.s32 4, %v625
        %v627 = vrot.slane %v574, %v626
        %v628 = vlaneseq
        %v629 = vshrl.u32 %v628, 7
        %v630 = vsub.s32 5, %v629
        %v631 = vrot.slane %v574, %v630
        %v632 = vlaneseq
        %v633 = vshrl.u32 %v632, 7
        %v634 = vsub.s32 6, %v633
        %v635 = vrot.slane %v574, %v634
        %v636 = vlaneseq
        %v637 = vshrl.u32 %v636, 7
        %v638 = vsub.s32 7, %v637
        %v639 = vrot.slane %v574, %v638
        %v648 = vmul.f32 %v577, %v611
        %v649 = vmul.f32 %v577, %v615
        %v650 = vmul.f32 %v577, %v619
        %v651 = vmul.f32 %v577, %v623
        %v652 = vmul.f32 %v577, %v627
        %v653 = vmul.f32 %v577, %v631
        %v654 = vmul.f32 %v577, %v635
        %v655 = vmul.f32 %v577, %v639
        %v656 = vmul.f32 %v581, %v611
        %v657 = vmul.f32 %v581, %v615
        %v658 = vmul.f32 %v581, %v619
        %v659 = vmul.f32 %v581, %v623
        %v660 = vmul.f32 %v581, %v627
        %v661 = vmul.f32 %v581, %v631
        %v662 = vmul.f32 %v581, %v635
        %v663 = vmul.f32 %v581, %v639
        %v664 = vmul.f32 %v585, %v611
        %v665 = vmul.f32 %v585, %v615
        %v666 = vmul.f32 %v585, %v619
        %v667 = vmul.f32 %v585, %v623
        %v668 = vmul.f32 %v585, %v627
        %v669 = vmul.f32 %v585, %v631
        %v670 = vmul.f32 %v585, %v635
        %v671 = vmul.f32 %v585, %v639
        %v672 = vmul.f32 %v589, %v611
        %v673 = vmul.f32 %v589, %v615
        %v674 = vmul.f32 %v589, %v619
        %v675 = vmul.f32 %v589, %v623
        %v676 = vmul.f32 %v589, %v627
        %v677 = vmul.f32 %v589, %v631
        %v678 = vmul.f32 %v589, %v635
        %v679 = vmul.f32 %v589, %v639
        %v680 = vmul.f32 %v593, %v611
        %v681 = vmul.f32 %v593, %v615
        %v682 = vmul.f32 %v593, %v619
        %v683 = vmul.f32 %v593, %v623
        %v684 = vmul.f32 %v593, %v627
        %v685 = vmul.f32 %v593, %v631
        %v686 = vmul.f32 %v593, %v635
        %v687 = vmul.f32 %v593, %v639
        %v688 = vmul.f32 %v597, %v611
        %v689 = vmul.f32 %v597, %v615
        %v690 = vmul.f32 %v597, %v619
        %v691 = vmul.f32 %v597, %v623
        %v692 = vmul.f32 %v597, %v627
        %v693 = vmul.f32 %v597, %v631
        %v694 = vmul.f32 %v597, %v635
        %v695 = vmul.f32 %v597, %v639
        %v696 = vmul.f32 %v601, %v611
        %v697 = vmul.f32 %v601, %v615
        %v698 = vmul.f32 %v601, %v619
        %v699 = vmul.f32 %v601, %v623
        %v700 = vmul.f32 %v601, %v627
        %v701 = vmul.f32 %v601, %v631
        %v702 = vmul.f32 %v601, %v635
        %v703 = vmul.f32 %v601, %v639
        %v704 = vmul.f32 %v605, %v611
        %v705 = vmul.f32 %v605, %v615
        %v706 = vmul.f32 %v605, %v619
        %v707 = vmul.f32 %v605, %v623
        %v708 = vmul.f32 %v605, %v627
        %v709 = vmul.f32 %v605, %v631
        %v710 = vmul.f32 %v605, %v635
        %v711 = vmul.f32 %v605, %v639
        %v712 = vadd.f32 %v509, %v648
        %v713 = vadd.f32 %v510, %v649
        %v714 = vadd.f32 %v511, %v650
        %v715 = vadd.f32 %v512, %v651
        %v716 = vadd.f32 %v513, %v652
        %v717 = vadd.f32 %v514, %v653
        %v718 = vadd.f32 %v515, %v654
        %v719 = vadd.f32 %v516, %v655
        %v720 = vadd.f32 %v517, %v656
        %v721 = vadd.f32 %v518, %v657
        %v722 = vadd.f32 %v519, %v658
        %v723 = vadd.f32 %v520, %v659
        %v724 = vadd.f32 %v521, %v660
        %v725 = vadd.f32 %v522, %v661
        %v726 = vadd.f32 %v523, %v662
        %v727 = vadd.f32 %v524, %v663
        %v728 = vadd.f32 %v525, %v664
        %v729 = vadd.f32 %v526, %v665
        %v730 = vadd.f32 %v527, %v666
        %v731 = vadd.f32 %v528, %v667
        %v732 = vadd.f32 %v529, %v668
        %v733 = vadd.f32 %v530, %v669
        %v734 = vadd.f32 %v531, %v670
        %v735 = vadd.f32 %v532, %v671
        %v736 = vadd.f32 %v533, %v672
        %v737 = vadd.f32 %v534, %v673
        %v738 = vadd.f32 %v535, %v674
        %v739 = vadd.f32 %v536, %v675
        %v740 = vadd.f32 %v537, %v676
        %v741 = vadd.f32 %v538, %v677
        %v742 = vadd.f32 %v539, %v678
        %v743 = vadd.f32 %v540, %v679
        %v744 = vadd.f32 %v541, %v680
        %v745 = vadd.f32 %v542, %v681
        %v746 = vadd.f32 %v543, %v682
        %v747 = vadd.f32 %v544, %v683
        %v748 = vadd.f32 %v545, %v684
        %v749 = vadd.f32 %v546, %v685
        %v750 = vadd.f32 %v547, %v686
        %v751 = vadd.f32 %v548, %v687
        %v752 = vadd.f32 %v549, %v688
        %v753 = vadd.f32 %v550, %v689
        %v754 = vadd.f32 %v551, %v690
        %v755 = vadd.f32 %v552, %v691
        %v756 = vadd.f32 %v553, %v692
        %v757 = vadd.f32 %v554, %v693
        %v758 = vadd.f32 %v555, %v694
        %v759 = vadd.f32 %v556, %v695
        %v760 = vadd.f32 %v557, %v696
        %v761 = vadd.f32 %v558, %v697
        %v762 = vadd.f32 %v559, %v698
        %v763 = vadd.f32 %v560, %v699
        %v764 = vadd.f32 %v561, %v700
        %v765 = vadd.f32 %v562, %v701
        %v766 = vadd.f32 %v563, %v702
        %v767 = vadd.f32 %v564, %v703
        %v768 = vadd.f32 %v565, %v704
        %v769 = vadd.f32 %v566, %v705
        %v770 = vadd.f32 %v567, %v706
        %v771 = vadd.f32 %v568, %v707
        %v772 = vadd.f32 %v569, %v708
        %v773 = vadd.f32 %v570, %v709
        %v774 = vadd.f32 %v571, %v710
        %v775 = vadd.f32 %v572, %v711
        %s776 = scalar_lea.vmem %s415, 2
        %v777 = vld [vmem:[%s776] ss:$4 sm:$0xff]
        %778 = vset.pattern.permute.xlu0 2
        %779 = vperm.xlu0 %778, %v419
        %v780 = vpop.permute.xlu0 %779
        %782 = vset.pattern.permute.xlu0 2
        %783 = vperm.xlu0 %782, %v420
        %v784 = vpop.permute.xlu0 %783
        %786 = vset.pattern.permute.xlu0 2
        %787 = vperm.xlu0 %786, %v421
        %v788 = vpop.permute.xlu0 %787
        %790 = vset.pattern.permute.xlu0 2
        %791 = vperm.xlu0 %790, %v422
        %v792 = vpop.permute.xlu0 %791
        %794 = vset.pattern.permute.xlu0 2
        %795 = vperm.xlu0 %794, %v423
        %v796 = vpop.permute.xlu0 %795
        %798 = vset.pattern.permute.xlu0 2
        %799 = vperm.xlu0 %798, %v424
        %v800 = vpop.permute.xlu0 %799
        %802 = vset.pattern.permute.xlu0 2
        %803 = vperm.xlu0 %802, %v425
        %v804 = vpop.permute.xlu0 %803
        %806 = vset.pattern.permute.xlu0 2
        %807 = vperm.xlu0 %806, %v426
        %v808 = vpop.permute.xlu0 %807
        %v811 = vlaneseq
        %v812 = vshrl.u32 %v811, 7
        %v813 = vsub.s32 0, %v812
        %v814 = vrot.slane %v777, %v813
        %v815 = vlaneseq
        %v816 = vshrl.u32 %v815, 7
        %v817 = vsub.s32 1, %v816
        %v818 = vrot.slane %v777, %v817
        %v819 = vlaneseq
        %v820 = vshrl.u32 %v819, 7
        %v821 = vsub.s32 2, %v820
        %v822 = vrot.slane %v777, %v821
        %v823 = vlaneseq
        %v824 = vshrl.u32 %v823, 7
        %v825 = vsub.s32 3, %v824
        %v826 = vrot.slane %v777, %v825
        %v827 = vlaneseq
        %v828 = vshrl.u32 %v827, 7
        %v829 = vsub.s32 4, %v828
        %v830 = vrot.slane %v777, %v829
        %v831 = vlaneseq
        %v832 = vshrl.u32 %v831, 7
        %v833 = vsub.s32 5, %v832
        %v834 = vrot.slane %v777, %v833
        %v835 = vlaneseq
        %v836 = vshrl.u32 %v835, 7
        %v837 = vsub.s32 6, %v836
        %v838 = vrot.slane %v777, %v837
        %v839 = vlaneseq
        %v840 = vshrl.u32 %v839, 7
        %v841 = vsub.s32 7, %v840
        %v842 = vrot.slane %v777, %v841
        %v851 = vmul.f32 %v780, %v814
        %v852 = vmul.f32 %v780, %v818
        %v853 = vmul.f32 %v780, %v822
        %v854 = vmul.f32 %v780, %v826
        %v855 = vmul.f32 %v780, %v830
        %v856 = vmul.f32 %v780, %v834
        %v857 = vmul.f32 %v780, %v838
        %v858 = vmul.f32 %v780, %v842
        %v859 = vmul.f32 %v784, %v814
        %v860 = vmul.f32 %v784, %v818
        %v861 = vmul.f32 %v784, %v822
        %v862 = vmul.f32 %v784, %v826
        %v863 = vmul.f32 %v784, %v830
        %v864 = vmul.f32 %v784, %v834
        %v865 = vmul.f32 %v784, %v838
        %v866 = vmul.f32 %v784, %v842
        %v867 = vmul.f32 %v788, %v814
        %v868 = vmul.f32 %v788, %v818
        %v869 = vmul.f32 %v788, %v822
        %v870 = vmul.f32 %v788, %v826
        %v871 = vmul.f32 %v788, %v830
        %v872 = vmul.f32 %v788, %v834
        %v873 = vmul.f32 %v788, %v838
        %v874 = vmul.f32 %v788, %v842
        %v875 = vmul.f32 %v792, %v814
        %v876 = vmul.f32 %v792, %v818
        %v877 = vmul.f32 %v792, %v822
        %v878 = vmul.f32 %v792, %v826
        %v879 = vmul.f32 %v792, %v830
        %v880 = vmul.f32 %v792, %v834
        %v881 = vmul.f32 %v792, %v838
        %v882 = vmul.f32 %v792, %v842
        %v883 = vmul.f32 %v796, %v814
        %v884 = vmul.f32 %v796, %v818
        %v885 = vmul.f32 %v796, %v822
        %v886 = vmul.f32 %v796, %v826
        %v887 = vmul.f32 %v796, %v830
        %v888 = vmul.f32 %v796, %v834
        %v889 = vmul.f32 %v796, %v838
        %v890 = vmul.f32 %v796, %v842
        %v891 = vmul.f32 %v800, %v814
        %v892 = vmul.f32 %v800, %v818
        %v893 = vmul.f32 %v800, %v822
        %v894 = vmul.f32 %v800, %v826
        %v895 = vmul.f32 %v800, %v830
        %v896 = vmul.f32 %v800, %v834
        %v897 = vmul.f32 %v800, %v838
        %v898 = vmul.f32 %v800, %v842
        %v899 = vmul.f32 %v804, %v814
        %v900 = vmul.f32 %v804, %v818
        %v901 = vmul.f32 %v804, %v822
        %v902 = vmul.f32 %v804, %v826
        %v903 = vmul.f32 %v804, %v830
        %v904 = vmul.f32 %v804, %v834
        %v905 = vmul.f32 %v804, %v838
        %v906 = vmul.f32 %v804, %v842
        %v907 = vmul.f32 %v808, %v814
        %v908 = vmul.f32 %v808, %v818
        %v909 = vmul.f32 %v808, %v822
        %v910 = vmul.f32 %v808, %v826
        %v911 = vmul.f32 %v808, %v830
        %v912 = vmul.f32 %v808, %v834
        %v913 = vmul.f32 %v808, %v838
        %v914 = vmul.f32 %v808, %v842
        %v915 = vadd.f32 %v712, %v851
        %v916 = vadd.f32 %v713, %v852
        %v917 = vadd.f32 %v714, %v853
        %v918 = vadd.f32 %v715, %v854
        %v919 = vadd.f32 %v716, %v855
        %v920 = vadd.f32 %v717, %v856
        %v921 = vadd.f32 %v718, %v857
        %v922 = vadd.f32 %v719, %v858
        %v923 = vadd.f32 %v720, %v859
        %v924 = vadd.f32 %v721, %v860
        %v925 = vadd.f32 %v722, %v861
        %v926 = vadd.f32 %v723, %v862
        %v927 = vadd.f32 %v724, %v863
        %v928 = vadd.f32 %v725, %v864
        %v929 = vadd.f32 %v726, %v865
        %v930 = vadd.f32 %v727, %v866
        %v931 = vadd.f32 %v728, %v867
        %v932 = vadd.f32 %v729, %v868
        %v933 = vadd.f32 %v730, %v869
        %v934 = vadd.f32 %v731, %v870
        %v935 = vadd.f32 %v732, %v871
        %v936 = vadd.f32 %v733, %v872
        %v937 = vadd.f32 %v734, %v873
        %v938 = vadd.f32 %v735, %v874
        %v939 = vadd.f32 %v736, %v875
        %v940 = vadd.f32 %v737, %v876
        %v941 = vadd.f32 %v738, %v877
        %v942 = vadd.f32 %v739, %v878
        %v943 = vadd.f32 %v740, %v879
        %v944 = vadd.f32 %v741, %v880
        %v945 = vadd.f32 %v742, %v881
        %v946 = vadd.f32 %v743, %v882
        %v947 = vadd.f32 %v744, %v883
        %v948 = vadd.f32 %v745, %v884
        %v949 = vadd.f32 %v746, %v885
        %v950 = vadd.f32 %v747, %v886
        %v951 = vadd.f32 %v748, %v887
        %v952 = vadd.f32 %v749, %v888
        %v953 = vadd.f32 %v750, %v889
        %v954 = vadd.f32 %v751, %v890
        %v955 = vadd.f32 %v752, %v891
        %v956 = vadd.f32 %v753, %v892
        %v957 = vadd.f32 %v754, %v893
        %v958 = vadd.f32 %v755, %v894
        %v959 = vadd.f32 %v756, %v895
        %v960 = vadd.f32 %v757, %v896
        %v961 = vadd.f32 %v758, %v897
        %v962 = vadd.f32 %v759, %v898
        %v963 = vadd.f32 %v760, %v899
        %v964 = vadd.f32 %v761, %v900
        %v965 = vadd.f32 %v762, %v901
        %v966 = vadd.f32 %v763, %v902
        %v967 = vadd.f32 %v764, %v903
        %v968 = vadd.f32 %v765, %v904
        %v969 = vadd.f32 %v766, %v905
        %v970 = vadd.f32 %v767, %v906
        %v971 = vadd.f32 %v768, %v907
        %v972 = vadd.f32 %v769, %v908
        %v973 = vadd.f32 %v770, %v909
        %v974 = vadd.f32 %v771, %v910
        %v975 = vadd.f32 %v772, %v911
        %v976 = vadd.f32 %v773, %v912
        %v977 = vadd.f32 %v774, %v913
        %v978 = vadd.f32 %v775, %v914
        %v979 = vld [vmem:[%s2] sm:$0xff]
        %v980 = vld [vmem:[%s2 + $0x8] sm:$0xff]
        %v981 = vld [vmem:[%s2 + $0x10] sm:$0xff]
        %v982 = vld [vmem:[%s2 + $0x18] sm:$0xff]
        %v983 = vld [vmem:[%s2 + $0x20] sm:$0xff]
        %v984 = vld [vmem:[%s2 + $0x28] sm:$0xff]
        %v985 = vld [vmem:[%s2 + $0x30] sm:$0xff]
        %v986 = vld [vmem:[%s2 + $0x38] sm:$0xff]
        %988 = vset.pattern.permute.xlu0 0
        %989 = vperm.xlu0 %988, %v979
        %v990 = vpop.permute.xlu0 %989
        %993 = vset.pattern.permute.xlu0 0
        %994 = vperm.xlu0 %993, %v980
        %v995 = vpop.permute.xlu0 %994
        %998 = vset.pattern.permute.xlu0 0
        %999 = vperm.xlu0 %998, %v981
        %v1000 = vpop.permute.xlu0 %999
        %1003 = vset.pattern.permute.xlu0 0
        %1004 = vperm.xlu0 %1003, %v982
        %v1005 = vpop.permute.xlu0 %1004
        %1008 = vset.pattern.permute.xlu0 0
        %1009 = vperm.xlu0 %1008, %v983
        %v1010 = vpop.permute.xlu0 %1009
        %1013 = vset.pattern.permute.xlu0 0
        %1014 = vperm.xlu0 %1013, %v984
        %v1015 = vpop.permute.xlu0 %1014
        %1018 = vset.pattern.permute.xlu0 0
        %1019 = vperm.xlu0 %1018, %v985
        %v1020 = vpop.permute.xlu0 %1019
        %1023 = vset.pattern.permute.xlu0 0
        %1024 = vperm.xlu0 %1023, %v986
        %v1025 = vpop.permute.xlu0 %1024
        %v1027 = vadd.f32 %v915, %v990
        %v1028 = vadd.f32 %v916, %v990
        %v1029 = vadd.f32 %v917, %v990
        %v1030 = vadd.f32 %v918, %v990
        %v1031 = vadd.f32 %v919, %v990
        %v1032 = vadd.f32 %v920, %v990
        %v1033 = vadd.f32 %v921, %v990
        %v1034 = vadd.f32 %v922, %v990
        %v1035 = vadd.f32 %v923, %v995
        %v1036 = vadd.f32 %v924, %v995
        %v1037 = vadd.f32 %v925, %v995
        %v1038 = vadd.f32 %v926, %v995
        %v1039 = vadd.f32 %v927, %v995
        %v1040 = vadd.f32 %v928, %v995
        %v1041 = vadd.f32 %v929, %v995
        %v1042 = vadd.f32 %v930, %v995
        %v1043 = vadd.f32 %v931, %v1000
        %v1044 = vadd.f32 %v932, %v1000
        %v1045 = vadd.f32 %v933, %v1000
        %v1046 = vadd.f32 %v934, %v1000
        %v1047 = vadd.f32 %v935, %v1000
        %v1048 = vadd.f32 %v936, %v1000
        %v1049 = vadd.f32 %v937, %v1000
        %v1050 = vadd.f32 %v938, %v1000
        %v1051 = vadd.f32 %v939, %v1005
        %v1052 = vadd.f32 %v940, %v1005
        %v1053 = vadd.f32 %v941, %v1005
        %v1054 = vadd.f32 %v942, %v1005
        %v1055 = vadd.f32 %v943, %v1005
        %v1056 = vadd.f32 %v944, %v1005
        %v1057 = vadd.f32 %v945, %v1005
        %v1058 = vadd.f32 %v946, %v1005
        %v1059 = vadd.f32 %v947, %v1010
        %v1060 = vadd.f32 %v948, %v1010
        %v1061 = vadd.f32 %v949, %v1010
        %v1062 = vadd.f32 %v950, %v1010
        %v1063 = vadd.f32 %v951, %v1010
        %v1064 = vadd.f32 %v952, %v1010
        %v1065 = vadd.f32 %v953, %v1010
        %v1066 = vadd.f32 %v954, %v1010
        %v1067 = vadd.f32 %v955, %v1015
        %v1068 = vadd.f32 %v956, %v1015
        %v1069 = vadd.f32 %v957, %v1015
        %v1070 = vadd.f32 %v958, %v1015
        %v1071 = vadd.f32 %v959, %v1015
        %v1072 = vadd.f32 %v960, %v1015
        %v1073 = vadd.f32 %v961, %v1015
        %v1074 = vadd.f32 %v962, %v1015
        %v1075 = vadd.f32 %v963, %v1020
        %v1076 = vadd.f32 %v964, %v1020
        %v1077 = vadd.f32 %v965, %v1020
        %v1078 = vadd.f32 %v966, %v1020
        %v1079 = vadd.f32 %v967, %v1020
        %v1080 = vadd.f32 %v968, %v1020
        %v1081 = vadd.f32 %v969, %v1020
        %v1082 = vadd.f32 %v970, %v1020
        %v1083 = vadd.f32 %v971, %v1025
        %v1084 = vadd.f32 %v972, %v1025
        %v1085 = vadd.f32 %v973, %v1025
        %v1086 = vadd.f32 %v974, %v1025
        %v1087 = vadd.f32 %v975, %v1025
        %v1088 = vadd.f32 %v976, %v1025
        %v1089 = vadd.f32 %v977, %v1025
        %v1090 = vadd.f32 %v978, %v1025
        %v1091 = vmax.f32 %v1027, 0.0
        %v1092 = vmax.f32 %v1028, 0.0
        %v1093 = vmax.f32 %v1029, 0.0
        %v1094 = vmax.f32 %v1030, 0.0
        %v1095 = vmax.f32 %v1031, 0.0
        %v1096 = vmax.f32 %v1032, 0.0
        %v1097 = vmax.f32 %v1033, 0.0
        %v1098 = vmax.f32 %v1034, 0.0
        %v1099 = vmax.f32 %v1035, 0.0
        %v1100 = vmax.f32 %v1036, 0.0
        %v1101 = vmax.f32 %v1037, 0.0
        %v1102 = vmax.f32 %v1038, 0.0
        %v1103 = vmax.f32 %v1039, 0.0
        %v1104 = vmax.f32 %v1040, 0.0
        %v1105 = vmax.f32 %v1041, 0.0
        %v1106 = vmax.f32 %v1042, 0.0
        %v1107 = vmax.f32 %v1043, 0.0
        %v1108 = vmax.f32 %v1044, 0.0
        %v1109 = vmax.f32 %v1045, 0.0
        %v1110 = vmax.f32 %v1046, 0.0
        %v1111 = vmax.f32 %v1047, 0.0
        %v1112 = vmax.f32 %v1048, 0.0
        %v1113 = vmax.f32 %v1049, 0.0
        %v1114 = vmax.f32 %v1050, 0.0
        %v1115 = vmax.f32 %v1051, 0.0
        %v1116 = vmax.f32 %v1052, 0.0
        %v1117 = vmax.f32 %v1053, 0.0
        %v1118 = vmax.f32 %v1054, 0.0
        %v1119 = vmax.f32 %v1055, 0.0
        %v1120 = vmax.f32 %v1056, 0.0
        %v1121 = vmax.f32 %v1057, 0.0
        %v1122 = vmax.f32 %v1058, 0.0
        %v1123 = vmax.f32 %v1059, 0.0
        %v1124 = vmax.f32 %v1060, 0.0
        %v1125 = vmax.f32 %v1061, 0.0
        %v1126 = vmax.f32 %v1062, 0.0
        %v1127 = vmax.f32 %v1063, 0.0
        %v1128 = vmax.f32 %v1064, 0.0
        %v1129 = vmax.f32 %v1065, 0.0
        %v1130 = vmax.f32 %v1066, 0.0
        %v1131 = vmax.f32 %v1067, 0.0
        %v1132 = vmax.f32 %v1068, 0.0
        %v1133 = vmax.f32 %v1069, 0.0
        %v1134 = vmax.f32 %v1070, 0.0
        %v1135 = vmax.f32 %v1071, 0.0
        %v1136 = vmax.f32 %v1072, 0.0
        %v1137 = vmax.f32 %v1073, 0.0
        %v1138 = vmax.f32 %v1074, 0.0
        %v1139 = vmax.f32 %v1075, 0.0
        %v1140 = vmax.f32 %v1076, 0.0
        %v1141 = vmax.f32 %v1077, 0.0
        %v1142 = vmax.f32 %v1078, 0.0
        %v1143 = vmax.f32 %v1079, 0.0
        %v1144 = vmax.f32 %v1080, 0.0
        %v1145 = vmax.f32 %v1081, 0.0
        %v1146 = vmax.f32 %v1082, 0.0
        %v1147 = vmax.f32 %v1083, 0.0
        %v1148 = vmax.f32 %v1084, 0.0
        %v1149 = vmax.f32 %v1085, 0.0
        %v1150 = vmax.f32 %v1086, 0.0
        %v1151 = vmax.f32 %v1087, 0.0
        %v1152 = vmax.f32 %v1088, 0.0
        %v1153 = vmax.f32 %v1089, 0.0
        %v1154 = vmax.f32 %v1090, 0.0
        %v1155 = vld [vmem:[%s3] sm:$0xf]
        %v1156 = vld [vmem:[%s3 + $0x4] sm:$0xf]
        %v1157 = vld [vmem:[%s3 + $0x8] sm:$0xf]
        %v1158 = vld [vmem:[%s3 + $0xc] sm:$0xf]
        %v1159 = vld [vmem:[%s3 + $0x10] sm:$0xf]
        %v1160 = vld [vmem:[%s3 + $0x14] sm:$0xf]
        %v1161 = vld [vmem:[%s3 + $0x18] sm:$0xf]
        %v1162 = vld [vmem:[%s3 + $0x1c] sm:$0xf]
        %v1163 = vld [vmem:[%s3 + $0x20] sm:$0xf]
        %v1164 = vld [vmem:[%s3 + $0x24] sm:$0xf]
        %v1165 = vld [vmem:[%s3 + $0x28] sm:$0xf]
        %v1166 = vld [vmem:[%s3 + $0x2c] sm:$0xf]
        %v1167 = vld [vmem:[%s3 + $0x30] sm:$0xf]
        %v1168 = vld [vmem:[%s3 + $0x34] sm:$0xf]
        %v1169 = vld [vmem:[%s3 + $0x38] sm:$0xf]
        %v1170 = vld [vmem:[%s3 + $0x3c] sm:$0xf]
        %v1171 = vpack.c.bf16 %v1099, %v1091
        %v1172 = vpack.c.bf16 %v1100, %v1092
        %v1173 = vpack.c.bf16 %v1101, %v1093
        %v1174 = vpack.c.bf16 %v1102, %v1094
        %v1175 = vpack.c.bf16 %v1103, %v1095
        %v1176 = vpack.c.bf16 %v1104, %v1096
        %v1177 = vpack.c.bf16 %v1105, %v1097
        %v1178 = vpack.c.bf16 %v1106, %v1098
        %v1179 = vpack.c.bf16 %v1115, %v1107
        %v1180 = vpack.c.bf16 %v1116, %v1108
        %v1181 = vpack.c.bf16 %v1117, %v1109
        %v1182 = vpack.c.bf16 %v1118, %v1110
        %v1183 = vpack.c.bf16 %v1119, %v1111
        %v1184 = vpack.c.bf16 %v1120, %v1112
        %v1185 = vpack.c.bf16 %v1121, %v1113
        %v1186 = vpack.c.bf16 %v1122, %v1114
        %v1187 = vpack.c.bf16 %v1131, %v1123
        %v1188 = vpack.c.bf16 %v1132, %v1124
        %v1189 = vpack.c.bf16 %v1133, %v1125
        %v1190 = vpack.c.bf16 %v1134, %v1126
        %v1191 = vpack.c.bf16 %v1135, %v1127
        %v1192 = vpack.c.bf16 %v1136, %v1128
        %v1193 = vpack.c.bf16 %v1137, %v1129
        %v1194 = vpack.c.bf16 %v1138, %v1130
        %v1195 = vpack.c.bf16 %v1147, %v1139
        %v1196 = vpack.c.bf16 %v1148, %v1140
        %v1197 = vpack.c.bf16 %v1149, %v1141
        %v1198 = vpack.c.bf16 %v1150, %v1142
        %v1199 = vpack.c.bf16 %v1151, %v1143
        %v1200 = vpack.c.bf16 %v1152, %v1144
        %v1201 = vpack.c.bf16 %v1153, %v1145
        %v1202 = vpack.c.bf16 %v1154, %v1146
        %v1203 = vld [vmem:[%s4] sm:$0xff]
        %v1204 = vld [vmem:[%s4 + $0x8] sm:$0xff]
        %v1205 = vld [vmem:[%s4 + $0x10] sm:$0xff]
        %v1206 = vld [vmem:[%s4 + $0x18] sm:$0xff]
        %v1207 = vld [vmem:[%s4 + $0x20] sm:$0xff]
        %v1208 = vld [vmem:[%s4 + $0x28] sm:$0xff]
        %v1209 = vld [vmem:[%s4 + $0x30] sm:$0xff]
        %v1210 = vld [vmem:[%s4 + $0x38] sm:$0xff]
        %v1211 = vld [vmem:[%s4 + $0x40] sm:$0xff]
        %v1212 = vld [vmem:[%s4 + $0x48] sm:$0xff]
        %v1213 = vld [vmem:[%s4 + $0x50] sm:$0xff]
        %v1214 = vld [vmem:[%s4 + $0x58] sm:$0xff]
        %v1215 = vld [vmem:[%s4 + $0x60] sm:$0xff]
        %v1216 = vld [vmem:[%s4 + $0x68] sm:$0xff]
        %v1217 = vld [vmem:[%s4 + $0x70] sm:$0xff]
        %v1218 = vld [vmem:[%s4 + $0x78] sm:$0xff]
        %1220 = vset.pattern.permute.xlu0 0
        %1221 = vperm.xlu0 %1220, %v1203
        %v1222 = vpop.permute.xlu0 %1221
        %1225 = vset.pattern.permute.xlu0 0
        %1226 = vperm.xlu0 %1225, %v1204
        %v1227 = vpop.permute.xlu0 %1226
        %1230 = vset.pattern.permute.xlu0 0
        %1231 = vperm.xlu0 %1230, %v1205
        %v1232 = vpop.permute.xlu0 %1231
        %1235 = vset.pattern.permute.xlu0 0
        %1236 = vperm.xlu0 %1235, %v1206
        %v1237 = vpop.permute.xlu0 %1236
        %1240 = vset.pattern.permute.xlu0 0
        %1241 = vperm.xlu0 %1240, %v1207
        %v1242 = vpop.permute.xlu0 %1241
        %1245 = vset.pattern.permute.xlu0 0
        %1246 = vperm.xlu0 %1245, %v1208
        %v1247 = vpop.permute.xlu0 %1246
        %1250 = vset.pattern.permute.xlu0 0
        %1251 = vperm.xlu0 %1250, %v1209
        %v1252 = vpop.permute.xlu0 %1251
        %1255 = vset.pattern.permute.xlu0 0
        %1256 = vperm.xlu0 %1255, %v1210
        %v1257 = vpop.permute.xlu0 %1256
        %1260 = vset.pattern.permute.xlu0 0
        %1261 = vperm.xlu0 %1260, %v1211
        %v1262 = vpop.permute.xlu0 %1261
        %1265 = vset.pattern.permute.xlu0 0
        %1266 = vperm.xlu0 %1265, %v1212
        %v1267 = vpop.permute.xlu0 %1266
        %1270 = vset.pattern.permute.xlu0 0
        %1271 = vperm.xlu0 %1270, %v1213
        %v1272 = vpop.permute.xlu0 %1271
        %1275 = vset.pattern.permute.xlu0 0
        %1276 = vperm.xlu0 %1275, %v1214
        %v1277 = vpop.permute.xlu0 %1276
        %1280 = vset.pattern.permute.xlu0 0
        %1281 = vperm.xlu0 %1280, %v1215
        %v1282 = vpop.permute.xlu0 %1281
        %1285 = vset.pattern.permute.xlu0 0
        %1286 = vperm.xlu0 %1285, %v1216
        %v1287 = vpop.permute.xlu0 %1286
        %1290 = vset.pattern.permute.xlu0 0
        %1291 = vperm.xlu0 %1290, %v1217
        %v1292 = vpop.permute.xlu0 %1291
        %1295 = vset.pattern.permute.xlu0 0
        %1296 = vperm.xlu0 %1295, %v1218
        %v1297 = vpop.permute.xlu0 %1296
        %v1315 = vunpack.c.l.b16 %v1155
        %v1316 = vunpack.c.l.b16 %v1156
        %v1317 = vunpack.c.l.b16 %v1157
        %v1318 = vunpack.c.l.b16 %v1158
        %v1319 = vunpack.c.l.b16 %v1159
        %v1320 = vunpack.c.l.b16 %v1160
        %v1321 = vunpack.c.l.b16 %v1161
        %v1322 = vunpack.c.l.b16 %v1162
        %v1323 = vunpack.c.l.b16 %v1163
        %v1324 = vunpack.c.l.b16 %v1164
        %v1325 = vunpack.c.l.b16 %v1165
        %v1326 = vunpack.c.l.b16 %v1166
        %v1327 = vunpack.c.l.b16 %v1167
        %v1328 = vunpack.c.l.b16 %v1168
        %v1329 = vunpack.c.l.b16 %v1169
        %v1330 = vunpack.c.l.b16 %v1170
        %v1331 = vpack.c.b16 %v1316, %v1315
        %v1332 = vpack.c.b16 %v1318, %v1317
        %v1333 = vpack.c.b16 %v1320, %v1319
        %v1334 = vpack.c.b16 %v1322, %v1321
        %v1335 = vpack.c.b16 %v1324, %v1323
        %v1336 = vpack.c.b16 %v1326, %v1325
        %v1337 = vpack.c.b16 %v1328, %v1327
        %v1338 = vpack.c.b16 %v1330, %v1329
        %vm1339 = vcmask 523264
        %v1341 = vsel %vm1339, %v1331, 0
        %v1344 = vsel %vm1339, %v1332, 0
        %v1347 = vsel %vm1339, %v1333, 0
        %v1350 = vsel %vm1339, %v1334, 0
        %v1353 = vsel %vm1339, %v1335, 0
        %v1356 = vsel %vm1339, %v1336, 0
        %v1359 = vsel %vm1339, %v1337, 0
        %v1362 = vsel %vm1339, %v1338, 0
        %1364 = vmatprep.subr.bf16.mxu0 %v1172
        %1365 = vmatpush1.bf16.msra.mxu0 %v1171
        %1366 = vmatprep.subr.bf16.mxu0 %v1180
        %1367 = vmatpush1.bf16.msra.mxu0 %v1179
        %1368 = vmatprep.subr.bf16.mxu0 %v1188
        %1369 = vmatpush1.bf16.msra.mxu0 %v1187
        %1370 = vmatprep.subr.bf16.mxu0 %v1196
        %1371 = vmatpush1.bf16.msra.mxu0 %v1195
        %1372 = vmatprep.subr.bf16.mxu0 0
        %1373 = vmatpush1.bf16.msra.mxu0 0
        %1374 = vmatprep.subr.bf16.mxu0 0
        %1375 = vmatpush1.bf16.msra.mxu0 0
        %1376 = vmatprep.subr.bf16.mxu0 0
        %1377 = vmatpush1.bf16.msra.mxu0 0
        %1378 = vmatprep.subr.bf16.mxu0 0
        %1379 = vmatpush1.bf16.msra.mxu0 0
        %1380 = vmatprep.subr.bf16.mxu0 0
        %1381 = vmatpush1.bf16.msra.mxu0 0
        %1382 = vmatprep.subr.bf16.mxu0 0
        %1383 = vmatpush1.bf16.msra.mxu0 0
        %1384 = vmatprep.subr.bf16.mxu0 0
        %1385 = vmatpush1.bf16.msra.mxu0 0
        %1386 = vmatprep.subr.bf16.mxu0 0
        %1387 = vmatpush1.bf16.msra.mxu0 0
        %1388 = vmatprep.subr.bf16.mxu0 0
        %1389 = vmatpush1.bf16.msra.mxu0 0
        %1390 = vmatprep.subr.bf16.mxu0 0
        %1391 = vmatpush1.bf16.msra.mxu0 0
        %1392 = vmatprep.subr.bf16.mxu0 0
        %1393 = vmatpush1.bf16.msra.mxu0 0
        %1394 = vmatprep.subr.bf16.mxu0 0
        %1395 = vmatpush1.bf16.msra.mxu0 0
        %1396 = vmatprep.mubr.bf16.mxu0 0
        %1397 = vmatmul.mubr.bf16.gmra.mrb[0].mxu0 %v1341
        %v1398 = vpop.f32.mrb[0].mxu0
        %v1399 = vadd.f32 %v1222, %v1398
        %v1400 = vpop.f32.mrb[0].mxu0
        %v1401 = vadd.f32 %v1222, %v1400
        %v1402 = vpop.f32.mrb[0].mxu0
        %v1403 = vadd.f32 %v1227, %v1402
        %v1404 = vpop.f32.mrb[0].mxu0
        %v1405 = vadd.f32 %v1227, %v1404
        %1406 = vmatprep.mubr.bf16.mxu0 0
        %1407 = vmatmul.mubr.bf16.gmra.mrb[0].mxu0 %v1344
        %v1408 = vpop.f32.mrb[0].mxu0
        %v1409 = vadd.f32 %v1232, %v1408
        %v1410 = vpop.f32.mrb[0].mxu0
        %v1411 = vadd.f32 %v1232, %v1410
        %v1412 = vpop.f32.mrb[0].mxu0
        %v1413 = vadd.f32 %v1237, %v1412
        %v1414 = vpop.f32.mrb[0].mxu0
        %v1415 = vadd.f32 %v1237, %v1414
        %1416 = vmatprep.mubr.bf16.mxu0 0
        %1417 = vmatmul.mubr.bf16.gmra.mrb[0].mxu0 %v1347
        %v1418 = vpop.f32.mrb[0].mxu0
        %v1419 = vadd.f32 %v1242, %v1418
        %v1420 = vpop.f32.mrb[0].mxu0
        %v1421 = vadd.f32 %v1242, %v1420
        %v1422 = vpop.f32.mrb[0].mxu0
        %v1423 = vadd.f32 %v1247, %v1422
        %v1424 = vpop.f32.mrb[0].mxu0
        %v1425 = vadd.f32 %v1247, %v1424
        %1426 = vmatprep.mubr.bf16.mxu0 0
        %1427 = vmatmul.mubr.bf16.gmra.mrb[0].mxu0 %v1350
        %v1428 = vpop.f32.mrb[0].mxu0
        %v1429 = vadd.f32 %v1252, %v1428
        %v1430 = vpop.f32.mrb[0].mxu0
        %v1431 = vadd.f32 %v1252, %v1430
        %v1432 = vpop.f32.mrb[0].mxu0
        %v1433 = vadd.f32 %v1257, %v1432
        %v1434 = vpop.f32.mrb[0].mxu0
        %v1435 = vadd.f32 %v1257, %v1434
        %1436 = vmatprep.mubr.bf16.mxu0 0
        %1437 = vmatmul.mubr.bf16.gmra.mrb[0].mxu0 %v1353
        %v1438 = vpop.f32.mrb[0].mxu0
        %v1439 = vadd.f32 %v1262, %v1438
        %v1440 = vpop.f32.mrb[0].mxu0
        %v1441 = vadd.f32 %v1262, %v1440
        %v1442 = vpop.f32.mrb[0].mxu0
        %v1443 = vadd.f32 %v1267, %v1442
        %v1444 = vpop.f32.mrb[0].mxu0
        %v1445 = vadd.f32 %v1267, %v1444
        %1446 = vmatprep.mubr.bf16.mxu0 0
        %1447 = vmatmul.mubr.bf16.gmra.mrb[0].mxu0 %v1356
        %v1448 = vpop.f32.mrb[0].mxu0
        %v1449 = vadd.f32 %v1272, %v1448
        %v1450 = vpop.f32.mrb[0].mxu0
        %v1451 = vadd.f32 %v1272, %v1450
        %v1452 = vpop.f32.mrb[0].mxu0
        %v1453 = vadd.f32 %v1277, %v1452
        %v1454 = vpop.f32.mrb[0].mxu0
        %v1455 = vadd.f32 %v1277, %v1454
        %1456 = vmatprep.mubr.bf16.mxu0 0
        %1457 = vmatmul.mubr.bf16.gmra.mrb[0].mxu0 %v1359
        %v1458 = vpop.f32.mrb[0].mxu0
        %v1459 = vadd.f32 %v1282, %v1458
        %v1460 = vpop.f32.mrb[0].mxu0
        %v1461 = vadd.f32 %v1282, %v1460
        %v1462 = vpop.f32.mrb[0].mxu0
        %v1463 = vadd.f32 %v1287, %v1462
        %v1464 = vpop.f32.mrb[0].mxu0
        %v1465 = vadd.f32 %v1287, %v1464
        %1466 = vmatprep.mubr.bf16.mxu0 0
        %1467 = vmatmul.mubr.bf16.gmra.mrb[0].mxu0 %v1362
        %v1468 = vpop.f32.mrb[0].mxu0
        %v1469 = vadd.f32 %v1292, %v1468
        %v1470 = vpop.f32.mrb[0].mxu0
        %v1471 = vadd.f32 %v1292, %v1470
        %v1472 = vpop.f32.mrb[0].mxu0
        %v1473 = vadd.f32 %v1297, %v1472
        %v1474 = vpop.f32.mrb[0].mxu0
        %v1475 = vadd.f32 %v1297, %v1474
        %1476 = vdwg.mxu0
        %1477 = vmatprep.subr.bf16.mxu0 %v1174
        %1478 = vmatpush1.bf16.msra.mxu0 %v1173
        %1479 = vmatprep.subr.bf16.mxu0 %v1182
        %1480 = vmatpush1.bf16.msra.mxu0 %v1181
        %1481 = vmatprep.subr.bf16.mxu0 %v1190
        %1482 = vmatpush1.bf16.msra.mxu0 %v1189
        %1483 = vmatprep.subr.bf16.mxu0 %v1198
        %1484 = vmatpush1.bf16.msra.mxu0 %v1197
        %1485 = vmatprep.subr.bf16.mxu0 0
        %1486 = vmatpush1.bf16.msra.mxu0 0
        %1487 = vmatprep.subr.bf16.mxu0 0
        %1488 = vmatpush1.bf16.msra.mxu0 0
        %1489 = vmatprep.subr.bf16.mxu0 0
        %1490 = vmatpush1.bf16.msra.mxu0 0
        %1491 = vmatprep.subr.bf16.mxu0 0
        %1492 = vmatpush1.bf16.msra.mxu0 0
        %1493 = vmatprep.subr.bf16.mxu0 0
        %1494 = vmatpush1.bf16.msra.mxu0 0
        %1495 = vmatprep.subr.bf16.mxu0 0
        %1496 = vmatpush1.bf16.msra.mxu0 0
        %1497 = vmatprep.subr.bf16.mxu0 0
        %1498 = vmatpush1.bf16.msra.mxu0 0
        %1499 = vmatprep.subr.bf16.mxu0 0
        %1500 = vmatpush1.bf16.msra.mxu0 0
        %1501 = vmatprep.subr.bf16.mxu0 0
        %1502 = vmatpush1.bf16.msra.mxu0 0
        %1503 = vmatprep.subr.bf16.mxu0 0
        %1504 = vmatpush1.bf16.msra.mxu0 0
        %1505 = vmatprep.subr.bf16.mxu0 0
        %1506 = vmatpush1.bf16.msra.mxu0 0
        %1507 = vmatprep.subr.bf16.mxu0 0
        %1508 = vmatpush1.bf16.msra.mxu0 0
        %1509 = vmatprep.mubr.bf16.mxu0 0
        %1510 = vmatmul.mubr.bf16.gmra.mrb[0].mxu0 %v1341
        %v1511 = vpop.f32.mrb[0].mxu0
        %v1512 = vadd.f32 %v1222, %v1511
        %v1513 = vpop.f32.mrb[0].mxu0
        %v1514 = vadd.f32 %v1222, %v1513
        %v1515 = vpop.f32.mrb[0].mxu0
        %v1516 = vadd.f32 %v1227, %v1515
        %v1517 = vpop.f32.mrb[0].mxu0
        %v1518 = vadd.f32 %v1227, %v1517
        %1519 = vmatprep.mubr.bf16.mxu0 0
        %1520 = vmatmul.mubr.bf16.gmra.mrb[0].mxu0 %v1344
        %v1521 = vpop.f32.mrb[0].mxu0
        %v1522 = vadd.f32 %v1232, %v1521
        %v1523 = vpop.f32.mrb[0].mxu0
        %v1524 = vadd.f32 %v1232, %v1523
        %v1525 = vpop.f32.mrb[0].mxu0
        %v1526 = vadd.f32 %v1237, %v1525
        %v1527 = vpop.f32.mrb[0].mxu0
        %v1528 = vadd.f32 %v1237, %v1527
        %1529 = vmatprep.mubr.bf16.mxu0 0
        %1530 = vmatmul.mubr.bf16.gmra.mrb[0].mxu0 %v1347
        %v1531 = vpop.f32.mrb[0].mxu0
        %v1532 = vadd.f32 %v1242, %v1531
        %v1533 = vpop.f32.mrb[0].mxu0
        %v1534 = vadd.f32 %v1242, %v1533
        %v1535 = vpop.f32.mrb[0].mxu0
        %v1536 = vadd.f32 %v1247, %v1535
        %v1537 = vpop.f32.mrb[0].mxu0
        %v1538 = vadd.f32 %v1247, %v1537
        %1539 = vmatprep.mubr.bf16.mxu0 0
        %1540 = vmatmul.mubr.bf16.gmra.mrb[0].mxu0 %v1350
        %v1541 = vpop.f32.mrb[0].mxu0
        %v1542 = vadd.f32 %v1252, %v1541
        %v1543 = vpop.f32.mrb[0].mxu0
        %v1544 = vadd.f32 %v1252, %v1543
        %v1545 = vpop.f32.mrb[0].mxu0
        %v1546 = vadd.f32 %v1257, %v1545
        %v1547 = vpop.f32.mrb[0].mxu0
        %v1548 = vadd.f32 %v1257, %v1547
        %1549 = vmatprep.mubr.bf16.mxu0 0
        %1550 = vmatmul.mubr.bf16.gmra.mrb[0].mxu0 %v1353
        %v1551 = vpop.f32.mrb[0].mxu0
        %v1552 = vadd.f32 %v1262, %v1551
        %v1553 = vpop.f32.mrb[0].mxu0
        %v1554 = vadd.f32 %v1262, %v1553
        %v1555 = vpop.f32.mrb[0].mxu0
        %v1556 = vadd.f32 %v1267, %v1555
        %v1557 = vpop.f32.mrb[0].mxu0
        %v1558 = vadd.f32 %v1267, %v1557
        %1559 = vmatprep.mubr.bf16.mxu0 0
        %1560 = vmatmul.mubr.bf16.gmra.mrb[0].mxu0 %v1356
        %v1561 = vpop.f32.mrb[0].mxu0
        %v1562 = vadd.f32 %v1272, %v1561
        %v1563 = vpop.f32.mrb[0].mxu0
        %v1564 = vadd.f32 %v1272, %v1563
        %v1565 = vpop.f32.mrb[0].mxu0
        %v1566 = vadd.f32 %v1277, %v1565
        %v1567 = vpop.f32.mrb[0].mxu0
        %v1568 = vadd.f32 %v1277, %v1567
        %1569 = vmatprep.mubr.bf16.mxu0 0
        %1570 = vmatmul.mubr.bf16.gmra.mrb[0].mxu0 %v1359
        %v1571 = vpop.f32.mrb[0].mxu0
        %v1572 = vadd.f32 %v1282, %v1571
        %v1573 = vpop.f32.mrb[0].mxu0
        %v1574 = vadd.f32 %v1282, %v1573
        %v1575 = vpop.f32.mrb[0].mxu0
        %v1576 = vadd.f32 %v1287, %v1575
        %v1577 = vpop.f32.mrb[0].mxu0
        %v1578 = vadd.f32 %v1287, %v1577
        %1579 = vmatprep.mubr.bf16.mxu0 0
        %1580 = vmatmul.mubr.bf16.gmra.mrb[0].mxu0 %v1362
        %v1581 = vpop.f32.mrb[0].mxu0
        %v1582 = vadd.f32 %v1292, %v1581
        %v1583 = vpop.f32.mrb[0].mxu0
        %v1584 = vadd.f32 %v1292, %v1583
        %v1585 = vpop.f32.mrb[0].mxu0
        %v1586 = vadd.f32 %v1297, %v1585
        %v1587 = vpop.f32.mrb[0].mxu0
        %v1588 = vadd.f32 %v1297, %v1587
        %1589 = vdwg.mxu0
        %1590 = vmatprep.subr.bf16.mxu0 %v1176
        %1591 = vmatpush1.bf16.msra.mxu0 %v1175
        %1592 = vmatprep.subr.bf16.mxu0 %v1184
        %1593 = vmatpush1.bf16.msra.mxu0 %v1183
        %1594 = vmatprep.subr.bf16.mxu0 %v1192
        %1595 = vmatpush1.bf16.msra.mxu0 %v1191
        %1596 = vmatprep.subr.bf16.mxu0 %v1200
        %1597 = vmatpush1.bf16.msra.mxu0 %v1199
        %1598 = vmatprep.subr.bf16.mxu0 0
        %1599 = vmatpush1.bf16.msra.mxu0 0
        %1600 = vmatprep.subr.bf16.mxu0 0
        %1601 = vmatpush1.bf16.msra.mxu0 0
        %1602 = vmatprep.subr.bf16.mxu0 0
        %1603 = vmatpush1.bf16.msra.mxu0 0
        %1604 = vmatprep.subr.bf16.mxu0 0
        %1605 = vmatpush1.bf16.msra.mxu0 0
        %1606 = vmatprep.subr.bf16.mxu0 0
        %1607 = vmatpush1.bf16.msra.mxu0 0
        %1608 = vmatprep.subr.bf16.mxu0 0
        %1609 = vmatpush1.bf16.msra.mxu0 0
        %1610 = vmatprep.subr.bf16.mxu0 0
        %1611 = vmatpush1.bf16.msra.mxu0 0
        %1612 = vmatprep.subr.bf16.mxu0 0
        %1613 = vmatpush1.bf16.msra.mxu0 0
        %1614 = vmatprep.subr.bf16.mxu0 0
        %1615 = vmatpush1.bf16.msra.mxu0 0
        %1616 = vmatprep.subr.bf16.mxu0 0
        %1617 = vmatpush1.bf16.msra.mxu0 0
        %1618 = vmatprep.subr.bf16.mxu0 0
        %1619 = vmatpush1.bf16.msra.mxu0 0
        %1620 = vmatprep.subr.bf16.mxu0 0
        %1621 = vmatpush1.bf16.msra.mxu0 0
        %1622 = vmatprep.mubr.bf16.mxu0 0
        %1623 = vmatmul.mubr.bf16.gmra.mrb[0].mxu0 %v1341
        %v1624 = vpop.f32.mrb[0].mxu0
        %v1625 = vadd.f32 %v1222, %v1624
        %v1626 = vpop.f32.mrb[0].mxu0
        %v1627 = vadd.f32 %v1222, %v1626
        %v1628 = vpop.f32.mrb[0].mxu0
        %v1629 = vadd.f32 %v1227, %v1628
        %v1630 = vpop.f32.mrb[0].mxu0
        %v1631 = vadd.f32 %v1227, %v1630
        %1632 = vmatprep.mubr.bf16.mxu0 0
        %1633 = vmatmul.mubr.bf16.gmra.mrb[0].mxu0 %v1344
        %v1634 = vpop.f32.mrb[0].mxu0
        %v1635 = vadd.f32 %v1232, %v1634
        %v1636 = vpop.f32.mrb[0].mxu0
        %v1637 = vadd.f32 %v1232, %v1636
        %v1638 = vpop.f32.mrb[0].mxu0
        %v1639 = vadd.f32 %v1237, %v1638
        %v1640 = vpop.f32.mrb[0].mxu0
        %v1641 = vadd.f32 %v1237, %v1640
        %1642 = vmatprep.mubr.bf16.mxu0 0
        %1643 = vmatmul.mubr.bf16.gmra.mrb[0].mxu0 %v1347
        %v1644 = vpop.f32.mrb[0].mxu0
        %v1645 = vadd.f32 %v1242, %v1644
        %v1646 = vpop.f32.mrb[0].mxu0
        %v1647 = vadd.f32 %v1242, %v1646
        %v1648 = vpop.f32.mrb[0].mxu0
        %v1649 = vadd.f32 %v1247, %v1648
        %v1650 = vpop.f32.mrb[0].mxu0
        %v1651 = vadd.f32 %v1247, %v1650
        %1652 = vmatprep.mubr.bf16.mxu0 0
        %1653 = vmatmul.mubr.bf16.gmra.mrb[0].mxu0 %v1350
        %v1654 = vpop.f32.mrb[0].mxu0
        %v1655 = vadd.f32 %v1252, %v1654
        %v1656 = vpop.f32.mrb[0].mxu0
        %v1657 = vadd.f32 %v1252, %v1656
        %v1658 = vpop.f32.mrb[0].mxu0
        %v1659 = vadd.f32 %v1257, %v1658
        %v1660 = vpop.f32.mrb[0].mxu0
        %v1661 = vadd.f32 %v1257, %v1660
        %1662 = vmatprep.mubr.bf16.mxu0 0
        %1663 = vmatmul.mubr.bf16.gmra.mrb[0].mxu0 %v1353
        %v1664 = vpop.f32.mrb[0].mxu0
        %v1665 = vadd.f32 %v1262, %v1664
        %v1666 = vpop.f32.mrb[0].mxu0
        %v1667 = vadd.f32 %v1262, %v1666
        %v1668 = vpop.f32.mrb[0].mxu0
        %v1669 = vadd.f32 %v1267, %v1668
        %v1670 = vpop.f32.mrb[0].mxu0
        %v1671 = vadd.f32 %v1267, %v1670
        %1672 = vmatprep.mubr.bf16.mxu0 0
        %1673 = vmatmul.mubr.bf16.gmra.mrb[0].mxu0 %v1356
        %v1674 = vpop.f32.mrb[0].mxu0
        %v1675 = vadd.f32 %v1272, %v1674
        %v1676 = vpop.f32.mrb[0].mxu0
        %v1677 = vadd.f32 %v1272, %v1676
        %v1678 = vpop.f32.mrb[0].mxu0
        %v1679 = vadd.f32 %v1277, %v1678
        %v1680 = vpop.f32.mrb[0].mxu0
        %v1681 = vadd.f32 %v1277, %v1680
        %1682 = vmatprep.mubr.bf16.mxu0 0
        %1683 = vmatmul.mubr.bf16.gmra.mrb[0].mxu0 %v1359
        %v1684 = vpop.f32.mrb[0].mxu0
        %v1685 = vadd.f32 %v1282, %v1684
        %v1686 = vpop.f32.mrb[0].mxu0
        %v1687 = vadd.f32 %v1282, %v1686
        %v1688 = vpop.f32.mrb[0].mxu0
        %v1689 = vadd.f32 %v1287, %v1688
        %v1690 = vpop.f32.mrb[0].mxu0
        %v1691 = vadd.f32 %v1287, %v1690
        %1692 = vmatprep.mubr.bf16.mxu0 0
        %1693 = vmatmul.mubr.bf16.gmra.mrb[0].mxu0 %v1362
        %v1694 = vpop.f32.mrb[0].mxu0
        %v1695 = vadd.f32 %v1292, %v1694
        %v1696 = vpop.f32.mrb[0].mxu0
        %v1697 = vadd.f32 %v1292, %v1696
        %v1698 = vpop.f32.mrb[0].mxu0
        %v1699 = vadd.f32 %v1297, %v1698
        %v1700 = vpop.f32.mrb[0].mxu0
        %v1701 = vadd.f32 %v1297, %v1700
        %1702 = vdwg.mxu0
        %1703 = vmatprep.subr.bf16.mxu0 %v1178
        %1704 = vmatpush1.bf16.msra.mxu0 %v1177
        %1705 = vmatprep.subr.bf16.mxu0 %v1186
        %1706 = vmatpush1.bf16.msra.mxu0 %v1185
        %1707 = vmatprep.subr.bf16.mxu0 %v1194
        %1708 = vmatpush1.bf16.msra.mxu0 %v1193
        %1709 = vmatprep.subr.bf16.mxu0 %v1202
        %1710 = vmatpush1.bf16.msra.mxu0 %v1201
        %1711 = vmatprep.subr.bf16.mxu0 0
        %1712 = vmatpush1.bf16.msra.mxu0 0
        %1713 = vmatprep.subr.bf16.mxu0 0
        %1714 = vmatpush1.bf16.msra.mxu0 0
        %1715 = vmatprep.subr.bf16.mxu0 0
        %1716 = vmatpush1.bf16.msra.mxu0 0
        %1717 = vmatprep.subr.bf16.mxu0 0
        %1718 = vmatpush1.bf16.msra.mxu0 0
        %1719 = vmatprep.subr.bf16.mxu0 0
        %1720 = vmatpush1.bf16.msra.mxu0 0
        %1721 = vmatprep.subr.bf16.mxu0 0
        %1722 = vmatpush1.bf16.msra.mxu0 0
        %1723 = vmatprep.subr.bf16.mxu0 0
        %1724 = vmatpush1.bf16.msra.mxu0 0
        %1725 = vmatprep.subr.bf16.mxu0 0
        %1726 = vmatpush1.bf16.msra.mxu0 0
        %1727 = vmatprep.subr.bf16.mxu0 0
        %1728 = vmatpush1.bf16.msra.mxu0 0
        %1729 = vmatprep.subr.bf16.mxu0 0
        %1730 = vmatpush1.bf16.msra.mxu0 0
        %1731 = vmatprep.subr.bf16.mxu0 0
        %1732 = vmatpush1.bf16.msra.mxu0 0
        %1733 = vmatprep.subr.bf16.mxu0 0
        %1734 = vmatpush1.bf16.msra.mxu0 0
        %1735 = vmatprep.mubr.bf16.mxu0 0
        %1736 = vmatmul.mubr.bf16.gmra.mrb[0].mxu0 %v1341
        %v1737 = vpop.f32.mrb[0].mxu0
        %v1738 = vadd.f32 %v1222, %v1737
        %v1739 = vpop.f32.mrb[0].mxu0
        %v1740 = vadd.f32 %v1222, %v1739
        %v1741 = vpop.f32.mrb[0].mxu0
        %v1742 = vadd.f32 %v1227, %v1741
        %v1743 = vpop.f32.mrb[0].mxu0
        %v1744 = vadd.f32 %v1227, %v1743
        %1745 = vmatprep.mubr.bf16.mxu0 0
        %1746 = vmatmul.mubr.bf16.gmra.mrb[0].mxu0 %v1344
        %v1747 = vpop.f32.mrb[0].mxu0
        %v1748 = vadd.f32 %v1232, %v1747
        %v1749 = vpop.f32.mrb[0].mxu0
        %v1750 = vadd.f32 %v1232, %v1749
        %v1751 = vpop.f32.mrb[0].mxu0
        %v1752 = vadd.f32 %v1237, %v1751
        %v1753 = vpop.f32.mrb[0].mxu0
        %v1754 = vadd.f32 %v1237, %v1753
        %1755 = vmatprep.mubr.bf16.mxu0 0
        %1756 = vmatmul.mubr.bf16.gmra.mrb[0].mxu0 %v1347
        %v1757 = vpop.f32.mrb[0].mxu0
        %v1758 = vadd.f32 %v1242, %v1757
        %v1759 = vpop.f32.mrb[0].mxu0
        %v1760 = vadd.f32 %v1242, %v1759
        %v1761 = vpop.f32.mrb[0].mxu0
        %v1762 = vadd.f32 %v1247, %v1761
        %v1763 = vpop.f32.mrb[0].mxu0
        %v1764 = vadd.f32 %v1247, %v1763
        %1765 = vmatprep.mubr.bf16.mxu0 0
        %1766 = vmatmul.mubr.bf16.gmra.mrb[0].mxu0 %v1350
        %v1767 = vpop.f32.mrb[0].mxu0
        %v1768 = vadd.f32 %v1252, %v1767
        %v1769 = vpop.f32.mrb[0].mxu0
        %v1770 = vadd.f32 %v1252, %v1769
        %v1771 = vpop.f32.mrb[0].mxu0
        %v1772 = vadd.f32 %v1257, %v1771
        %v1773 = vpop.f32.mrb[0].mxu0
        %v1774 = vadd.f32 %v1257, %v1773
        %1775 = vmatprep.mubr.bf16.mxu0 0
        %1776 = vmatmul.mubr.bf16.gmra.mrb[0].mxu0 %v1353
        %v1777 = vpop.f32.mrb[0].mxu0
        %v1778 = vadd.f32 %v1262, %v1777
        %v1779 = vpop.f32.mrb[0].mxu0
        %v1780 = vadd.f32 %v1262, %v1779
        %v1781 = vpop.f32.mrb[0].mxu0
        %v1782 = vadd.f32 %v1267, %v1781
        %v1783 = vpop.f32.mrb[0].mxu0
        %v1784 = vadd.f32 %v1267, %v1783
        %1785 = vmatprep.mubr.bf16.mxu0 0
        %1786 = vmatmul.mubr.bf16.gmra.mrb[0].mxu0 %v1356
        %v1787 = vpop.f32.mrb[0].mxu0
        %v1788 = vadd.f32 %v1272, %v1787
        %v1789 = vpop.f32.mrb[0].mxu0
        %v1790 = vadd.f32 %v1272, %v1789
        %v1791 = vpop.f32.mrb[0].mxu0
        %v1792 = vadd.f32 %v1277, %v1791
        %v1793 = vpop.f32.mrb[0].mxu0
        %v1794 = vadd.f32 %v1277, %v1793
        %1795 = vmatprep.mubr.bf16.mxu0 0
        %1796 = vmatmul.mubr.bf16.gmra.mrb[0].mxu0 %v1359
        %v1797 = vpop.f32.mrb[0].mxu0
        %v1798 = vadd.f32 %v1282, %v1797
        %v1799 = vpop.f32.mrb[0].mxu0
        %v1800 = vadd.f32 %v1282, %v1799
        %v1801 = vpop.f32.mrb[0].mxu0
        %v1802 = vadd.f32 %v1287, %v1801
        %v1803 = vpop.f32.mrb[0].mxu0
        %v1804 = vadd.f32 %v1287, %v1803
        %1805 = vmatprep.mubr.bf16.mxu0 0
        %1806 = vmatmul.mubr.bf16.gmra.mrb[0].mxu0 %v1362
        %v1807 = vpop.f32.mrb[0].mxu0
        %v1808 = vadd.f32 %v1292, %v1807
        %v1809 = vpop.f32.mrb[0].mxu0
        %v1810 = vadd.f32 %v1292, %v1809
        %v1811 = vpop.f32.mrb[0].mxu0
        %v1812 = vadd.f32 %v1297, %v1811
        %v1813 = vpop.f32.mrb[0].mxu0
        %v1814 = vadd.f32 %v1297, %v1813
        %1815 = vdwg.mxu0
        %v1816 = vmax.f32 %v1399, 0.0
        %v1817 = vmax.f32 %v1401, 0.0
        %v1818 = vmax.f32 %v1512, 0.0
        %v1819 = vmax.f32 %v1514, 0.0
        %v1820 = vmax.f32 %v1625, 0.0
        %v1821 = vmax.f32 %v1627, 0.0
        %v1822 = vmax.f32 %v1738, 0.0
        %v1823 = vmax.f32 %v1740, 0.0
        %v1824 = vmax.f32 %v1403, 0.0
        %v1825 = vmax.f32 %v1405, 0.0
        %v1826 = vmax.f32 %v1516, 0.0
        %v1827 = vmax.f32 %v1518, 0.0
        %v1828 = vmax.f32 %v1629, 0.0
        %v1829 = vmax.f32 %v1631, 0.0
        %v1830 = vmax.f32 %v1742, 0.0
        %v1831 = vmax.f32 %v1744, 0.0
        %v1832 = vmax.f32 %v1409, 0.0
        %v1833 = vmax.f32 %v1411, 0.0
        %v1834 = vmax.f32 %v1522, 0.0
        %v1835 = vmax.f32 %v1524, 0.0
        %v1836 = vmax.f32 %v1635, 0.0
        %v1837 = vmax.f32 %v1637, 0.0
        %v1838 = vmax.f32 %v1748, 0.0
        %v1839 = vmax.f32 %v1750, 0.0
        %v1840 = vmax.f32 %v1413, 0.0
        %v1841 = vmax.f32 %v1415, 0.0
        %v1842 = vmax.f32 %v1526, 0.0
        %v1843 = vmax.f32 %v1528, 0.0
        %v1844 = vmax.f32 %v1639, 0.0
        %v1845 = vmax.f32 %v1641, 0.0
        %v1846 = vmax.f32 %v1752, 0.0
        %v1847 = vmax.f32 %v1754, 0.0
        %v1848 = vmax.f32 %v1419, 0.0
        %v1849 = vmax.f32 %v1421, 0.0
        %v1850 = vmax.f32 %v1532, 0.0
        %v1851 = vmax.f32 %v1534, 0.0
        %v1852 = vmax.f32 %v1645, 0.0
        %v1853 = vmax.f32 %v1647, 0.0
        %v1854 = vmax.f32 %v1758, 0.0
        %v1855 = vmax.f32 %v1760, 0.0
        %v1856 = vmax.f32 %v1423, 0.0
        %v1857 = vmax.f32 %v1425, 0.0
        %v1858 = vmax.f32 %v1536, 0.0
        %v1859 = vmax.f32 %v1538, 0.0
        %v1860 = vmax.f32 %v1649, 0.0
        %v1861 = vmax.f32 %v1651, 0.0
        %v1862 = vmax.f32 %v1762, 0.0
        %v1863 = vmax.f32 %v1764, 0.0
        %v1864 = vmax.f32 %v1429, 0.0
        %v1865 = vmax.f32 %v1431, 0.0
        %v1866 = vmax.f32 %v1542, 0.0
        %v1867 = vmax.f32 %v1544, 0.0
        %v1868 = vmax.f32 %v1655, 0.0
        %v1869 = vmax.f32 %v1657, 0.0
        %v1870 = vmax.f32 %v1768, 0.0
        %v1871 = vmax.f32 %v1770, 0.0
        %v1872 = vmax.f32 %v1433, 0.0
        %v1873 = vmax.f32 %v1435, 0.0
        %v1874 = vmax.f32 %v1546, 0.0
        %v1875 = vmax.f32 %v1548, 0.0
        %v1876 = vmax.f32 %v1659, 0.0
        %v1877 = vmax.f32 %v1661, 0.0
        %v1878 = vmax.f32 %v1772, 0.0
        %v1879 = vmax.f32 %v1774, 0.0
        %v1880 = vmax.f32 %v1439, 0.0
        %v1881 = vmax.f32 %v1441, 0.0
        %v1882 = vmax.f32 %v1552, 0.0
        %v1883 = vmax.f32 %v1554, 0.0
        %v1884 = vmax.f32 %v1665, 0.0
        %v1885 = vmax.f32 %v1667, 0.0
        %v1886 = vmax.f32 %v1778, 0.0
        %v1887 = vmax.f32 %v1780, 0.0
        %v1888 = vmax.f32 %v1443, 0.0
        %v1889 = vmax.f32 %v1445, 0.0
        %v1890 = vmax.f32 %v1556, 0.0
        %v1891 = vmax.f32 %v1558, 0.0
        %v1892 = vmax.f32 %v1669, 0.0
        %v1893 = vmax.f32 %v1671, 0.0
        %v1894 = vmax.f32 %v1782, 0.0
        %v1895 = vmax.f32 %v1784, 0.0
        %v1896 = vmax.f32 %v1449, 0.0
        %v1897 = vmax.f32 %v1451, 0.0
        %v1898 = vmax.f32 %v1562, 0.0
        %v1899 = vmax.f32 %v1564, 0.0
        %v1900 = vmax.f32 %v1675, 0.0
        %v1901 = vmax.f32 %v1677, 0.0
        %v1902 = vmax.f32 %v1788, 0.0
        %v1903 = vmax.f32 %v1790, 0.0
        %v1904 = vmax.f32 %v1453, 0.0
        %v1905 = vmax.f32 %v1455, 0.0
        %v1906 = vmax.f32 %v1566, 0.0
        %v1907 = vmax.f32 %v1568, 0.0
        %v1908 = vmax.f32 %v1679, 0.0
        %v1909 = vmax.f32 %v1681, 0.0
        %v1910 = vmax.f32 %v1792, 0.0
        %v1911 = vmax.f32 %v1794, 0.0
        %v1912 = vmax.f32 %v1459, 0.0
        %v1913 = vmax.f32 %v1461, 0.0
        %v1914 = vmax.f32 %v1572, 0.0
        %v1915 = vmax.f32 %v1574, 0.0
        %v1916 = vmax.f32 %v1685, 0.0
        %v1917 = vmax.f32 %v1687, 0.0
        %v1918 = vmax.f32 %v1798, 0.0
        %v1919 = vmax.f32 %v1800, 0.0
        %v1920 = vmax.f32 %v1463, 0.0
        %v1921 = vmax.f32 %v1465, 0.0
        %v1922 = vmax.f32 %v1576, 0.0
        %v1923 = vmax.f32 %v1578, 0.0
        %v1924 = vmax.f32 %v1689, 0.0
        %v1925 = vmax.f32 %v1691, 0.0
        %v1926 = vmax.f32 %v1802, 0.0
        %v1927 = vmax.f32 %v1804, 0.0
        %v1928 = vmax.f32 %v1469, 0.0
        %v1929 = vmax.f32 %v1471, 0.0
        %v1930 = vmax.f32 %v1582, 0.0
        %v1931 = vmax.f32 %v1584, 0.0
        %v1932 = vmax.f32 %v1695, 0.0
        %v1933 = vmax.f32 %v1697, 0.0
        %v1934 = vmax.f32 %v1808, 0.0
        %v1935 = vmax.f32 %v1810, 0.0
        %v1936 = vmax.f32 %v1473, 0.0
        %v1937 = vmax.f32 %v1475, 0.0
        %v1938 = vmax.f32 %v1586, 0.0
        %v1939 = vmax.f32 %v1588, 0.0
        %v1940 = vmax.f32 %v1699, 0.0
        %v1941 = vmax.f32 %v1701, 0.0
        %v1942 = vmax.f32 %v1812, 0.0
        %v1943 = vmax.f32 %v1814, 0.0
        %v1944 = vld [vmem:[%s5] sm:$0xf]
        %v1945 = vld [vmem:[%s5 + $0x4] sm:$0xf]
        %v1946 = vld [vmem:[%s5 + $0x8] sm:$0xf]
        %v1947 = vld [vmem:[%s5 + $0xc] sm:$0xf]
        %v1948 = vld [vmem:[%s5 + $0x10] sm:$0xf]
        %v1949 = vld [vmem:[%s5 + $0x14] sm:$0xf]
        %v1950 = vld [vmem:[%s5 + $0x18] sm:$0xf]
        %v1951 = vld [vmem:[%s5 + $0x1c] sm:$0xf]
        %v1952 = vld [vmem:[%s5 + $0x20] sm:$0xf]
        %v1953 = vld [vmem:[%s5 + $0x24] sm:$0xf]
        %v1954 = vld [vmem:[%s5 + $0x28] sm:$0xf]
        %v1955 = vld [vmem:[%s5 + $0x2c] sm:$0xf]
        %v1956 = vld [vmem:[%s5 + $0x30] sm:$0xf]
        %v1957 = vld [vmem:[%s5 + $0x34] sm:$0xf]
        %v1958 = vld [vmem:[%s5 + $0x38] sm:$0xf]
        %v1959 = vld [vmem:[%s5 + $0x3c] sm:$0xf]
        %v1960 = vld [vmem:[%s5 + $0x40] sm:$0xf]
        %v1961 = vld [vmem:[%s5 + $0x44] sm:$0xf]
        %v1962 = vld [vmem:[%s5 + $0x48] sm:$0xf]
        %v1963 = vld [vmem:[%s5 + $0x4c] sm:$0xf]
        %v1964 = vld [vmem:[%s5 + $0x50] sm:$0xf]
        %v1965 = vld [vmem:[%s5 + $0x54] sm:$0xf]
        %v1966 = vld [vmem:[%s5 + $0x58] sm:$0xf]
        %v1967 = vld [vmem:[%s5 + $0x5c] sm:$0xf]
        %v1968 = vld [vmem:[%s5 + $0x60] sm:$0xf]
        %v1969 = vld [vmem:[%s5 + $0x64] sm:$0xf]
        %v1970 = vld [vmem:[%s5 + $0x68] sm:$0xf]
        %v1971 = vld [vmem:[%s5 + $0x6c] sm:$0xf]
        %v1972 = vld [vmem:[%s5 + $0x70] sm:$0xf]
        %v1973 = vld [vmem:[%s5 + $0x74] sm:$0xf]
        %v1974 = vld [vmem:[%s5 + $0x78] sm:$0xf]
        %v1975 = vld [vmem:[%s5 + $0x7c] sm:$0xf]
        %v1976 = vpack.c.bf16 %v1824, %v1816
        %v1977 = vpack.c.bf16 %v1825, %v1817
        %v1978 = vpack.c.bf16 %v1826, %v1818
        %v1979 = vpack.c.bf16 %v1827, %v1819
        %v1980 = vpack.c.bf16 %v1828, %v1820
        %v1981 = vpack.c.bf16 %v1829, %v1821
        %v1982 = vpack.c.bf16 %v1830, %v1822
        %v1983 = vpack.c.bf16 %v1831, %v1823
        %v1984 = vpack.c.bf16 %v1840, %v1832
        %v1985 = vpack.c.bf16 %v1841, %v1833
        %v1986 = vpack.c.bf16 %v1842, %v1834
        %v1987 = vpack.c.bf16 %v1843, %v1835
        %v1988 = vpack.c.bf16 %v1844, %v1836
        %v1989 = vpack.c.bf16 %v1845, %v1837
        %v1990 = vpack.c.bf16 %v1846, %v1838
        %v1991 = vpack.c.bf16 %v1847, %v1839
        %v1992 = vpack.c.bf16 %v1856, %v1848
        %v1993 = vpack.c.bf16 %v1857, %v1849
        %v1994 = vpack.c.bf16 %v1858, %v1850
        %v1995 = vpack.c.bf16 %v1859, %v1851
        %v1996 = vpack.c.bf16 %v1860, %v1852
        %v1997 = vpack.c.bf16 %v1861, %v1853
        %v1998 = vpack.c.bf16 %v1862, %v1854
        %v1999 = vpack.c.bf16 %v1863, %v1855
        %v2000 = vpack.c.bf16 %v1872, %v1864
        %v2001 = vpack.c.bf16 %v1873, %v1865
        %v2002 = vpack.c.bf16 %v1874, %v1866
        %v2003 = vpack.c.bf16 %v1875, %v1867
        %v2004 = vpack.c.bf16 %v1876, %v1868
        %v2005 = vpack.c.bf16 %v1877, %v1869
        %v2006 = vpack.c.bf16 %v1878, %v1870
        %v2007 = vpack.c.bf16 %v1879, %v1871
        %v2008 = vpack.c.bf16 %v1888, %v1880
        %v2009 = vpack.c.bf16 %v1889, %v1881
        %v2010 = vpack.c.bf16 %v1890, %v1882
        %v2011 = vpack.c.bf16 %v1891, %v1883
        %v2012 = vpack.c.bf16 %v1892, %v1884
        %v2013 = vpack.c.bf16 %v1893, %v1885
        %v2014 = vpack.c.bf16 %v1894, %v1886
        %v2015 = vpack.c.bf16 %v1895, %v1887
        %v2016 = vpack.c.bf16 %v1904, %v1896
        %v2017 = vpack.c.bf16 %v1905, %v1897
        %v2018 = vpack.c.bf16 %v1906, %v1898
        %v2019 = vpack.c.bf16 %v1907, %v1899
        %v2020 = vpack.c.bf16 %v1908, %v1900
        %v2021 = vpack.c.bf16 %v1909, %v1901
        %v2022 = vpack.c.bf16 %v1910, %v1902
        %v2023 = vpack.c.bf16 %v1911, %v1903
        %v2024 = vpack.c.bf16 %v1920, %v1912
        %v2025 = vpack.c.bf16 %v1921, %v1913
        %v2026 = vpack.c.bf16 %v1922, %v1914
        %v2027 = vpack.c.bf16 %v1923, %v1915
        %v2028 = vpack.c.bf16 %v1924, %v1916
        %v2029 = vpack.c.bf16 %v1925, %v1917
        %v2030 = vpack.c.bf16 %v1926, %v1918
        %v2031 = vpack.c.bf16 %v1927, %v1919
        %v2032 = vpack.c.bf16 %v1936, %v1928
        %v2033 = vpack.c.bf16 %v1937, %v1929
        %v2034 = vpack.c.bf16 %v1938, %v1930
        %v2035 = vpack.c.bf16 %v1939, %v1931
        %v2036 = vpack.c.bf16 %v1940, %v1932
        %v2037 = vpack.c.bf16 %v1941, %v1933
        %v2038 = vpack.c.bf16 %v1942, %v1934
        %v2039 = vpack.c.bf16 %v1943, %v1935
        %v2040 = vld [vmem:[%s6] sm:$0xff]
        %v2041 = vld [vmem:[%s6 + $0x8] sm:$0xff]
        %v2042 = vld [vmem:[%s6 + $0x10] sm:$0xff]
        %v2043 = vld [vmem:[%s6 + $0x18] sm:$0xff]
        %v2044 = vld [vmem:[%s6 + $0x20] sm:$0xff]
        %v2045 = vld [vmem:[%s6 + $0x28] sm:$0xff]
        %v2046 = vld [vmem:[%s6 + $0x30] sm:$0xff]
        %v2047 = vld [vmem:[%s6 + $0x38] sm:$0xff]
        %v2048 = vld [vmem:[%s6 + $0x40] sm:$0xff]
        %v2049 = vld [vmem:[%s6 + $0x48] sm:$0xff]
        %v2050 = vld [vmem:[%s6 + $0x50] sm:$0xff]
        %v2051 = vld [vmem:[%s6 + $0x58] sm:$0xff]
        %v2052 = vld [vmem:[%s6 + $0x60] sm:$0xff]
        %v2053 = vld [vmem:[%s6 + $0x68] sm:$0xff]
        %v2054 = vld [vmem:[%s6 + $0x70] sm:$0xff]
        %v2055 = vld [vmem:[%s6 + $0x78] sm:$0xff]
        %v2056 = vld [vmem:[%s6 + $0x80] sm:$0xff]
        %v2057 = vld [vmem:[%s6 + $0x88] sm:$0xff]
        %v2058 = vld [vmem:[%s6 + $0x90] sm:$0xff]
        %v2059 = vld [vmem:[%s6 + $0x98] sm:$0xff]
        %v2060 = vld [vmem:[%s6 + $0xa0] sm:$0xff]
        %v2061 = vld [vmem:[%s6 + $0xa8] sm:$0xff]
        %v2062 = vld [vmem:[%s6 + $0xb0] sm:$0xff]
        %v2063 = vld [vmem:[%s6 + $0xb8] sm:$0xff]
        %v2064 = vld [vmem:[%s6 + $0xc0] sm:$0xff]
        %v2065 = vld [vmem:[%s6 + $0xc8] sm:$0xff]
        %v2066 = vld [vmem:[%s6 + $0xd0] sm:$0xff]
        %v2067 = vld [vmem:[%s6 + $0xd8] sm:$0xff]
        %v2068 = vld [vmem:[%s6 + $0xe0] sm:$0xff]
        %v2069 = vld [vmem:[%s6 + $0xe8] sm:$0xff]
        %v2070 = vld [vmem:[%s6 + $0xf0] sm:$0xff]
        %v2071 = vld [vmem:[%s6 + $0xf8] sm:$0xff]
        %2073 = vset.pattern.permute.xlu0 0
        %2074 = vperm.xlu0 %2073, %v2040
        %v2075 = vpop.permute.xlu0 %2074
        %2078 = vset.pattern.permute.xlu0 0
        %2079 = vperm.xlu0 %2078, %v2041
        %v2080 = vpop.permute.xlu0 %2079
        %2083 = vset.pattern.permute.xlu0 0
        %2084 = vperm.xlu0 %2083, %v2042
        %v2085 = vpop.permute.xlu0 %2084
        %2088 = vset.pattern.permute.xlu0 0
        %2089 = vperm.xlu0 %2088, %v2043
        %v2090 = vpop.permute.xlu0 %2089
        %2093 = vset.pattern.permute.xlu0 0
        %2094 = vperm.xlu0 %2093, %v2044
        %v2095 = vpop.permute.xlu0 %2094
        %2098 = vset.pattern.permute.xlu0 0
        %2099 = vperm.xlu0 %2098, %v2045
        %v2100 = vpop.permute.xlu0 %2099
        %2103 = vset.pattern.permute.xlu0 0
        %2104 = vperm.xlu0 %2103, %v2046
        %v2105 = vpop.permute.xlu0 %2104
        %2108 = vset.pattern.permute.xlu0 0
        %2109 = vperm.xlu0 %2108, %v2047
        %v2110 = vpop.permute.xlu0 %2109
        %2113 = vset.pattern.permute.xlu0 0
        %2114 = vperm.xlu0 %2113, %v2048
        %v2115 = vpop.permute.xlu0 %2114
        %2118 = vset.pattern.permute.xlu0 0
        %2119 = vperm.xlu0 %2118, %v2049
        %v2120 = vpop.permute.xlu0 %2119
        %2123 = vset.pattern.permute.xlu0 0
        %2124 = vperm.xlu0 %2123, %v2050
        %v2125 = vpop.permute.xlu0 %2124
        %2128 = vset.pattern.permute.xlu0 0
        %2129 = vperm.xlu0 %2128, %v2051
        %v2130 = vpop.permute.xlu0 %2129
        %2133 = vset.pattern.permute.xlu0 0
        %2134 = vperm.xlu0 %2133, %v2052
        %v2135 = vpop.permute.xlu0 %2134
        %2138 = vset.pattern.permute.xlu0 0
        %2139 = vperm.xlu0 %2138, %v2053
        %v2140 = vpop.permute.xlu0 %2139
        %2143 = vset.pattern.permute.xlu0 0
        %2144 = vperm.xlu0 %2143, %v2054
        %v2145 = vpop.permute.xlu0 %2144
        %2148 = vset.pattern.permute.xlu0 0
        %2149 = vperm.xlu0 %2148, %v2055
        %v2150 = vpop.permute.xlu0 %2149
        %2153 = vset.pattern.permute.xlu0 0
        %2154 = vperm.xlu0 %2153, %v2056
        %v2155 = vpop.permute.xlu0 %2154
        %2158 = vset.pattern.permute.xlu0 0
        %2159 = vperm.xlu0 %2158, %v2057
        %v2160 = vpop.permute.xlu0 %2159
        %2163 = vset.pattern.permute.xlu0 0
        %2164 = vperm.xlu0 %2163, %v2058
        %v2165 = vpop.permute.xlu0 %2164
        %2168 = vset.pattern.permute.xlu0 0
        %2169 = vperm.xlu0 %2168, %v2059
        %v2170 = vpop.permute.xlu0 %2169
        %2173 = vset.pattern.permute.xlu0 0
        %2174 = vperm.xlu0 %2173, %v2060
        %v2175 = vpop.permute.xlu0 %2174
        %2178 = vset.pattern.permute.xlu0 0
        %2179 = vperm.xlu0 %2178, %v2061
        %v2180 = vpop.permute.xlu0 %2179
        %2183 = vset.pattern.permute.xlu0 0
        %2184 = vperm.xlu0 %2183, %v2062
        %v2185 = vpop.permute.xlu0 %2184
        %2188 = vset.pattern.permute.xlu0 0
        %2189 = vperm.xlu0 %2188, %v2063
        %v2190 = vpop.permute.xlu0 %2189
        %2193 = vset.pattern.permute.xlu0 0
        %2194 = vperm.xlu0 %2193, %v2064
        %v2195 = vpop.permute.xlu0 %2194
        %2198 = vset.pattern.permute.xlu0 0
        %2199 = vperm.xlu0 %2198, %v2065
        %v2200 = vpop.permute.xlu0 %2199
        %2203 = vset.pattern.permute.xlu0 0
        %2204 = vperm.xlu0 %2203, %v2066
        %v2205 = vpop.permute.xlu0 %2204
        %2208 = vset.pattern.permute.xlu0 0
        %2209 = vperm.xlu0 %2208, %v2067
        %v2210 = vpop.permute.xlu0 %2209
        %2213 = vset.pattern.permute.xlu0 0
        %2214 = vperm.xlu0 %2213, %v2068
        %v2215 = vpop.permute.xlu0 %2214
        %2218 = vset.pattern.permute.xlu0 0
        %2219 = vperm.xlu0 %2218, %v2069
        %v2220 = vpop.permute.xlu0 %2219
        %2223 = vset.pattern.permute.xlu0 0
        %2224 = vperm.xlu0 %2223, %v2070
        %v2225 = vpop.permute.xlu0 %2224
        %2228 = vset.pattern.permute.xlu0 0
        %2229 = vperm.xlu0 %2228, %v2071
        %v2230 = vpop.permute.xlu0 %2229
        %v2264 = vunpack.c.l.b16 %v1944
        %v2265 = vunpack.c.l.b16 %v1945
        %v2266 = vunpack.c.l.b16 %v1946
        %v2267 = vunpack.c.l.b16 %v1947
        %v2268 = vunpack.c.l.b16 %v1948
        %v2269 = vunpack.c.l.b16 %v1949
        %v2270 = vunpack.c.l.b16 %v1950
        %v2271 = vunpack.c.l.b16 %v1951
        %v2272 = vunpack.c.l.b16 %v1952
        %v2273 = vunpack.c.l.b16 %v1953
        %v2274 = vunpack.c.l.b16 %v1954
        %v2275 = vunpack.c.l.b16 %v1955
        %v2276 = vunpack.c.l.b16 %v1956
        %v2277 = vunpack.c.l.b16 %v1957
        %v2278 = vunpack.c.l.b16 %v1958
        %v2279 = vunpack.c.l.b16 %v1959
        %v2280 = vunpack.c.l.b16 %v1960
        %v2281 = vunpack.c.l.b16 %v1961
        %v2282 = vunpack.c.l.b16 %v1962
        %v2283 = vunpack.c.l.b16 %v1963
        %v2284 = vunpack.c.l.b16 %v1964
        %v2285 = vunpack.c.l.b16 %v1965
        %v2286 = vunpack.c.l.b16 %v1966
        %v2287 = vunpack.c.l.b16 %v1967
        %v2288 = vunpack.c.l.b16 %v1968
        %v2289 = vunpack.c.l.b16 %v1969
        %v2290 = vunpack.c.l.b16 %v1970
        %v2291 = vunpack.c.l.b16 %v1971
        %v2292 = vunpack.c.l.b16 %v1972
        %v2293 = vunpack.c.l.b16 %v1973
        %v2294 = vunpack.c.l.b16 %v1974
        %v2295 = vunpack.c.l.b16 %v1975
        %v2296 = vpack.c.b16 %v2265, %v2264
        %v2297 = vpack.c.b16 %v2267, %v2266
        %v2298 = vpack.c.b16 %v2269, %v2268
        %v2299 = vpack.c.b16 %v2271, %v2270
        %v2300 = vpack.c.b16 %v2273, %v2272
        %v2301 = vpack.c.b16 %v2275, %v2274
        %v2302 = vpack.c.b16 %v2277, %v2276
        %v2303 = vpack.c.b16 %v2279, %v2278
        %v2304 = vpack.c.b16 %v2281, %v2280
        %v2305 = vpack.c.b16 %v2283, %v2282
        %v2306 = vpack.c.b16 %v2285, %v2284
        %v2307 = vpack.c.b16 %v2287, %v2286
        %v2308 = vpack.c.b16 %v2289, %v2288
        %v2309 = vpack.c.b16 %v2291, %v2290
        %v2310 = vpack.c.b16 %v2293, %v2292
        %v2311 = vpack.c.b16 %v2295, %v2294
        %2328 = vmatprep.subr.bf16.mxu0 %v1977
        %2329 = vmatpush1.bf16.msra.mxu0 %v1976
        %2330 = vmatprep.subr.bf16.mxu0 %v1985
        %2331 = vmatpush1.bf16.msra.mxu0 %v1984
        %2332 = vmatprep.subr.bf16.mxu0 %v1993
        %2333 = vmatpush1.bf16.msra.mxu0 %v1992
        %2334 = vmatprep.subr.bf16.mxu0 %v2001
        %2335 = vmatpush1.bf16.msra.mxu0 %v2000
        %2336 = vmatprep.subr.bf16.mxu0 %v2009
        %2337 = vmatpush1.bf16.msra.mxu0 %v2008
        %2338 = vmatprep.subr.bf16.mxu0 %v2017
        %2339 = vmatpush1.bf16.msra.mxu0 %v2016
        %2340 = vmatprep.subr.bf16.mxu0 %v2025
        %2341 = vmatpush1.bf16.msra.mxu0 %v2024
        %2342 = vmatprep.subr.bf16.mxu0 %v2033
        %2343 = vmatpush1.bf16.msra.mxu0 %v2032
        %2344 = vmatprep.subr.bf16.mxu0 0
        %2345 = vmatpush1.bf16.msra.mxu0 0
        %2346 = vmatprep.subr.bf16.mxu0 0
        %2347 = vmatpush1.bf16.msra.mxu0 0
        %2348 = vmatprep.subr.bf16.mxu0 0
        %2349 = vmatpush1.bf16.msra.mxu0 0
        %2350 = vmatprep.subr.bf16.mxu0 0
        %2351 = vmatpush1.bf16.msra.mxu0 0
        %2352 = vmatprep.subr.bf16.mxu0 0
        %2353 = vmatpush1.bf16.msra.mxu0 0
        %2354 = vmatprep.subr.bf16.mxu0 0
        %2355 = vmatpush1.bf16.msra.mxu0 0
        %2356 = vmatprep.subr.bf16.mxu0 0
        %2357 = vmatpush1.bf16.msra.mxu0 0
        %2358 = vmatprep.subr.bf16.mxu0 0
        %2359 = vmatpush1.bf16.msra.mxu0 0
        %2360 = vmatprep.mubr.bf16.mxu0 0
        %2361 = vmatmul.mubr.bf16.gmra.mrb[0].mxu0 %v2296
        %v2362 = vpop.f32.mrb[0].mxu0
        %v2363 = vadd.f32 %v2075, %v2362
        %v2364 = vpop.f32.mrb[0].mxu0
        %v2365 = vadd.f32 %v2075, %v2364
        %v2366 = vpop.f32.mrb[0].mxu0
        %v2367 = vadd.f32 %v2080, %v2366
        %v2368 = vpop.f32.mrb[0].mxu0
        %v2369 = vadd.f32 %v2080, %v2368
        %2370 = vmatprep.mubr.bf16.mxu0 0
        %2371 = vmatmul.mubr.bf16.gmra.mrb[0].mxu0 %v2297
        %v2372 = vpop.f32.mrb[0].mxu0
        %v2373 = vadd.f32 %v2085, %v2372
        %v2374 = vpop.f32.mrb[0].mxu0
        %v2375 = vadd.f32 %v2085, %v2374
        %v2376 = vpop.f32.mrb[0].mxu0
        %v2377 = vadd.f32 %v2090, %v2376
        %v2378 = vpop.f32.mrb[0].mxu0
        %v2379 = vadd.f32 %v2090, %v2378
        %2380 = vmatprep.mubr.bf16.mxu0 0
        %2381 = vmatmul.mubr.bf16.gmra.mrb[0].mxu0 %v2298
        %v2382 = vpop.f32.mrb[0].mxu0
        %v2383 = vadd.f32 %v2095, %v2382
        %v2384 = vpop.f32.mrb[0].mxu0
        %v2385 = vadd.f32 %v2095, %v2384
        %v2386 = vpop.f32.mrb[0].mxu0
        %v2387 = vadd.f32 %v2100, %v2386
        %v2388 = vpop.f32.mrb[0].mxu0
        %v2389 = vadd.f32 %v2100, %v2388
        %2390 = vmatprep.mubr.bf16.mxu0 0
        %2391 = vmatmul.mubr.bf16.gmra.mrb[0].mxu0 %v2299
        %v2392 = vpop.f32.mrb[0].mxu0
        %v2393 = vadd.f32 %v2105, %v2392
        %v2394 = vpop.f32.mrb[0].mxu0
        %v2395 = vadd.f32 %v2105, %v2394
        %v2396 = vpop.f32.mrb[0].mxu0
        %v2397 = vadd.f32 %v2110, %v2396
        %v2398 = vpop.f32.mrb[0].mxu0
        %v2399 = vadd.f32 %v2110, %v2398
        %2400 = vmatprep.mubr.bf16.mxu0 0
        %2401 = vmatmul.mubr.bf16.gmra.mrb[0].mxu0 %v2300
        %v2402 = vpop.f32.mrb[0].mxu0
        %v2403 = vadd.f32 %v2115, %v2402
        %v2404 = vpop.f32.mrb[0].mxu0
        %v2405 = vadd.f32 %v2115, %v2404
        %v2406 = vpop.f32.mrb[0].mxu0
        %v2407 = vadd.f32 %v2120, %v2406
        %v2408 = vpop.f32.mrb[0].mxu0
        %v2409 = vadd.f32 %v2120, %v2408
        %2410 = vmatprep.mubr.bf16.mxu0 0
        %2411 = vmatmul.mubr.bf16.gmra.mrb[0].mxu0 %v2301
        %v2412 = vpop.f32.mrb[0].mxu0
        %v2413 = vadd.f32 %v2125, %v2412
        %v2414 = vpop.f32.mrb[0].mxu0
        %v2415 = vadd.f32 %v2125, %v2414
        %v2416 = vpop.f32.mrb[0].mxu0
        %v2417 = vadd.f32 %v2130, %v2416
        %v2418 = vpop.f32.mrb[0].mxu0
        %v2419 = vadd.f32 %v2130, %v2418
        %2420 = vmatprep.mubr.bf16.mxu0 0
        %2421 = vmatmul.mubr.bf16.gmra.mrb[0].mxu0 %v2302
        %v2422 = vpop.f32.mrb[0].mxu0
        %v2423 = vadd.f32 %v2135, %v2422
        %v2424 = vpop.f32.mrb[0].mxu0
        %v2425 = vadd.f32 %v2135, %v2424
        %v2426 = vpop.f32.mrb[0].mxu0
        %v2427 = vadd.f32 %v2140, %v2426
        %v2428 = vpop.f32.mrb[0].mxu0
        %v2429 = vadd.f32 %v2140, %v2428
        %2430 = vmatprep.mubr.bf16.mxu0 0
        %2431 = vmatmul.mubr.bf16.gmra.mrb[0].mxu0 %v2303
        %v2432 = vpop.f32.mrb[0].mxu0
        %v2433 = vadd.f32 %v2145, %v2432
        %v2434 = vpop.f32.mrb[0].mxu0
        %v2435 = vadd.f32 %v2145, %v2434
        %v2436 = vpop.f32.mrb[0].mxu0
        %v2437 = vadd.f32 %v2150, %v2436
        %v2438 = vpop.f32.mrb[0].mxu0
        %v2439 = vadd.f32 %v2150, %v2438
        %2440 = vmatprep.mubr.bf16.mxu0 0
        %2441 = vmatmul.mubr.bf16.gmra.mrb[0].mxu0 %v2304
        %v2442 = vpop.f32.mrb[0].mxu0
        %v2443 = vadd.f32 %v2155, %v2442
        %v2444 = vpop.f32.mrb[0].mxu0
        %v2445 = vadd.f32 %v2155, %v2444
        %v2446 = vpop.f32.mrb[0].mxu0
        %v2447 = vadd.f32 %v2160, %v2446
        %v2448 = vpop.f32.mrb[0].mxu0
        %v2449 = vadd.f32 %v2160, %v2448
        %2450 = vmatprep.mubr.bf16.mxu0 0
        %2451 = vmatmul.mubr.bf16.gmra.mrb[0].mxu0 %v2305
        %v2452 = vpop.f32.mrb[0].mxu0
        %v2453 = vadd.f32 %v2165, %v2452
        %v2454 = vpop.f32.mrb[0].mxu0
        %v2455 = vadd.f32 %v2165, %v2454
        %v2456 = vpop.f32.mrb[0].mxu0
        %v2457 = vadd.f32 %v2170, %v2456
        %v2458 = vpop.f32.mrb[0].mxu0
        %v2459 = vadd.f32 %v2170, %v2458
        %2460 = vmatprep.mubr.bf16.mxu0 0
        %2461 = vmatmul.mubr.bf16.gmra.mrb[0].mxu0 %v2306
        %v2462 = vpop.f32.mrb[0].mxu0
        %v2463 = vadd.f32 %v2175, %v2462
        %v2464 = vpop.f32.mrb[0].mxu0
        %v2465 = vadd.f32 %v2175, %v2464
        %v2466 = vpop.f32.mrb[0].mxu0
        %v2467 = vadd.f32 %v2180, %v2466
        %v2468 = vpop.f32.mrb[0].mxu0
        %v2469 = vadd.f32 %v2180, %v2468
        %2470 = vmatprep.mubr.bf16.mxu0 0
        %2471 = vmatmul.mubr.bf16.gmra.mrb[0].mxu0 %v2307
        %v2472 = vpop.f32.mrb[0].mxu0
        %v2473 = vadd.f32 %v2185, %v2472
        %v2474 = vpop.f32.mrb[0].mxu0
        %v2475 = vadd.f32 %v2185, %v2474
        %v2476 = vpop.f32.mrb[0].mxu0
        %v2477 = vadd.f32 %v2190, %v2476
        %v2478 = vpop.f32.mrb[0].mxu0
        %v2479 = vadd.f32 %v2190, %v2478
        %2480 = vmatprep.mubr.bf16.mxu0 0
        %2481 = vmatmul.mubr.bf16.gmra.mrb[0].mxu0 %v2308
        %v2482 = vpop.f32.mrb[0].mxu0
        %v2483 = vadd.f32 %v2195, %v2482
        %v2484 = vpop.f32.mrb[0].mxu0
        %v2485 = vadd.f32 %v2195, %v2484
        %v2486 = vpop.f32.mrb[0].mxu0
        %v2487 = vadd.f32 %v2200, %v2486
        %v2488 = vpop.f32.mrb[0].mxu0
        %v2489 = vadd.f32 %v2200, %v2488
        %2490 = vmatprep.mubr.bf16.mxu0 0
        %2491 = vmatmul.mubr.bf16.gmra.mrb[0].mxu0 %v2309
        %v2492 = vpop.f32.mrb[0].mxu0
        %v2493 = vadd.f32 %v2205, %v2492
        %v2494 = vpop.f32.mrb[0].mxu0
        %v2495 = vadd.f32 %v2205, %v2494
        %v2496 = vpop.f32.mrb[0].mxu0
        %v2497 = vadd.f32 %v2210, %v2496
        %v2498 = vpop.f32.mrb[0].mxu0
        %v2499 = vadd.f32 %v2210, %v2498
        %2500 = vmatprep.mubr.bf16.mxu0 0
        %2501 = vmatmul.mubr.bf16.gmra.mrb[0].mxu0 %v2310
        %v2502 = vpop.f32.mrb[0].mxu0
        %v2503 = vadd.f32 %v2215, %v2502
        %v2504 = vpop.f32.mrb[0].mxu0
        %v2505 = vadd.f32 %v2215, %v2504
        %v2506 = vpop.f32.mrb[0].mxu0
        %v2507 = vadd.f32 %v2220, %v2506
        %v2508 = vpop.f32.mrb[0].mxu0
        %v2509 = vadd.f32 %v2220, %v2508
        %2510 = vmatprep.mubr.bf16.mxu0 0
        %2511 = vmatmul.mubr.bf16.gmra.mrb[0].mxu0 %v2311
        %v2512 = vpop.f32.mrb[0].mxu0
        %v2513 = vadd.f32 %v2225, %v2512
        %v2514 = vpop.f32.mrb[0].mxu0
        %v2515 = vadd.f32 %v2225, %v2514
        %v2516 = vpop.f32.mrb[0].mxu0
        %v2517 = vadd.f32 %v2230, %v2516
        %v2518 = vpop.f32.mrb[0].mxu0
        %v2519 = vadd.f32 %v2230, %v2518
        %2520 = vdwg.mxu0
        %2521 = vmatprep.subr.bf16.mxu0 %v1979
        %2522 = vmatpush1.bf16.msra.mxu0 %v1978
        %2523 = vmatprep.subr.bf16.mxu0 %v1987
        %2524 = vmatpush1.bf16.msra.mxu0 %v1986
        %2525 = vmatprep.subr.bf16.mxu0 %v1995
        %2526 = vmatpush1.bf16.msra.mxu0 %v1994
        %2527 = vmatprep.subr.bf16.mxu0 %v2003
        %2528 = vmatpush1.bf16.msra.mxu0 %v2002
        %2529 = vmatprep.subr.bf16.mxu0 %v2011
        %2530 = vmatpush1.bf16.msra.mxu0 %v2010
        %2531 = vmatprep.subr.bf16.mxu0 %v2019
        %2532 = vmatpush1.bf16.msra.mxu0 %v2018
        %2533 = vmatprep.subr.bf16.mxu0 %v2027
        %2534 = vmatpush1.bf16.msra.mxu0 %v2026
        %2535 = vmatprep.subr.bf16.mxu0 %v2035
        %2536 = vmatpush1.bf16.msra.mxu0 %v2034
        %2537 = vmatprep.subr.bf16.mxu0 0
        %2538 = vmatpush1.bf16.msra.mxu0 0
        %2539 = vmatprep.subr.bf16.mxu0 0
        %2540 = vmatpush1.bf16.msra.mxu0 0
        %2541 = vmatprep.subr.bf16.mxu0 0
        %2542 = vmatpush1.bf16.msra.mxu0 0
        %2543 = vmatprep.subr.bf16.mxu0 0
        %2544 = vmatpush1.bf16.msra.mxu0 0
        %2545 = vmatprep.subr.bf16.mxu0 0
        %2546 = vmatpush1.bf16.msra.mxu0 0
        %2547 = vmatprep.subr.bf16.mxu0 0
        %2548 = vmatpush1.bf16.msra.mxu0 0
        %2549 = vmatprep.subr.bf16.mxu0 0
        %2550 = vmatpush1.bf16.msra.mxu0 0
        %2551 = vmatprep.subr.bf16.mxu0 0
        %2552 = vmatpush1.bf16.msra.mxu0 0
        %2553 = vmatprep.mubr.bf16.mxu0 0
        %2554 = vmatmul.mubr.bf16.gmra.mrb[0].mxu0 %v2296
        %v2555 = vpop.f32.mrb[0].mxu0
        %v2556 = vadd.f32 %v2075, %v2555
        %v2557 = vpop.f32.mrb[0].mxu0
        %v2558 = vadd.f32 %v2075, %v2557
        %v2559 = vpop.f32.mrb[0].mxu0
        %v2560 = vadd.f32 %v2080, %v2559
        %v2561 = vpop.f32.mrb[0].mxu0
        %v2562 = vadd.f32 %v2080, %v2561
        %2563 = vmatprep.mubr.bf16.mxu0 0
        %2564 = vmatmul.mubr.bf16.gmra.mrb[0].mxu0 %v2297
        %v2565 = vpop.f32.mrb[0].mxu0
        %v2566 = vadd.f32 %v2085, %v2565
        %v2567 = vpop.f32.mrb[0].mxu0
        %v2568 = vadd.f32 %v2085, %v2567
        %v2569 = vpop.f32.mrb[0].mxu0
        %v2570 = vadd.f32 %v2090, %v2569
        %v2571 = vpop.f32.mrb[0].mxu0
        %v2572 = vadd.f32 %v2090, %v2571
        %2573 = vmatprep.mubr.bf16.mxu0 0
        %2574 = vmatmul.mubr.bf16.gmra.mrb[0].mxu0 %v2298
        %v2575 = vpop.f32.mrb[0].mxu0
        %v2576 = vadd.f32 %v2095, %v2575
        %v2577 = vpop.f32.mrb[0].mxu0
        %v2578 = vadd.f32 %v2095, %v2577
        %v2579 = vpop.f32.mrb[0].mxu0
        %v2580 = vadd.f32 %v2100, %v2579
        %v2581 = vpop.f32.mrb[0].mxu0
        %v2582 = vadd.f32 %v2100, %v2581
        %2583 = vmatprep.mubr.bf16.mxu0 0
        %2584 = vmatmul.mubr.bf16.gmra.mrb[0].mxu0 %v2299
        %v2585 = vpop.f32.mrb[0].mxu0
        %v2586 = vadd.f32 %v2105, %v2585
        %v2587 = vpop.f32.mrb[0].mxu0
        %v2588 = vadd.f32 %v2105, %v2587
        %v2589 = vpop.f32.mrb[0].mxu0
        %v2590 = vadd.f32 %v2110, %v2589
        %v2591 = vpop.f32.mrb[0].mxu0
        %v2592 = vadd.f32 %v2110, %v2591
        %2593 = vmatprep.mubr.bf16.mxu0 0
        %2594 = vmatmul.mubr.bf16.gmra.mrb[0].mxu0 %v2300
        %v2595 = vpop.f32.mrb[0].mxu0
        %v2596 = vadd.f32 %v2115, %v2595
        %v2597 = vpop.f32.mrb[0].mxu0
        %v2598 = vadd.f32 %v2115, %v2597
        %v2599 = vpop.f32.mrb[0].mxu0
        %v2600 = vadd.f32 %v2120, %v2599
        %v2601 = vpop.f32.mrb[0].mxu0
        %v2602 = vadd.f32 %v2120, %v2601
        %2603 = vmatprep.mubr.bf16.mxu0 0
        %2604 = vmatmul.mubr.bf16.gmra.mrb[0].mxu0 %v2301
        %v2605 = vpop.f32.mrb[0].mxu0
        %v2606 = vadd.f32 %v2125, %v2605
        %v2607 = vpop.f32.mrb[0].mxu0
        %v2608 = vadd.f32 %v2125, %v2607
        %v2609 = vpop.f32.mrb[0].mxu0
        %v2610 = vadd.f32 %v2130, %v2609
        %v2611 = vpop.f32.mrb[0].mxu0
        %v2612 = vadd.f32 %v2130, %v2611
        %2613 = vmatprep.mubr.bf16.mxu0 0
        %2614 = vmatmul.mubr.bf16.gmra.mrb[0].mxu0 %v2302
        %v2615 = vpop.f32.mrb[0].mxu0
        %v2616 = vadd.f32 %v2135, %v2615
        %v2617 = vpop.f32.mrb[0].mxu0
        %v2618 = vadd.f32 %v2135, %v2617
        %v2619 = vpop.f32.mrb[0].mxu0
        %v2620 = vadd.f32 %v2140, %v2619
        %v2621 = vpop.f32.mrb[0].mxu0
        %v2622 = vadd.f32 %v2140, %v2621
        %2623 = vmatprep.mubr.bf16.mxu0 0
        %2624 = vmatmul.mubr.bf16.gmra.mrb[0].mxu0 %v2303
        %v2625 = vpop.f32.mrb[0].mxu0
        %v2626 = vadd.f32 %v2145, %v2625
        %v2627 = vpop.f32.mrb[0].mxu0
        %v2628 = vadd.f32 %v2145, %v2627
        %v2629 = vpop.f32.mrb[0].mxu0
        %v2630 = vadd.f32 %v2150, %v2629
        %v2631 = vpop.f32.mrb[0].mxu0
        %v2632 = vadd.f32 %v2150, %v2631
        %2633 = vmatprep.mubr.bf16.mxu0 0
        %2634 = vmatmul.mubr.bf16.gmra.mrb[0].mxu0 %v2304
        %v2635 = vpop.f32.mrb[0].mxu0
        %v2636 = vadd.f32 %v2155, %v2635
        %v2637 = vpop.f32.mrb[0].mxu0
        %v2638 = vadd.f32 %v2155, %v2637
        %v2639 = vpop.f32.mrb[0].mxu0
        %v2640 = vadd.f32 %v2160, %v2639
        %v2641 = vpop.f32.mrb[0].mxu0
        %v2642 = vadd.f32 %v2160, %v2641
        %2643 = vmatprep.mubr.bf16.mxu0 0
        %2644 = vmatmul.mubr.bf16.gmra.mrb[0].mxu0 %v2305
        %v2645 = vpop.f32.mrb[0].mxu0
        %v2646 = vadd.f32 %v2165, %v2645
        %v2647 = vpop.f32.mrb[0].mxu0
        %v2648 = vadd.f32 %v2165, %v2647
        %v2649 = vpop.f32.mrb[0].mxu0
        %v2650 = vadd.f32 %v2170, %v2649
        %v2651 = vpop.f32.mrb[0].mxu0
        %v2652 = vadd.f32 %v2170, %v2651
        %2653 = vmatprep.mubr.bf16.mxu0 0
        %2654 = vmatmul.mubr.bf16.gmra.mrb[0].mxu0 %v2306
        %v2655 = vpop.f32.mrb[0].mxu0
        %v2656 = vadd.f32 %v2175, %v2655
        %v2657 = vpop.f32.mrb[0].mxu0
        %v2658 = vadd.f32 %v2175, %v2657
        %v2659 = vpop.f32.mrb[0].mxu0
        %v2660 = vadd.f32 %v2180, %v2659
        %v2661 = vpop.f32.mrb[0].mxu0
        %v2662 = vadd.f32 %v2180, %v2661
        %2663 = vmatprep.mubr.bf16.mxu0 0
        %2664 = vmatmul.mubr.bf16.gmra.mrb[0].mxu0 %v2307
        %v2665 = vpop.f32.mrb[0].mxu0
        %v2666 = vadd.f32 %v2185, %v2665
        %v2667 = vpop.f32.mrb[0].mxu0
        %v2668 = vadd.f32 %v2185, %v2667
        %v2669 = vpop.f32.mrb[0].mxu0
        %v2670 = vadd.f32 %v2190, %v2669
        %v2671 = vpop.f32.mrb[0].mxu0
        %v2672 = vadd.f32 %v2190, %v2671
        %2673 = vmatprep.mubr.bf16.mxu0 0
        %2674 = vmatmul.mubr.bf16.gmra.mrb[0].mxu0 %v2308
        %v2675 = vpop.f32.mrb[0].mxu0
        %v2676 = vadd.f32 %v2195, %v2675
        %v2677 = vpop.f32.mrb[0].mxu0
        %v2678 = vadd.f32 %v2195, %v2677
        %v2679 = vpop.f32.mrb[0].mxu0
        %v2680 = vadd.f32 %v2200, %v2679
        %v2681 = vpop.f32.mrb[0].mxu0
        %v2682 = vadd.f32 %v2200, %v2681
        %2683 = vmatprep.mubr.bf16.mxu0 0
        %2684 = vmatmul.mubr.bf16.gmra.mrb[0].mxu0 %v2309
        %v2685 = vpop.f32.mrb[0].mxu0
        %v2686 = vadd.f32 %v2205, %v2685
        %v2687 = vpop.f32.mrb[0].mxu0
        %v2688 = vadd.f32 %v2205, %v2687
        %v2689 = vpop.f32.mrb[0].mxu0
        %v2690 = vadd.f32 %v2210, %v2689
        %v2691 = vpop.f32.mrb[0].mxu0
        %v2692 = vadd.f32 %v2210, %v2691
        %2693 = vmatprep.mubr.bf16.mxu0 0
        %2694 = vmatmul.mubr.bf16.gmra.mrb[0].mxu0 %v2310
        %v2695 = vpop.f32.mrb[0].mxu0
        %v2696 = vadd.f32 %v2215, %v2695
        %v2697 = vpop.f32.mrb[0].mxu0
        %v2698 = vadd.f32 %v2215, %v2697
        %v2699 = vpop.f32.mrb[0].mxu0
        %v2700 = vadd.f32 %v2220, %v2699
        %v2701 = vpop.f32.mrb[0].mxu0
        %v2702 = vadd.f32 %v2220, %v2701
        %2703 = vmatprep.mubr.bf16.mxu0 0
        %2704 = vmatmul.mubr.bf16.gmra.mrb[0].mxu0 %v2311
        %v2705 = vpop.f32.mrb[0].mxu0
        %v2706 = vadd.f32 %v2225, %v2705
        %v2707 = vpop.f32.mrb[0].mxu0
        %v2708 = vadd.f32 %v2225, %v2707
        %v2709 = vpop.f32.mrb[0].mxu0
        %v2710 = vadd.f32 %v2230, %v2709
        %v2711 = vpop.f32.mrb[0].mxu0
        %v2712 = vadd.f32 %v2230, %v2711
        %2713 = vdwg.mxu0
        %2714 = vmatprep.subr.bf16.mxu0 %v1981
        %2715 = vmatpush1.bf16.msra.mxu0 %v1980
        %2716 = vmatprep.subr.bf16.mxu0 %v1989
        %2717 = vmatpush1.bf16.msra.mxu0 %v1988
        %2718 = vmatprep.subr.bf16.mxu0 %v1997
        %2719 = vmatpush1.bf16.msra.mxu0 %v1996
        %2720 = vmatprep.subr.bf16.mxu0 %v2005
        %2721 = vmatpush1.bf16.msra.mxu0 %v2004
        %2722 = vmatprep.subr.bf16.mxu0 %v2013
        %2723 = vmatpush1.bf16.msra.mxu0 %v2012
        %2724 = vmatprep.subr.bf16.mxu0 %v2021
        %2725 = vmatpush1.bf16.msra.mxu0 %v2020
        %2726 = vmatprep.subr.bf16.mxu0 %v2029
        %2727 = vmatpush1.bf16.msra.mxu0 %v2028
        %2728 = vmatprep.subr.bf16.mxu0 %v2037
        %2729 = vmatpush1.bf16.msra.mxu0 %v2036
        %2730 = vmatprep.subr.bf16.mxu0 0
        %2731 = vmatpush1.bf16.msra.mxu0 0
        %2732 = vmatprep.subr.bf16.mxu0 0
        %2733 = vmatpush1.bf16.msra.mxu0 0
        %2734 = vmatprep.subr.bf16.mxu0 0
        %2735 = vmatpush1.bf16.msra.mxu0 0
        %2736 = vmatprep.subr.bf16.mxu0 0
        %2737 = vmatpush1.bf16.msra.mxu0 0
        %2738 = vmatprep.subr.bf16.mxu0 0
        %2739 = vmatpush1.bf16.msra.mxu0 0
        %2740 = vmatprep.subr.bf16.mxu0 0
        %2741 = vmatpush1.bf16.msra.mxu0 0
        %2742 = vmatprep.subr.bf16.mxu0 0
        %2743 = vmatpush1.bf16.msra.mxu0 0
        %2744 = vmatprep.subr.bf16.mxu0 0
        %2745 = vmatpush1.bf16.msra.mxu0 0
        %2746 = vmatprep.mubr.bf16.mxu0 0
        %2747 = vmatmul.mubr.bf16.gmra.mrb[0].mxu0 %v2296
        %v2748 = vpop.f32.mrb[0].mxu0
        %v2749 = vadd.f32 %v2075, %v2748
        %v2750 = vpop.f32.mrb[0].mxu0
        %v2751 = vadd.f32 %v2075, %v2750
        %v2752 = vpop.f32.mrb[0].mxu0
        %v2753 = vadd.f32 %v2080, %v2752
        %v2754 = vpop.f32.mrb[0].mxu0
        %v2755 = vadd.f32 %v2080, %v2754
        %2756 = vmatprep.mubr.bf16.mxu0 0
        %2757 = vmatmul.mubr.bf16.gmra.mrb[0].mxu0 %v2297
        %v2758 = vpop.f32.mrb[0].mxu0
        %v2759 = vadd.f32 %v2085, %v2758
        %v2760 = vpop.f32.mrb[0].mxu0
        %v2761 = vadd.f32 %v2085, %v2760
        %v2762 = vpop.f32.mrb[0].mxu0
        %v2763 = vadd.f32 %v2090, %v2762
        %v2764 = vpop.f32.mrb[0].mxu0
        %v2765 = vadd.f32 %v2090, %v2764
        %2766 = vmatprep.mubr.bf16.mxu0 0
        %2767 = vmatmul.mubr.bf16.gmra.mrb[0].mxu0 %v2298
        %v2768 = vpop.f32.mrb[0].mxu0
        %v2769 = vadd.f32 %v2095, %v2768
        %v2770 = vpop.f32.mrb[0].mxu0
        %v2771 = vadd.f32 %v2095, %v2770
        %v2772 = vpop.f32.mrb[0].mxu0
        %v2773 = vadd.f32 %v2100, %v2772
        %v2774 = vpop.f32.mrb[0].mxu0
        %v2775 = vadd.f32 %v2100, %v2774
        %2776 = vmatprep.mubr.bf16.mxu0 0
        %2777 = vmatmul.mubr.bf16.gmra.mrb[0].mxu0 %v2299
        %v2778 = vpop.f32.mrb[0].mxu0
        %v2779 = vadd.f32 %v2105, %v2778
        %v2780 = vpop.f32.mrb[0].mxu0
        %v2781 = vadd.f32 %v2105, %v2780
        %v2782 = vpop.f32.mrb[0].mxu0
        %v2783 = vadd.f32 %v2110, %v2782
        %v2784 = vpop.f32.mrb[0].mxu0
        %v2785 = vadd.f32 %v2110, %v2784
        %2786 = vmatprep.mubr.bf16.mxu0 0
        %2787 = vmatmul.mubr.bf16.gmra.mrb[0].mxu0 %v2300
        %v2788 = vpop.f32.mrb[0].mxu0
        %v2789 = vadd.f32 %v2115, %v2788
        %v2790 = vpop.f32.mrb[0].mxu0
        %v2791 = vadd.f32 %v2115, %v2790
        %v2792 = vpop.f32.mrb[0].mxu0
        %v2793 = vadd.f32 %v2120, %v2792
        %v2794 = vpop.f32.mrb[0].mxu0
        %v2795 = vadd.f32 %v2120, %v2794
        %2796 = vmatprep.mubr.bf16.mxu0 0
        %2797 = vmatmul.mubr.bf16.gmra.mrb[0].mxu0 %v2301
        %v2798 = vpop.f32.mrb[0].mxu0
        %v2799 = vadd.f32 %v2125, %v2798
        %v2800 = vpop.f32.mrb[0].mxu0
        %v2801 = vadd.f32 %v2125, %v2800
        %v2802 = vpop.f32.mrb[0].mxu0
        %v2803 = vadd.f32 %v2130, %v2802
        %v2804 = vpop.f32.mrb[0].mxu0
        %v2805 = vadd.f32 %v2130, %v2804
        %2806 = vmatprep.mubr.bf16.mxu0 0
        %2807 = vmatmul.mubr.bf16.gmra.mrb[0].mxu0 %v2302
        %v2808 = vpop.f32.mrb[0].mxu0
        %v2809 = vadd.f32 %v2135, %v2808
        %v2810 = vpop.f32.mrb[0].mxu0
        %v2811 = vadd.f32 %v2135, %v2810
        %v2812 = vpop.f32.mrb[0].mxu0
        %v2813 = vadd.f32 %v2140, %v2812
        %v2814 = vpop.f32.mrb[0].mxu0
        %v2815 = vadd.f32 %v2140, %v2814
        %2816 = vmatprep.mubr.bf16.mxu0 0
        %2817 = vmatmul.mubr.bf16.gmra.mrb[0].mxu0 %v2303
        %v2818 = vpop.f32.mrb[0].mxu0
        %v2819 = vadd.f32 %v2145, %v2818
        %v2820 = vpop.f32.mrb[0].mxu0
        %v2821 = vadd.f32 %v2145, %v2820
        %v2822 = vpop.f32.mrb[0].mxu0
        %v2823 = vadd.f32 %v2150, %v2822
        %v2824 = vpop.f32.mrb[0].mxu0
        %v2825 = vadd.f32 %v2150, %v2824
        %2826 = vmatprep.mubr.bf16.mxu0 0
        %2827 = vmatmul.mubr.bf16.gmra.mrb[0].mxu0 %v2304
        %v2828 = vpop.f32.mrb[0].mxu0
        %v2829 = vadd.f32 %v2155, %v2828
        %v2830 = vpop.f32.mrb[0].mxu0
        %v2831 = vadd.f32 %v2155, %v2830
        %v2832 = vpop.f32.mrb[0].mxu0
        %v2833 = vadd.f32 %v2160, %v2832
        %v2834 = vpop.f32.mrb[0].mxu0
        %v2835 = vadd.f32 %v2160, %v2834
        %2836 = vmatprep.mubr.bf16.mxu0 0
        %2837 = vmatmul.mubr.bf16.gmra.mrb[0].mxu0 %v2305
        %v2838 = vpop.f32.mrb[0].mxu0
        %v2839 = vadd.f32 %v2165, %v2838
        %v2840 = vpop.f32.mrb[0].mxu0
        %v2841 = vadd.f32 %v2165, %v2840
        %v2842 = vpop.f32.mrb[0].mxu0
        %v2843 = vadd.f32 %v2170, %v2842
        %v2844 = vpop.f32.mrb[0].mxu0
        %v2845 = vadd.f32 %v2170, %v2844
        %2846 = vmatprep.mubr.bf16.mxu0 0
        %2847 = vmatmul.mubr.bf16.gmra.mrb[0].mxu0 %v2306
        %v2848 = vpop.f32.mrb[0].mxu0
        %v2849 = vadd.f32 %v2175, %v2848
        %v2850 = vpop.f32.mrb[0].mxu0
        %v2851 = vadd.f32 %v2175, %v2850
        %v2852 = vpop.f32.mrb[0].mxu0
        %v2853 = vadd.f32 %v2180, %v2852
        %v2854 = vpop.f32.mrb[0].mxu0
        %v2855 = vadd.f32 %v2180, %v2854
        %2856 = vmatprep.mubr.bf16.mxu0 0
        %2857 = vmatmul.mubr.bf16.gmra.mrb[0].mxu0 %v2307
        %v2858 = vpop.f32.mrb[0].mxu0
        %v2859 = vadd.f32 %v2185, %v2858
        %v2860 = vpop.f32.mrb[0].mxu0
        %v2861 = vadd.f32 %v2185, %v2860
        %v2862 = vpop.f32.mrb[0].mxu0
        %v2863 = vadd.f32 %v2190, %v2862
        %v2864 = vpop.f32.mrb[0].mxu0
        %v2865 = vadd.f32 %v2190, %v2864
        %2866 = vmatprep.mubr.bf16.mxu0 0
        %2867 = vmatmul.mubr.bf16.gmra.mrb[0].mxu0 %v2308
        %v2868 = vpop.f32.mrb[0].mxu0
        %v2869 = vadd.f32 %v2195, %v2868
        %v2870 = vpop.f32.mrb[0].mxu0
        %v2871 = vadd.f32 %v2195, %v2870
        %v2872 = vpop.f32.mrb[0].mxu0
        %v2873 = vadd.f32 %v2200, %v2872
        %v2874 = vpop.f32.mrb[0].mxu0
        %v2875 = vadd.f32 %v2200, %v2874
        %2876 = vmatprep.mubr.bf16.mxu0 0
        %2877 = vmatmul.mubr.bf16.gmra.mrb[0].mxu0 %v2309
        %v2878 = vpop.f32.mrb[0].mxu0
        %v2879 = vadd.f32 %v2205, %v2878
        %v2880 = vpop.f32.mrb[0].mxu0
        %v2881 = vadd.f32 %v2205, %v2880
        %v2882 = vpop.f32.mrb[0].mxu0
        %v2883 = vadd.f32 %v2210, %v2882
        %v2884 = vpop.f32.mrb[0].mxu0
        %v2885 = vadd.f32 %v2210, %v2884
        %2886 = vmatprep.mubr.bf16.mxu0 0
        %2887 = vmatmul.mubr.bf16.gmra.mrb[0].mxu0 %v2310
        %v2888 = vpop.f32.mrb[0].mxu0
        %v2889 = vadd.f32 %v2215, %v2888
        %v2890 = vpop.f32.mrb[0].mxu0
        %v2891 = vadd.f32 %v2215, %v2890
        %v2892 = vpop.f32.mrb[0].mxu0
        %v2893 = vadd.f32 %v2220, %v2892
        %v2894 = vpop.f32.mrb[0].mxu0
        %v2895 = vadd.f32 %v2220, %v2894
        %2896 = vmatprep.mubr.bf16.mxu0 0
        %2897 = vmatmul.mubr.bf16.gmra.mrb[0].mxu0 %v2311
        %v2898 = vpop.f32.mrb[0].mxu0
        %v2899 = vadd.f32 %v2225, %v2898
        %v2900 = vpop.f32.mrb[0].mxu0
        %v2901 = vadd.f32 %v2225, %v2900
        %v2902 = vpop.f32.mrb[0].mxu0
        %v2903 = vadd.f32 %v2230, %v2902
        %v2904 = vpop.f32.mrb[0].mxu0
        %v2905 = vadd.f32 %v2230, %v2904
        %2906 = vdwg.mxu0
        %2907 = vmatprep.subr.bf16.mxu0 %v1983
        %2908 = vmatpush1.bf16.msra.mxu0 %v1982
        %2909 = vmatprep.subr.bf16.mxu0 %v1991
        %2910 = vmatpush1.bf16.msra.mxu0 %v1990
        %2911 = vmatprep.subr.bf16.mxu0 %v1999
        %2912 = vmatpush1.bf16.msra.mxu0 %v1998
        %2913 = vmatprep.subr.bf16.mxu0 %v2007
        %2914 = vmatpush1.bf16.msra.mxu0 %v2006
        %2915 = vmatprep.subr.bf16.mxu0 %v2015
        %2916 = vmatpush1.bf16.msra.mxu0 %v2014
        %2917 = vmatprep.subr.bf16.mxu0 %v2023
        %2918 = vmatpush1.bf16.msra.mxu0 %v2022
        %2919 = vmatprep.subr.bf16.mxu0 %v2031
        %2920 = vmatpush1.bf16.msra.mxu0 %v2030
        %2921 = vmatprep.subr.bf16.mxu0 %v2039
        %2922 = vmatpush1.bf16.msra.mxu0 %v2038
        %2923 = vmatprep.subr.bf16.mxu0 0
        %2924 = vmatpush1.bf16.msra.mxu0 0
        %2925 = vmatprep.subr.bf16.mxu0 0
        %2926 = vmatpush1.bf16.msra.mxu0 0
        %2927 = vmatprep.subr.bf16.mxu0 0
        %2928 = vmatpush1.bf16.msra.mxu0 0
        %2929 = vmatprep.subr.bf16.mxu0 0
        %2930 = vmatpush1.bf16.msra.mxu0 0
        %2931 = vmatprep.subr.bf16.mxu0 0
        %2932 = vmatpush1.bf16.msra.mxu0 0
        %2933 = vmatprep.subr.bf16.mxu0 0
        %2934 = vmatpush1.bf16.msra.mxu0 0
        %2935 = vmatprep.subr.bf16.mxu0 0
        %2936 = vmatpush1.bf16.msra.mxu0 0
        %2937 = vmatprep.subr.bf16.mxu0 0
        %2938 = vmatpush1.bf16.msra.mxu0 0
        %2939 = vmatprep.mubr.bf16.mxu0 0
        %2940 = vmatmul.mubr.bf16.gmra.mrb[0].mxu0 %v2296
        %v2941 = vpop.f32.mrb[0].mxu0
        %v2942 = vadd.f32 %v2075, %v2941
        %v2943 = vpop.f32.mrb[0].mxu0
        %v2944 = vadd.f32 %v2075, %v2943
        %v2945 = vpop.f32.mrb[0].mxu0
        %v2946 = vadd.f32 %v2080, %v2945
        %v2947 = vpop.f32.mrb[0].mxu0
        %v2948 = vadd.f32 %v2080, %v2947
        %2949 = vmatprep.mubr.bf16.mxu0 0
        %2950 = vmatmul.mubr.bf16.gmra.mrb[0].mxu0 %v2297
        %v2951 = vpop.f32.mrb[0].mxu0
        %v2952 = vadd.f32 %v2085, %v2951
        %v2953 = vpop.f32.mrb[0].mxu0
        %v2954 = vadd.f32 %v2085, %v2953
        %v2955 = vpop.f32.mrb[0].mxu0
        %v2956 = vadd.f32 %v2090, %v2955
        %v2957 = vpop.f32.mrb[0].mxu0
        %v2958 = vadd.f32 %v2090, %v2957
        %2959 = vmatprep.mubr.bf16.mxu0 0
        %2960 = vmatmul.mubr.bf16.gmra.mrb[0].mxu0 %v2298
        %v2961 = vpop.f32.mrb[0].mxu0
        %v2962 = vadd.f32 %v2095, %v2961
        %v2963 = vpop.f32.mrb[0].mxu0
        %v2964 = vadd.f32 %v2095, %v2963
        %v2965 = vpop.f32.mrb[0].mxu0
        %v2966 = vadd.f32 %v2100, %v2965
        %v2967 = vpop.f32.mrb[0].mxu0
        %v2968 = vadd.f32 %v2100, %v2967
        %2969 = vmatprep.mubr.bf16.mxu0 0
        %2970 = vmatmul.mubr.bf16.gmra.mrb[0].mxu0 %v2299
        %v2971 = vpop.f32.mrb[0].mxu0
        %v2972 = vadd.f32 %v2105, %v2971
        %v2973 = vpop.f32.mrb[0].mxu0
        %v2974 = vadd.f32 %v2105, %v2973
        %v2975 = vpop.f32.mrb[0].mxu0
        %v2976 = vadd.f32 %v2110, %v2975
        %v2977 = vpop.f32.mrb[0].mxu0
        %v2978 = vadd.f32 %v2110, %v2977
        %2979 = vmatprep.mubr.bf16.mxu0 0
        %2980 = vmatmul.mubr.bf16.gmra.mrb[0].mxu0 %v2300
        %v2981 = vpop.f32.mrb[0].mxu0
        %v2982 = vadd.f32 %v2115, %v2981
        %v2983 = vpop.f32.mrb[0].mxu0
        %v2984 = vadd.f32 %v2115, %v2983
        %v2985 = vpop.f32.mrb[0].mxu0
        %v2986 = vadd.f32 %v2120, %v2985
        %v2987 = vpop.f32.mrb[0].mxu0
        %v2988 = vadd.f32 %v2120, %v2987
        %2989 = vmatprep.mubr.bf16.mxu0 0
        %2990 = vmatmul.mubr.bf16.gmra.mrb[0].mxu0 %v2301
        %v2991 = vpop.f32.mrb[0].mxu0
        %v2992 = vadd.f32 %v2125, %v2991
        %v2993 = vpop.f32.mrb[0].mxu0
        %v2994 = vadd.f32 %v2125, %v2993
        %v2995 = vpop.f32.mrb[0].mxu0
        %v2996 = vadd.f32 %v2130, %v2995
        %v2997 = vpop.f32.mrb[0].mxu0
        %v2998 = vadd.f32 %v2130, %v2997
        %2999 = vmatprep.mubr.bf16.mxu0 0
        %3000 = vmatmul.mubr.bf16.gmra.mrb[0].mxu0 %v2302
        %v3001 = vpop.f32.mrb[0].mxu0
        %v3002 = vadd.f32 %v2135, %v3001
        %v3003 = vpop.f32.mrb[0].mxu0
        %v3004 = vadd.f32 %v2135, %v3003
        %v3005 = vpop.f32.mrb[0].mxu0
        %v3006 = vadd.f32 %v2140, %v3005
        %v3007 = vpop.f32.mrb[0].mxu0
        %v3008 = vadd.f32 %v2140, %v3007
        %3009 = vmatprep.mubr.bf16.mxu0 0
        %3010 = vmatmul.mubr.bf16.gmra.mrb[0].mxu0 %v2303
        %v3011 = vpop.f32.mrb[0].mxu0
        %v3012 = vadd.f32 %v2145, %v3011
        %v3013 = vpop.f32.mrb[0].mxu0
        %v3014 = vadd.f32 %v2145, %v3013
        %v3015 = vpop.f32.mrb[0].mxu0
        %v3016 = vadd.f32 %v2150, %v3015
        %v3017 = vpop.f32.mrb[0].mxu0
        %v3018 = vadd.f32 %v2150, %v3017
        %3019 = vmatprep.mubr.bf16.mxu0 0
        %3020 = vmatmul.mubr.bf16.gmra.mrb[0].mxu0 %v2304
        %v3021 = vpop.f32.mrb[0].mxu0
        %v3022 = vadd.f32 %v2155, %v3021
        %v3023 = vpop.f32.mrb[0].mxu0
        %v3024 = vadd.f32 %v2155, %v3023
        %v3025 = vpop.f32.mrb[0].mxu0
        %v3026 = vadd.f32 %v2160, %v3025
        %v3027 = vpop.f32.mrb[0].mxu0
        %v3028 = vadd.f32 %v2160, %v3027
        %3029 = vmatprep.mubr.bf16.mxu0 0
        %3030 = vmatmul.mubr.bf16.gmra.mrb[0].mxu0 %v2305
        %v3031 = vpop.f32.mrb[0].mxu0
        %v3032 = vadd.f32 %v2165, %v3031
        %v3033 = vpop.f32.mrb[0].mxu0
        %v3034 = vadd.f32 %v2165, %v3033
        %v3035 = vpop.f32.mrb[0].mxu0
        %v3036 = vadd.f32 %v2170, %v3035
        %v3037 = vpop.f32.mrb[0].mxu0
        %v3038 = vadd.f32 %v2170, %v3037
        %3039 = vmatprep.mubr.bf16.mxu0 0
        %3040 = vmatmul.mubr.bf16.gmra.mrb[0].mxu0 %v2306
        %v3041 = vpop.f32.mrb[0].mxu0
        %v3042 = vadd.f32 %v2175, %v3041
        %v3043 = vpop.f32.mrb[0].mxu0
        %v3044 = vadd.f32 %v2175, %v3043
        %v3045 = vpop.f32.mrb[0].mxu0
        %v3046 = vadd.f32 %v2180, %v3045
        %v3047 = vpop.f32.mrb[0].mxu0
        %v3048 = vadd.f32 %v2180, %v3047
        %3049 = vmatprep.mubr.bf16.mxu0 0
        %3050 = vmatmul.mubr.bf16.gmra.mrb[0].mxu0 %v2307
        %v3051 = vpop.f32.mrb[0].mxu0
        %v3052 = vadd.f32 %v2185, %v3051
        %v3053 = vpop.f32.mrb[0].mxu0
        %v3054 = vadd.f32 %v2185, %v3053
        %v3055 = vpop.f32.mrb[0].mxu0
        %v3056 = vadd.f32 %v2190, %v3055
        %v3057 = vpop.f32.mrb[0].mxu0
        %v3058 = vadd.f32 %v2190, %v3057
        %3059 = vmatprep.mubr.bf16.mxu0 0
        %3060 = vmatmul.mubr.bf16.gmra.mrb[0].mxu0 %v2308
        %v3061 = vpop.f32.mrb[0].mxu0
        %v3062 = vadd.f32 %v2195, %v3061
        %v3063 = vpop.f32.mrb[0].mxu0
        %v3064 = vadd.f32 %v2195, %v3063
        %v3065 = vpop.f32.mrb[0].mxu0
        %v3066 = vadd.f32 %v2200, %v3065
        %v3067 = vpop.f32.mrb[0].mxu0
        %v3068 = vadd.f32 %v2200, %v3067
        %3069 = vmatprep.mubr.bf16.mxu0 0
        %3070 = vmatmul.mubr.bf16.gmra.mrb[0].mxu0 %v2309
        %v3071 = vpop.f32.mrb[0].mxu0
        %v3072 = vadd.f32 %v2205, %v3071
        %v3073 = vpop.f32.mrb[0].mxu0
        %v3074 = vadd.f32 %v2205, %v3073
        %v3075 = vpop.f32.mrb[0].mxu0
        %v3076 = vadd.f32 %v2210, %v3075
        %v3077 = vpop.f32.mrb[0].mxu0
        %v3078 = vadd.f32 %v2210, %v3077
        %3079 = vmatprep.mubr.bf16.mxu0 0
        %3080 = vmatmul.mubr.bf16.gmra.mrb[0].mxu0 %v2310
        %v3081 = vpop.f32.mrb[0].mxu0
        %v3082 = vadd.f32 %v2215, %v3081
        %v3083 = vpop.f32.mrb[0].mxu0
        %v3084 = vadd.f32 %v2215, %v3083
        %v3085 = vpop.f32.mrb[0].mxu0
        %v3086 = vadd.f32 %v2220, %v3085
        %v3087 = vpop.f32.mrb[0].mxu0
        %v3088 = vadd.f32 %v2220, %v3087
        %3089 = vmatprep.mubr.bf16.mxu0 0
        %3090 = vmatmul.mubr.bf16.gmra.mrb[0].mxu0 %v2311
        %v3091 = vpop.f32.mrb[0].mxu0
        %v3092 = vadd.f32 %v2225, %v3091
        %v3093 = vpop.f32.mrb[0].mxu0
        %v3094 = vadd.f32 %v2225, %v3093
        %v3095 = vpop.f32.mrb[0].mxu0
        %v3096 = vadd.f32 %v2230, %v3095
        %v3097 = vpop.f32.mrb[0].mxu0
        %v3098 = vadd.f32 %v2230, %v3097
        %3099 = vdwg.mxu0
        %v3100 = vmax.f32 %v2363, 0.0
        %v3101 = vmax.f32 %v2365, 0.0
        %v3102 = vmax.f32 %v2556, 0.0
        %v3103 = vmax.f32 %v2558, 0.0
        %v3104 = vmax.f32 %v2749, 0.0
        %v3105 = vmax.f32 %v2751, 0.0
        %v3106 = vmax.f32 %v2942, 0.0
        %v3107 = vmax.f32 %v2944, 0.0
        %v3108 = vmax.f32 %v2367, 0.0
        %v3109 = vmax.f32 %v2369, 0.0
        %v3110 = vmax.f32 %v2560, 0.0
        %v3111 = vmax.f32 %v2562, 0.0
        %v3112 = vmax.f32 %v2753, 0.0
        %v3113 = vmax.f32 %v2755, 0.0
        %v3114 = vmax.f32 %v2946, 0.0
        %v3115 = vmax.f32 %v2948, 0.0
        %v3116 = vmax.f32 %v2373, 0.0
        %v3117 = vmax.f32 %v2375, 0.0
        %v3118 = vmax.f32 %v2566, 0.0
        %v3119 = vmax.f32 %v2568, 0.0
        %v3120 = vmax.f32 %v2759, 0.0
        %v3121 = vmax.f32 %v2761, 0.0
        %v3122 = vmax.f32 %v2952, 0.0
        %v3123 = vmax.f32 %v2954, 0.0
        %v3124 = vmax.f32 %v2377, 0.0
        %v3125 = vmax.f32 %v2379, 0.0
        %v3126 = vmax.f32 %v2570, 0.0
        %v3127 = vmax.f32 %v2572, 0.0
        %v3128 = vmax.f32 %v2763, 0.0
        %v3129 = vmax.f32 %v2765, 0.0
        %v3130 = vmax.f32 %v2956, 0.0
        %v3131 = vmax.f32 %v2958, 0.0
        %v3132 = vmax.f32 %v2383, 0.0
        %v3133 = vmax.f32 %v2385, 0.0
        %v3134 = vmax.f32 %v2576, 0.0
        %v3135 = vmax.f32 %v2578, 0.0
        %v3136 = vmax.f32 %v2769, 0.0
        %v3137 = vmax.f32 %v2771, 0.0
        %v3138 = vmax.f32 %v2962, 0.0
        %v3139 = vmax.f32 %v2964, 0.0
        %v3140 = vmax.f32 %v2387, 0.0
        %v3141 = vmax.f32 %v2389, 0.0
        %v3142 = vmax.f32 %v2580, 0.0
        %v3143 = vmax.f32 %v2582, 0.0
        %v3144 = vmax.f32 %v2773, 0.0
        %v3145 = vmax.f32 %v2775, 0.0
        %v3146 = vmax.f32 %v2966, 0.0
        %v3147 = vmax.f32 %v2968, 0.0
        %v3148 = vmax.f32 %v2393, 0.0
        %v3149 = vmax.f32 %v2395, 0.0
        %v3150 = vmax.f32 %v2586, 0.0
        %v3151 = vmax.f32 %v2588, 0.0
        %v3152 = vmax.f32 %v2779, 0.0
        %v3153 = vmax.f32 %v2781, 0.0
        %v3154 = vmax.f32 %v2972, 0.0
        %v3155 = vmax.f32 %v2974, 0.0
        %v3156 = vmax.f32 %v2397, 0.0
        %v3157 = vmax.f32 %v2399, 0.0
        %v3158 = vmax.f32 %v2590, 0.0
        %v3159 = vmax.f32 %v2592, 0.0
        %v3160 = vmax.f32 %v2783, 0.0
        %v3161 = vmax.f32 %v2785, 0.0
        %v3162 = vmax.f32 %v2976, 0.0
        %v3163 = vmax.f32 %v2978, 0.0
        %v3164 = vmax.f32 %v2403, 0.0
        %v3165 = vmax.f32 %v2405, 0.0
        %v3166 = vmax.f32 %v2596, 0.0
        %v3167 = vmax.f32 %v2598, 0.0
        %v3168 = vmax.f32 %v2789, 0.0
        %v3169 = vmax.f32 %v2791, 0.0
        %v3170 = vmax.f32 %v2982, 0.0
        %v3171 = vmax.f32 %v2984, 0.0
        %v3172 = vmax.f32 %v2407, 0.0
        %v3173 = vmax.f32 %v2409, 0.0
        %v3174 = vmax.f32 %v2600, 0.0
        %v3175 = vmax.f32 %v2602, 0.0
        %v3176 = vmax.f32 %v2793, 0.0
        %v3177 = vmax.f32 %v2795, 0.0
        %v3178 = vmax.f32 %v2986, 0.0
        %v3179 = vmax.f32 %v2988, 0.0
        %v3180 = vmax.f32 %v2413, 0.0
        %v3181 = vmax.f32 %v2415, 0.0
        %v3182 = vmax.f32 %v2606, 0.0
        %v3183 = vmax.f32 %v2608, 0.0
        %v3184 = vmax.f32 %v2799, 0.0
        %v3185 = vmax.f32 %v2801, 0.0
        %v3186 = vmax.f32 %v2992, 0.0
        %v3187 = vmax.f32 %v2994, 0.0
        %v3188 = vmax.f32 %v2417, 0.0
        %v3189 = vmax.f32 %v2419, 0.0
        %v3190 = vmax.f32 %v2610, 0.0
        %v3191 = vmax.f32 %v2612, 0.0
        %v3192 = vmax.f32 %v2803, 0.0
        %v3193 = vmax.f32 %v2805, 0.0
        %v3194 = vmax.f32 %v2996, 0.0
        %v3195 = vmax.f32 %v2998, 0.0
        %v3196 = vmax.f32 %v2423, 0.0
        %v3197 = vmax.f32 %v2425, 0.0
        %v3198 = vmax.f32 %v2616, 0.0
        %v3199 = vmax.f32 %v2618, 0.0
        %v3200 = vmax.f32 %v2809, 0.0
        %v3201 = vmax.f32 %v2811, 0.0
        %v3202 = vmax.f32 %v3002, 0.0
        %v3203 = vmax.f32 %v3004, 0.0
        %v3204 = vmax.f32 %v2427, 0.0
        %v3205 = vmax.f32 %v2429, 0.0
        %v3206 = vmax.f32 %v2620, 0.0
        %v3207 = vmax.f32 %v2622, 0.0
        %v3208 = vmax.f32 %v2813, 0.0
        %v3209 = vmax.f32 %v2815, 0.0
        %v3210 = vmax.f32 %v3006, 0.0
        %v3211 = vmax.f32 %v3008, 0.0
        %v3212 = vmax.f32 %v2433, 0.0
        %v3213 = vmax.f32 %v2435, 0.0
        %v3214 = vmax.f32 %v2626, 0.0
        %v3215 = vmax.f32 %v2628, 0.0
        %v3216 = vmax.f32 %v2819, 0.0
        %v3217 = vmax.f32 %v2821, 0.0
        %v3218 = vmax.f32 %v3012, 0.0
        %v3219 = vmax.f32 %v3014, 0.0
        %v3220 = vmax.f32 %v2437, 0.0
        %v3221 = vmax.f32 %v2439, 0.0
        %v3222 = vmax.f32 %v2630, 0.0
        %v3223 = vmax.f32 %v2632, 0.0
        %v3224 = vmax.f32 %v2823, 0.0
        %v3225 = vmax.f32 %v2825, 0.0
        %v3226 = vmax.f32 %v3016, 0.0
        %v3227 = vmax.f32 %v3018, 0.0
        %v3228 = vmax.f32 %v2443, 0.0
        %v3229 = vmax.f32 %v2445, 0.0
        %v3230 = vmax.f32 %v2636, 0.0
        %v3231 = vmax.f32 %v2638, 0.0
        %v3232 = vmax.f32 %v2829, 0.0
        %v3233 = vmax.f32 %v2831, 0.0
        %v3234 = vmax.f32 %v3022, 0.0
        %v3235 = vmax.f32 %v3024, 0.0
        %v3236 = vmax.f32 %v2447, 0.0
        %v3237 = vmax.f32 %v2449, 0.0
        %v3238 = vmax.f32 %v2640, 0.0
        %v3239 = vmax.f32 %v2642, 0.0
        %v3240 = vmax.f32 %v2833, 0.0
        %v3241 = vmax.f32 %v2835, 0.0
        %v3242 = vmax.f32 %v3026, 0.0
        %v3243 = vmax.f32 %v3028, 0.0
        %v3244 = vmax.f32 %v2453, 0.0
        %v3245 = vmax.f32 %v2455, 0.0
        %v3246 = vmax.f32 %v2646, 0.0
        %v3247 = vmax.f32 %v2648, 0.0
        %v3248 = vmax.f32 %v2839, 0.0
        %v3249 = vmax.f32 %v2841, 0.0
        %v3250 = vmax.f32 %v3032, 0.0
        %v3251 = vmax.f32 %v3034, 0.0
        %v3252 = vmax.f32 %v2457, 0.0
        %v3253 = vmax.f32 %v2459, 0.0
        %v3254 = vmax.f32 %v2650, 0.0
        %v3255 = vmax.f32 %v2652, 0.0
        %v3256 = vmax.f32 %v2843, 0.0
        %v3257 = vmax.f32 %v2845, 0.0
        %v3258 = vmax.f32 %v3036, 0.0
        %v3259 = vmax.f32 %v3038, 0.0
        %v3260 = vmax.f32 %v2463, 0.0
        %v3261 = vmax.f32 %v2465, 0.0
        %v3262 = vmax.f32 %v2656, 0.0
        %v3263 = vmax.f32 %v2658, 0.0
        %v3264 = vmax.f32 %v2849, 0.0
        %v3265 = vmax.f32 %v2851, 0.0
        %v3266 = vmax.f32 %v3042, 0.0
        %v3267 = vmax.f32 %v3044, 0.0
        %v3268 = vmax.f32 %v2467, 0.0
        %v3269 = vmax.f32 %v2469, 0.0
        %v3270 = vmax.f32 %v2660, 0.0
        %v3271 = vmax.f32 %v2662, 0.0
        %v3272 = vmax.f32 %v2853, 0.0
        %v3273 = vmax.f32 %v2855, 0.0
        %v3274 = vmax.f32 %v3046, 0.0
        %v3275 = vmax.f32 %v3048, 0.0
        %v3276 = vmax.f32 %v2473, 0.0
        %v3277 = vmax.f32 %v2475, 0.0
        %v3278 = vmax.f32 %v2666, 0.0
        %v3279 = vmax.f32 %v2668, 0.0
        %v3280 = vmax.f32 %v2859, 0.0
        %v3281 = vmax.f32 %v2861, 0.0
        %v3282 = vmax.f32 %v3052, 0.0
        %v3283 = vmax.f32 %v3054, 0.0
        %v3284 = vmax.f32 %v2477, 0.0
        %v3285 = vmax.f32 %v2479, 0.0
        %v3286 = vmax.f32 %v2670, 0.0
        %v3287 = vmax.f32 %v2672, 0.0
        %v3288 = vmax.f32 %v2863, 0.0
        %v3289 = vmax.f32 %v2865, 0.0
        %v3290 = vmax.f32 %v3056, 0.0
        %v3291 = vmax.f32 %v3058, 0.0
        %v3292 = vmax.f32 %v2483, 0.0
        %v3293 = vmax.f32 %v2485, 0.0
        %v3294 = vmax.f32 %v2676, 0.0
        %v3295 = vmax.f32 %v2678, 0.0
        %v3296 = vmax.f32 %v2869, 0.0
        %v3297 = vmax.f32 %v2871, 0.0
        %v3298 = vmax.f32 %v3062, 0.0
        %v3299 = vmax.f32 %v3064, 0.0
        %v3300 = vmax.f32 %v2487, 0.0
        %v3301 = vmax.f32 %v2489, 0.0
        %v3302 = vmax.f32 %v2680, 0.0
        %v3303 = vmax.f32 %v2682, 0.0
        %v3304 = vmax.f32 %v2873, 0.0
        %v3305 = vmax.f32 %v2875, 0.0
        %v3306 = vmax.f32 %v3066, 0.0
        %v3307 = vmax.f32 %v3068, 0.0
        %v3308 = vmax.f32 %v2493, 0.0
        %v3309 = vmax.f32 %v2495, 0.0
        %v3310 = vmax.f32 %v2686, 0.0
        %v3311 = vmax.f32 %v2688, 0.0
        %v3312 = vmax.f32 %v2879, 0.0
        %v3313 = vmax.f32 %v2881, 0.0
        %v3314 = vmax.f32 %v3072, 0.0
        %v3315 = vmax.f32 %v3074, 0.0
        %v3316 = vmax.f32 %v2497, 0.0
        %v3317 = vmax.f32 %v2499, 0.0
        %v3318 = vmax.f32 %v2690, 0.0
        %v3319 = vmax.f32 %v2692, 0.0
        %v3320 = vmax.f32 %v2883, 0.0
        %v3321 = vmax.f32 %v2885, 0.0
        %v3322 = vmax.f32 %v3076, 0.0
        %v3323 = vmax.f32 %v3078, 0.0
        %v3324 = vmax.f32 %v2503, 0.0
        %v3325 = vmax.f32 %v2505, 0.0
        %v3326 = vmax.f32 %v2696, 0.0
        %v3327 = vmax.f32 %v2698, 0.0
        %v3328 = vmax.f32 %v2889, 0.0
        %v3329 = vmax.f32 %v2891, 0.0
        %v3330 = vmax.f32 %v3082, 0.0
        %v3331 = vmax.f32 %v3084, 0.0
        %v3332 = vmax.f32 %v2507, 0.0
        %v3333 = vmax.f32 %v2509, 0.0
        %v3334 = vmax.f32 %v2700, 0.0
        %v3335 = vmax.f32 %v2702, 0.0
        %v3336 = vmax.f32 %v2893, 0.0
        %v3337 = vmax.f32 %v2895, 0.0
        %v3338 = vmax.f32 %v3086, 0.0
        %v3339 = vmax.f32 %v3088, 0.0
        %v3340 = vmax.f32 %v2513, 0.0
        %v3341 = vmax.f32 %v2515, 0.0
        %v3342 = vmax.f32 %v2706, 0.0
        %v3343 = vmax.f32 %v2708, 0.0
        %v3344 = vmax.f32 %v2899, 0.0
        %v3345 = vmax.f32 %v2901, 0.0
        %v3346 = vmax.f32 %v3092, 0.0
        %v3347 = vmax.f32 %v3094, 0.0
        %v3348 = vmax.f32 %v2517, 0.0
        %v3349 = vmax.f32 %v2519, 0.0
        %v3350 = vmax.f32 %v2710, 0.0
        %v3351 = vmax.f32 %v2712, 0.0
        %v3352 = vmax.f32 %v2903, 0.0
        %v3353 = vmax.f32 %v2905, 0.0
        %v3354 = vmax.f32 %v3096, 0.0
        %v3355 = vmax.f32 %v3098, 0.0
        %v3356 = vld [vmem:[%s7] sm:$0xff]
        %v3357 = vld [vmem:[%s7 + $0x8] sm:$0xff]
        %v3358 = vld [vmem:[%s7 + $0x10] sm:$0xff]
        %v3359 = vld [vmem:[%s7 + $0x18] sm:$0xff]
        %v3360 = vld [vmem:[%s7 + $0x20] sm:$0xff]
        %v3361 = vld [vmem:[%s7 + $0x28] sm:$0xff]
        %v3362 = vld [vmem:[%s7 + $0x30] sm:$0xff]
        %v3363 = vld [vmem:[%s7 + $0x38] sm:$0xff]
        %v3364 = vld [vmem:[%s7 + $0x40] sm:$0xff]
        %v3365 = vld [vmem:[%s7 + $0x48] sm:$0xff]
        %v3366 = vld [vmem:[%s7 + $0x50] sm:$0xff]
        %v3367 = vld [vmem:[%s7 + $0x58] sm:$0xff]
        %v3368 = vld [vmem:[%s7 + $0x60] sm:$0xff]
        %v3369 = vld [vmem:[%s7 + $0x68] sm:$0xff]
        %v3370 = vld [vmem:[%s7 + $0x70] sm:$0xff]
        %v3371 = vld [vmem:[%s7 + $0x78] sm:$0xff]
        %v3372 = vpack.c.bf16 %v3108, %v3100
        %v3373 = vpack.c.bf16 %v3109, %v3101
        %v3374 = vpack.c.bf16 %v3110, %v3102
        %v3375 = vpack.c.bf16 %v3111, %v3103
        %v3376 = vpack.c.bf16 %v3112, %v3104
        %v3377 = vpack.c.bf16 %v3113, %v3105
        %v3378 = vpack.c.bf16 %v3114, %v3106
        %v3379 = vpack.c.bf16 %v3115, %v3107
        %v3380 = vpack.c.bf16 %v3124, %v3116
        %v3381 = vpack.c.bf16 %v3125, %v3117
        %v3382 = vpack.c.bf16 %v3126, %v3118
        %v3383 = vpack.c.bf16 %v3127, %v3119
        %v3384 = vpack.c.bf16 %v3128, %v3120
        %v3385 = vpack.c.bf16 %v3129, %v3121
        %v3386 = vpack.c.bf16 %v3130, %v3122
        %v3387 = vpack.c.bf16 %v3131, %v3123
        %v3388 = vpack.c.bf16 %v3140, %v3132
        %v3389 = vpack.c.bf16 %v3141, %v3133
        %v3390 = vpack.c.bf16 %v3142, %v3134
        %v3391 = vpack.c.bf16 %v3143, %v3135
        %v3392 = vpack.c.bf16 %v3144, %v3136
        %v3393 = vpack.c.bf16 %v3145, %v3137
        %v3394 = vpack.c.bf16 %v3146, %v3138
        %v3395 = vpack.c.bf16 %v3147, %v3139
        %v3396 = vpack.c.bf16 %v3156, %v3148
        %v3397 = vpack.c.bf16 %v3157, %v3149
        %v3398 = vpack.c.bf16 %v3158, %v3150
        %v3399 = vpack.c.bf16 %v3159, %v3151
        %v3400 = vpack.c.bf16 %v3160, %v3152
        %v3401 = vpack.c.bf16 %v3161, %v3153
        %v3402 = vpack.c.bf16 %v3162, %v3154
        %v3403 = vpack.c.bf16 %v3163, %v3155
        %v3404 = vpack.c.bf16 %v3172, %v3164
        %v3405 = vpack.c.bf16 %v3173, %v3165
        %v3406 = vpack.c.bf16 %v3174, %v3166
        %v3407 = vpack.c.bf16 %v3175, %v3167
        %v3408 = vpack.c.bf16 %v3176, %v3168
        %v3409 = vpack.c.bf16 %v3177, %v3169
        %v3410 = vpack.c.bf16 %v3178, %v3170
        %v3411 = vpack.c.bf16 %v3179, %v3171
        %v3412 = vpack.c.bf16 %v3188, %v3180
        %v3413 = vpack.c.bf16 %v3189, %v3181
        %v3414 = vpack.c.bf16 %v3190, %v3182
        %v3415 = vpack.c.bf16 %v3191, %v3183
        %v3416 = vpack.c.bf16 %v3192, %v3184
        %v3417 = vpack.c.bf16 %v3193, %v3185
        %v3418 = vpack.c.bf16 %v3194, %v3186
        %v3419 = vpack.c.bf16 %v3195, %v3187
        %v3420 = vpack.c.bf16 %v3204, %v3196
        %v3421 = vpack.c.bf16 %v3205, %v3197
        %v3422 = vpack.c.bf16 %v3206, %v3198
        %v3423 = vpack.c.bf16 %v3207, %v3199
        %v3424 = vpack.c.bf16 %v3208, %v3200
        %v3425 = vpack.c.bf16 %v3209, %v3201
        %v3426 = vpack.c.bf16 %v3210, %v3202
        %v3427 = vpack.c.bf16 %v3211, %v3203
        %v3428 = vpack.c.bf16 %v3220, %v3212
        %v3429 = vpack.c.bf16 %v3221, %v3213
        %v3430 = vpack.c.bf16 %v3222, %v3214
        %v3431 = vpack.c.bf16 %v3223, %v3215
        %v3432 = vpack.c.bf16 %v3224, %v3216
        %v3433 = vpack.c.bf16 %v3225, %v3217
        %v3434 = vpack.c.bf16 %v3226, %v3218
        %v3435 = vpack.c.bf16 %v3227, %v3219
        %v3436 = vpack.c.bf16 %v3236, %v3228
        %v3437 = vpack.c.bf16 %v3237, %v3229
        %v3438 = vpack.c.bf16 %v3238, %v3230
        %v3439 = vpack.c.bf16 %v3239, %v3231
        %v3440 = vpack.c.bf16 %v3240, %v3232
        %v3441 = vpack.c.bf16 %v3241, %v3233
        %v3442 = vpack.c.bf16 %v3242, %v3234
        %v3443 = vpack.c.bf16 %v3243, %v3235
        %v3444 = vpack.c.bf16 %v3252, %v3244
        %v3445 = vpack.c.bf16 %v3253, %v3245
        %v3446 = vpack.c.bf16 %v3254, %v3246
        %v3447 = vpack.c.bf16 %v3255, %v3247
        %v3448 = vpack.c.bf16 %v3256, %v3248
        %v3449 = vpack.c.bf16 %v3257, %v3249
        %v3450 = vpack.c.bf16 %v3258, %v3250
        %v3451 = vpack.c.bf16 %v3259, %v3251
        %v3452 = vpack.c.bf16 %v3268, %v3260
        %v3453 = vpack.c.bf16 %v3269, %v3261
        %v3454 = vpack.c.bf16 %v3270, %v3262
        %v3455 = vpack.c.bf16 %v3271, %v3263
        %v3456 = vpack.c.bf16 %v3272, %v3264
        %v3457 = vpack.c.bf16 %v3273, %v3265
        %v3458 = vpack.c.bf16 %v3274, %v3266
        %v3459 = vpack.c.bf16 %v3275, %v3267
        %v3460 = vpack.c.bf16 %v3284, %v3276
        %v3461 = vpack.c.bf16 %v3285, %v3277
        %v3462 = vpack.c.bf16 %v3286, %v3278
        %v3463 = vpack.c.bf16 %v3287, %v3279
        %v3464 = vpack.c.bf16 %v3288, %v3280
        %v3465 = vpack.c.bf16 %v3289, %v3281
        %v3466 = vpack.c.bf16 %v3290, %v3282
        %v3467 = vpack.c.bf16 %v3291, %v3283
        %v3468 = vpack.c.bf16 %v3300, %v3292
        %v3469 = vpack.c.bf16 %v3301, %v3293
        %v3470 = vpack.c.bf16 %v3302, %v3294
        %v3471 = vpack.c.bf16 %v3303, %v3295
        %v3472 = vpack.c.bf16 %v3304, %v3296
        %v3473 = vpack.c.bf16 %v3305, %v3297
        %v3474 = vpack.c.bf16 %v3306, %v3298
        %v3475 = vpack.c.bf16 %v3307, %v3299
        %v3476 = vpack.c.bf16 %v3316, %v3308
        %v3477 = vpack.c.bf16 %v3317, %v3309
        %v3478 = vpack.c.bf16 %v3318, %v3310
        %v3479 = vpack.c.bf16 %v3319, %v3311
        %v3480 = vpack.c.bf16 %v3320, %v3312
        %v3481 = vpack.c.bf16 %v3321, %v3313
        %v3482 = vpack.c.bf16 %v3322, %v3314
        %v3483 = vpack.c.bf16 %v3323, %v3315
        %v3484 = vpack.c.bf16 %v3332, %v3324
        %v3485 = vpack.c.bf16 %v3333, %v3325
        %v3486 = vpack.c.bf16 %v3334, %v3326
        %v3487 = vpack.c.bf16 %v3335, %v3327
        %v3488 = vpack.c.bf16 %v3336, %v3328
        %v3489 = vpack.c.bf16 %v3337, %v3329
        %v3490 = vpack.c.bf16 %v3338, %v3330
        %v3491 = vpack.c.bf16 %v3339, %v3331
        %v3492 = vpack.c.bf16 %v3348, %v3340
        %v3493 = vpack.c.bf16 %v3349, %v3341
        %v3494 = vpack.c.bf16 %v3350, %v3342
        %v3495 = vpack.c.bf16 %v3351, %v3343
        %v3496 = vpack.c.bf16 %v3352, %v3344
        %v3497 = vpack.c.bf16 %v3353, %v3345
        %v3498 = vpack.c.bf16 %v3354, %v3346
        %v3499 = vpack.c.bf16 %v3355, %v3347
        %v3500 = vld [vmem:[%s8] sm:$0xff]
        %v3501 = vld [vmem:[%s8 + $0x8] sm:$0xff]
        %v3502 = vld [vmem:[%s8 + $0x10] sm:$0xff]
        %v3503 = vld [vmem:[%s8 + $0x18] sm:$0xff]
        %v3504 = vld [vmem:[%s8 + $0x20] sm:$0xff]
        %v3505 = vld [vmem:[%s8 + $0x28] sm:$0xff]
        %v3506 = vld [vmem:[%s8 + $0x30] sm:$0xff]
        %v3507 = vld [vmem:[%s8 + $0x38] sm:$0xff]
        %v3508 = vld [vmem:[%s8 + $0x40] sm:$0xff]
        %v3509 = vld [vmem:[%s8 + $0x48] sm:$0xff]
        %v3510 = vld [vmem:[%s8 + $0x50] sm:$0xff]
        %v3511 = vld [vmem:[%s8 + $0x58] sm:$0xff]
        %v3512 = vld [vmem:[%s8 + $0x60] sm:$0xff]
        %v3513 = vld [vmem:[%s8 + $0x68] sm:$0xff]
        %v3514 = vld [vmem:[%s8 + $0x70] sm:$0xff]
        %v3515 = vld [vmem:[%s8 + $0x78] sm:$0xff]
        %3517 = vset.pattern.permute.xlu0 0
        %3518 = vperm.xlu0 %3517, %v3500
        %v3519 = vpop.permute.xlu0 %3518
        %3522 = vset.pattern.permute.xlu0 0
        %3523 = vperm.xlu0 %3522, %v3501
        %v3524 = vpop.permute.xlu0 %3523
        %3527 = vset.pattern.permute.xlu0 0
        %3528 = vperm.xlu0 %3527, %v3502
        %v3529 = vpop.permute.xlu0 %3528
        %3532 = vset.pattern.permute.xlu0 0
        %3533 = vperm.xlu0 %3532, %v3503
        %v3534 = vpop.permute.xlu0 %3533
        %3537 = vset.pattern.permute.xlu0 0
        %3538 = vperm.xlu0 %3537, %v3504
        %v3539 = vpop.permute.xlu0 %3538
        %3542 = vset.pattern.permute.xlu0 0
        %3543 = vperm.xlu0 %3542, %v3505
        %v3544 = vpop.permute.xlu0 %3543
        %3547 = vset.pattern.permute.xlu0 0
        %3548 = vperm.xlu0 %3547, %v3506
        %v3549 = vpop.permute.xlu0 %3548
        %3552 = vset.pattern.permute.xlu0 0
        %3553 = vperm.xlu0 %3552, %v3507
        %v3554 = vpop.permute.xlu0 %3553
        %3557 = vset.pattern.permute.xlu0 0
        %3558 = vperm.xlu0 %3557, %v3508
        %v3559 = vpop.permute.xlu0 %3558
        %3562 = vset.pattern.permute.xlu0 0
        %3563 = vperm.xlu0 %3562, %v3509
        %v3564 = vpop.permute.xlu0 %3563
        %3567 = vset.pattern.permute.xlu0 0
        %3568 = vperm.xlu0 %3567, %v3510
        %v3569 = vpop.permute.xlu0 %3568
        %3572 = vset.pattern.permute.xlu0 0
        %3573 = vperm.xlu0 %3572, %v3511
        %v3574 = vpop.permute.xlu0 %3573
        %3577 = vset.pattern.permute.xlu0 0
        %3578 = vperm.xlu0 %3577, %v3512
        %v3579 = vpop.permute.xlu0 %3578
        %3582 = vset.pattern.permute.xlu0 0
        %3583 = vperm.xlu0 %3582, %v3513
        %v3584 = vpop.permute.xlu0 %3583
        %3587 = vset.pattern.permute.xlu0 0
        %3588 = vperm.xlu0 %3587, %v3514
        %v3589 = vpop.permute.xlu0 %3588
        %3592 = vset.pattern.permute.xlu0 0
        %3593 = vperm.xlu0 %3592, %v3515
        %v3594 = vpop.permute.xlu0 %3593
        %v3612 = vunpack.c.l.b16 %v3356
        %v3613 = vunpack.c.h.b16 %v3356
        %v3614 = vunpack.c.l.b16 %v3357
        %v3615 = vunpack.c.h.b16 %v3357
        %v3616 = vunpack.c.l.b16 %v3358
        %v3617 = vunpack.c.h.b16 %v3358
        %v3618 = vunpack.c.l.b16 %v3359
        %v3619 = vunpack.c.h.b16 %v3359
        %v3620 = vunpack.c.l.b16 %v3360
        %v3621 = vunpack.c.h.b16 %v3360
        %v3622 = vunpack.c.l.b16 %v3361
        %v3623 = vunpack.c.h.b16 %v3361
        %v3624 = vunpack.c.l.b16 %v3362
        %v3625 = vunpack.c.h.b16 %v3362
        %v3626 = vunpack.c.l.b16 %v3363
        %v3627 = vunpack.c.h.b16 %v3363
        %v3628 = vunpack.c.l.b16 %v3364
        %v3629 = vunpack.c.h.b16 %v3364
        %v3630 = vunpack.c.l.b16 %v3365
        %v3631 = vunpack.c.h.b16 %v3365
        %v3632 = vunpack.c.l.b16 %v3366
        %v3633 = vunpack.c.h.b16 %v3366
        %v3634 = vunpack.c.l.b16 %v3367
        %v3635 = vunpack.c.h.b16 %v3367
        %v3636 = vunpack.c.l.b16 %v3368
        %v3637 = vunpack.c.h.b16 %v3368
        %v3638 = vunpack.c.l.b16 %v3369
        %v3639 = vunpack.c.h.b16 %v3369
        %v3640 = vunpack.c.l.b16 %v3370
        %v3641 = vunpack.c.h.b16 %v3370
        %v3642 = vunpack.c.l.b16 %v3371
        %v3643 = vunpack.c.h.b16 %v3371
        %v3644 = vpack.c.b16 %v3614, %v3612
        %v3645 = vpack.c.b16 %v3615, %v3613
        %v3646 = vpack.c.b16 %v3618, %v3616
        %v3647 = vpack.c.b16 %v3619, %v3617
        %v3648 = vpack.c.b16 %v3622, %v3620
        %v3649 = vpack.c.b16 %v3623, %v3621
        %v3650 = vpack.c.b16 %v3626, %v3624
        %v3651 = vpack.c.b16 %v3627, %v3625
        %v3652 = vpack.c.b16 %v3630, %v3628
        %v3653 = vpack.c.b16 %v3631, %v3629
        %v3654 = vpack.c.b16 %v3634, %v3632
        %v3655 = vpack.c.b16 %v3635, %v3633
        %v3656 = vpack.c.b16 %v3638, %v3636
        %v3657 = vpack.c.b16 %v3639, %v3637
        %v3658 = vpack.c.b16 %v3642, %v3640
        %v3659 = vpack.c.b16 %v3643, %v3641
        %3676 = vmatprep.subr.bf16.mxu0 %v3373
        %3677 = vmatpush1.bf16.msra.mxu0 %v3372
        %3678 = vmatprep.subr.bf16.mxu0 %v3381
        %3679 = vmatpush1.bf16.msra.mxu0 %v3380
        %3680 = vmatprep.subr.bf16.mxu0 %v3389
        %3681 = vmatpush1.bf16.msra.mxu0 %v3388
        %3682 = vmatprep.subr.bf16.mxu0 %v3397
        %3683 = vmatpush1.bf16.msra.mxu0 %v3396
        %3684 = vmatprep.subr.bf16.mxu0 %v3405
        %3685 = vmatpush1.bf16.msra.mxu0 %v3404
        %3686 = vmatprep.subr.bf16.mxu0 %v3413
        %3687 = vmatpush1.bf16.msra.mxu0 %v3412
        %3688 = vmatprep.subr.bf16.mxu0 %v3421
        %3689 = vmatpush1.bf16.msra.mxu0 %v3420
        %3690 = vmatprep.subr.bf16.mxu0 %v3429
        %3691 = vmatpush1.bf16.msra.mxu0 %v3428
        %3692 = vmatprep.subr.bf16.mxu0 %v3437
        %3693 = vmatpush1.bf16.msra.mxu0 %v3436
        %3694 = vmatprep.subr.bf16.mxu0 %v3445
        %3695 = vmatpush1.bf16.msra.mxu0 %v3444
        %3696 = vmatprep.subr.bf16.mxu0 %v3453
        %3697 = vmatpush1.bf16.msra.mxu0 %v3452
        %3698 = vmatprep.subr.bf16.mxu0 %v3461
        %3699 = vmatpush1.bf16.msra.mxu0 %v3460
        %3700 = vmatprep.subr.bf16.mxu0 %v3469
        %3701 = vmatpush1.bf16.msra.mxu0 %v3468
        %3702 = vmatprep.subr.bf16.mxu0 %v3477
        %3703 = vmatpush1.bf16.msra.mxu0 %v3476
        %3704 = vmatprep.subr.bf16.mxu0 %v3485
        %3705 = vmatpush1.bf16.msra.mxu0 %v3484
        %3706 = vmatprep.subr.bf16.mxu0 %v3493
        %3707 = vmatpush1.bf16.msra.mxu0 %v3492
        %3708 = vmatprep.mubr.bf16.mxu0 %v3645
        %3709 = vmatmul.mubr.bf16.gmra.mrb[0].mxu0 %v3644
        %v3710 = vpop.f32.mrb[0].mxu0
        %v3711 = vadd.f32 %v3519, %v3710
        %v3712 = vpop.f32.mrb[0].mxu0
        %v3713 = vadd.f32 %v3519, %v3712
        %v3714 = vpop.f32.mrb[0].mxu0
        %v3715 = vadd.f32 %v3524, %v3714
        %v3716 = vpop.f32.mrb[0].mxu0
        %v3717 = vadd.f32 %v3524, %v3716
        %3718 = vmatprep.mubr.bf16.mxu0 %v3647
        %3719 = vmatmul.mubr.bf16.gmra.mrb[0].mxu0 %v3646
        %v3720 = vpop.f32.mrb[0].mxu0
        %v3721 = vadd.f32 %v3529, %v3720
        %v3722 = vpop.f32.mrb[0].mxu0
        %v3723 = vadd.f32 %v3529, %v3722
        %v3724 = vpop.f32.mrb[0].mxu0
        %v3725 = vadd.f32 %v3534, %v3724
        %v3726 = vpop.f32.mrb[0].mxu0
        %v3727 = vadd.f32 %v3534, %v3726
        %3728 = vmatprep.mubr.bf16.mxu0 %v3649
        %3729 = vmatmul.mubr.bf16.gmra.mrb[0].mxu0 %v3648
        %v3730 = vpop.f32.mrb[0].mxu0
        %v3731 = vadd.f32 %v3539, %v3730
        %v3732 = vpop.f32.mrb[0].mxu0
        %v3733 = vadd.f32 %v3539, %v3732
        %v3734 = vpop.f32.mrb[0].mxu0
        %v3735 = vadd.f32 %v3544, %v3734
        %v3736 = vpop.f32.mrb[0].mxu0
        %v3737 = vadd.f32 %v3544, %v3736
        %3738 = vmatprep.mubr.bf16.mxu0 %v3651
        %3739 = vmatmul.mubr.bf16.gmra.mrb[0].mxu0 %v3650
        %v3740 = vpop.f32.mrb[0].mxu0
        %v3741 = vadd.f32 %v3549, %v3740
        %v3742 = vpop.f32.mrb[0].mxu0
        %v3743 = vadd.f32 %v3549, %v3742
        %v3744 = vpop.f32.mrb[0].mxu0
        %v3745 = vadd.f32 %v3554, %v3744
        %v3746 = vpop.f32.mrb[0].mxu0
        %v3747 = vadd.f32 %v3554, %v3746
        %3748 = vmatprep.mubr.bf16.mxu0 %v3653
        %3749 = vmatmul.mubr.bf16.gmra.mrb[0].mxu0 %v3652
        %v3750 = vpop.f32.mrb[0].mxu0
        %v3751 = vadd.f32 %v3559, %v3750
        %v3752 = vpop.f32.mrb[0].mxu0
        %v3753 = vadd.f32 %v3559, %v3752
        %v3754 = vpop.f32.mrb[0].mxu0
        %v3755 = vadd.f32 %v3564, %v3754
        %v3756 = vpop.f32.mrb[0].mxu0
        %v3757 = vadd.f32 %v3564, %v3756
        %3758 = vmatprep.mubr.bf16.mxu0 %v3655
        %3759 = vmatmul.mubr.bf16.gmra.mrb[0].mxu0 %v3654
        %v3760 = vpop.f32.mrb[0].mxu0
        %v3761 = vadd.f32 %v3569, %v3760
        %v3762 = vpop.f32.mrb[0].mxu0
        %v3763 = vadd.f32 %v3569, %v3762
        %v3764 = vpop.f32.mrb[0].mxu0
        %v3765 = vadd.f32 %v3574, %v3764
        %v3766 = vpop.f32.mrb[0].mxu0
        %v3767 = vadd.f32 %v3574, %v3766
        %3768 = vmatprep.mubr.bf16.mxu0 %v3657
        %3769 = vmatmul.mubr.bf16.gmra.mrb[0].mxu0 %v3656
        %v3770 = vpop.f32.mrb[0].mxu0
        %v3771 = vadd.f32 %v3579, %v3770
        %v3772 = vpop.f32.mrb[0].mxu0
        %v3773 = vadd.f32 %v3579, %v3772
        %v3774 = vpop.f32.mrb[0].mxu0
        %v3775 = vadd.f32 %v3584, %v3774
        %v3776 = vpop.f32.mrb[0].mxu0
        %v3777 = vadd.f32 %v3584, %v3776
        %3778 = vmatprep.mubr.bf16.mxu0 %v3659
        %3779 = vmatmul.mubr.bf16.gmra.mrb[0].mxu0 %v3658
        %v3780 = vpop.f32.mrb[0].mxu0
        %v3781 = vadd.f32 %v3589, %v3780
        %v3782 = vpop.f32.mrb[0].mxu0
        %v3783 = vadd.f32 %v3589, %v3782
        %v3784 = vpop.f32.mrb[0].mxu0
        %v3785 = vadd.f32 %v3594, %v3784
        %v3786 = vpop.f32.mrb[0].mxu0
        %v3787 = vadd.f32 %v3594, %v3786
        %3788 = vdwg.mxu0
        %3789 = vmatprep.subr.bf16.mxu0 %v3375
        %3790 = vmatpush1.bf16.msra.mxu0 %v3374
        %3791 = vmatprep.subr.bf16.mxu0 %v3383
        %3792 = vmatpush1.bf16.msra.mxu0 %v3382
        %3793 = vmatprep.subr.bf16.mxu0 %v3391
        %3794 = vmatpush1.bf16.msra.mxu0 %v3390
        %3795 = vmatprep.subr.bf16.mxu0 %v3399
        %3796 = vmatpush1.bf16.msra.mxu0 %v3398
        %3797 = vmatprep.subr.bf16.mxu0 %v3407
        %3798 = vmatpush1.bf16.msra.mxu0 %v3406
        %3799 = vmatprep.subr.bf16.mxu0 %v3415
        %3800 = vmatpush1.bf16.msra.mxu0 %v3414
        %3801 = vmatprep.subr.bf16.mxu0 %v3423
        %3802 = vmatpush1.bf16.msra.mxu0 %v3422
        %3803 = vmatprep.subr.bf16.mxu0 %v3431
        %3804 = vmatpush1.bf16.msra.mxu0 %v3430
        %3805 = vmatprep.subr.bf16.mxu0 %v3439
        %3806 = vmatpush1.bf16.msra.mxu0 %v3438
        %3807 = vmatprep.subr.bf16.mxu0 %v3447
        %3808 = vmatpush1.bf16.msra.mxu0 %v3446
        %3809 = vmatprep.subr.bf16.mxu0 %v3455
        %3810 = vmatpush1.bf16.msra.mxu0 %v3454
        %3811 = vmatprep.subr.bf16.mxu0 %v3463
        %3812 = vmatpush1.bf16.msra.mxu0 %v3462
        %3813 = vmatprep.subr.bf16.mxu0 %v3471
        %3814 = vmatpush1.bf16.msra.mxu0 %v3470
        %3815 = vmatprep.subr.bf16.mxu0 %v3479
        %3816 = vmatpush1.bf16.msra.mxu0 %v3478
        %3817 = vmatprep.subr.bf16.mxu0 %v3487
        %3818 = vmatpush1.bf16.msra.mxu0 %v3486
        %3819 = vmatprep.subr.bf16.mxu0 %v3495
        %3820 = vmatpush1.bf16.msra.mxu0 %v3494
        %3821 = vmatprep.mubr.bf16.mxu0 %v3645
        %3822 = vmatmul.mubr.bf16.gmra.mrb[0].mxu0 %v3644
        %v3823 = vpop.f32.mrb[0].mxu0
        %v3824 = vadd.f32 %v3519, %v3823
        %v3825 = vpop.f32.mrb[0].mxu0
        %v3826 = vadd.f32 %v3519, %v3825
        %v3827 = vpop.f32.mrb[0].mxu0
        %v3828 = vadd.f32 %v3524, %v3827
        %v3829 = vpop.f32.mrb[0].mxu0
        %v3830 = vadd.f32 %v3524, %v3829
        %3831 = vmatprep.mubr.bf16.mxu0 %v3647
        %3832 = vmatmul.mubr.bf16.gmra.mrb[0].mxu0 %v3646
        %v3833 = vpop.f32.mrb[0].mxu0
        %v3834 = vadd.f32 %v3529, %v3833
        %v3835 = vpop.f32.mrb[0].mxu0
        %v3836 = vadd.f32 %v3529, %v3835
        %v3837 = vpop.f32.mrb[0].mxu0
        %v3838 = vadd.f32 %v3534, %v3837
        %v3839 = vpop.f32.mrb[0].mxu0
        %v3840 = vadd.f32 %v3534, %v3839
        %3841 = vmatprep.mubr.bf16.mxu0 %v3649
        %3842 = vmatmul.mubr.bf16.gmra.mrb[0].mxu0 %v3648
        %v3843 = vpop.f32.mrb[0].mxu0
        %v3844 = vadd.f32 %v3539, %v3843
        %v3845 = vpop.f32.mrb[0].mxu0
        %v3846 = vadd.f32 %v3539, %v3845
        %v3847 = vpop.f32.mrb[0].mxu0
        %v3848 = vadd.f32 %v3544, %v3847
        %v3849 = vpop.f32.mrb[0].mxu0
        %v3850 = vadd.f32 %v3544, %v3849
        %3851 = vmatprep.mubr.bf16.mxu0 %v3651
        %3852 = vmatmul.mubr.bf16.gmra.mrb[0].mxu0 %v3650
        %v3853 = vpop.f32.mrb[0].mxu0
        %v3854 = vadd.f32 %v3549, %v3853
        %v3855 = vpop.f32.mrb[0].mxu0
        %v3856 = vadd.f32 %v3549, %v3855
        %v3857 = vpop.f32.mrb[0].mxu0
        %v3858 = vadd.f32 %v3554, %v3857
        %v3859 = vpop.f32.mrb[0].mxu0
        %v3860 = vadd.f32 %v3554, %v3859
        %3861 = vmatprep.mubr.bf16.mxu0 %v3653
        %3862 = vmatmul.mubr.bf16.gmra.mrb[0].mxu0 %v3652
        %v3863 = vpop.f32.mrb[0].mxu0
        %v3864 = vadd.f32 %v3559, %v3863
        %v3865 = vpop.f32.mrb[0].mxu0
        %v3866 = vadd.f32 %v3559, %v3865
        %v3867 = vpop.f32.mrb[0].mxu0
        %v3868 = vadd.f32 %v3564, %v3867
        %v3869 = vpop.f32.mrb[0].mxu0
        %v3870 = vadd.f32 %v3564, %v3869
        %3871 = vmatprep.mubr.bf16.mxu0 %v3655
        %3872 = vmatmul.mubr.bf16.gmra.mrb[0].mxu0 %v3654
        %v3873 = vpop.f32.mrb[0].mxu0
        %v3874 = vadd.f32 %v3569, %v3873
        %v3875 = vpop.f32.mrb[0].mxu0
        %v3876 = vadd.f32 %v3569, %v3875
        %v3877 = vpop.f32.mrb[0].mxu0
        %v3878 = vadd.f32 %v3574, %v3877
        %v3879 = vpop.f32.mrb[0].mxu0
        %v3880 = vadd.f32 %v3574, %v3879
        %3881 = vmatprep.mubr.bf16.mxu0 %v3657
        %3882 = vmatmul.mubr.bf16.gmra.mrb[0].mxu0 %v3656
        %v3883 = vpop.f32.mrb[0].mxu0
        %v3884 = vadd.f32 %v3579, %v3883
        %v3885 = vpop.f32.mrb[0].mxu0
        %v3886 = vadd.f32 %v3579, %v3885
        %v3887 = vpop.f32.mrb[0].mxu0
        %v3888 = vadd.f32 %v3584, %v3887
        %v3889 = vpop.f32.mrb[0].mxu0
        %v3890 = vadd.f32 %v3584, %v3889
        %3891 = vmatprep.mubr.bf16.mxu0 %v3659
        %3892 = vmatmul.mubr.bf16.gmra.mrb[0].mxu0 %v3658
        %v3893 = vpop.f32.mrb[0].mxu0
        %v3894 = vadd.f32 %v3589, %v3893
        %v3895 = vpop.f32.mrb[0].mxu0
        %v3896 = vadd.f32 %v3589, %v3895
        %v3897 = vpop.f32.mrb[0].mxu0
        %v3898 = vadd.f32 %v3594, %v3897
        %v3899 = vpop.f32.mrb[0].mxu0
        %v3900 = vadd.f32 %v3594, %v3899
        %3901 = vdwg.mxu0
        %3902 = vmatprep.subr.bf16.mxu0 %v3377
        %3903 = vmatpush1.bf16.msra.mxu0 %v3376
        %3904 = vmatprep.subr.bf16.mxu0 %v3385
        %3905 = vmatpush1.bf16.msra.mxu0 %v3384
        %3906 = vmatprep.subr.bf16.mxu0 %v3393
        %3907 = vmatpush1.bf16.msra.mxu0 %v3392
        %3908 = vmatprep.subr.bf16.mxu0 %v3401
        %3909 = vmatpush1.bf16.msra.mxu0 %v3400
        %3910 = vmatprep.subr.bf16.mxu0 %v3409
        %3911 = vmatpush1.bf16.msra.mxu0 %v3408
        %3912 = vmatprep.subr.bf16.mxu0 %v3417
        %3913 = vmatpush1.bf16.msra.mxu0 %v3416
        %3914 = vmatprep.subr.bf16.mxu0 %v3425
        %3915 = vmatpush1.bf16.msra.mxu0 %v3424
        %3916 = vmatprep.subr.bf16.mxu0 %v3433
        %3917 = vmatpush1.bf16.msra.mxu0 %v3432
        %3918 = vmatprep.subr.bf16.mxu0 %v3441
        %3919 = vmatpush1.bf16.msra.mxu0 %v3440
        %3920 = vmatprep.subr.bf16.mxu0 %v3449
        %3921 = vmatpush1.bf16.msra.mxu0 %v3448
        %3922 = vmatprep.subr.bf16.mxu0 %v3457
        %3923 = vmatpush1.bf16.msra.mxu0 %v3456
        %3924 = vmatprep.subr.bf16.mxu0 %v3465
        %3925 = vmatpush1.bf16.msra.mxu0 %v3464
        %3926 = vmatprep.subr.bf16.mxu0 %v3473
        %3927 = vmatpush1.bf16.msra.mxu0 %v3472
        %3928 = vmatprep.subr.bf16.mxu0 %v3481
        %3929 = vmatpush1.bf16.msra.mxu0 %v3480
        %3930 = vmatprep.subr.bf16.mxu0 %v3489
        %3931 = vmatpush1.bf16.msra.mxu0 %v3488
        %3932 = vmatprep.subr.bf16.mxu0 %v3497
        %3933 = vmatpush1.bf16.msra.mxu0 %v3496
        %3934 = vmatprep.mubr.bf16.mxu0 %v3645
        %3935 = vmatmul.mubr.bf16.gmra.mrb[0].mxu0 %v3644
        %v3936 = vpop.f32.mrb[0].mxu0
        %v3937 = vadd.f32 %v3519, %v3936
        %v3938 = vpop.f32.mrb[0].mxu0
        %v3939 = vadd.f32 %v3519, %v3938
        %v3940 = vpop.f32.mrb[0].mxu0
        %v3941 = vadd.f32 %v3524, %v3940
        %v3942 = vpop.f32.mrb[0].mxu0
        %v3943 = vadd.f32 %v3524, %v3942
        %3944 = vmatprep.mubr.bf16.mxu0 %v3647
        %3945 = vmatmul.mubr.bf16.gmra.mrb[0].mxu0 %v3646
        %v3946 = vpop.f32.mrb[0].mxu0
        %v3947 = vadd.f32 %v3529, %v3946
        %v3948 = vpop.f32.mrb[0].mxu0
        %v3949 = vadd.f32 %v3529, %v3948
        %v3950 = vpop.f32.mrb[0].mxu0
        %v3951 = vadd.f32 %v3534, %v3950
        %v3952 = vpop.f32.mrb[0].mxu0
        %v3953 = vadd.f32 %v3534, %v3952
        %3954 = vmatprep.mubr.bf16.mxu0 %v3649
        %3955 = vmatmul.mubr.bf16.gmra.mrb[0].mxu0 %v3648
        %v3956 = vpop.f32.mrb[0].mxu0
        %v3957 = vadd.f32 %v3539, %v3956
        %v3958 = vpop.f32.mrb[0].mxu0
        %v3959 = vadd.f32 %v3539, %v3958
        %v3960 = vpop.f32.mrb[0].mxu0
        %v3961 = vadd.f32 %v3544, %v3960
        %v3962 = vpop.f32.mrb[0].mxu0
        %v3963 = vadd.f32 %v3544, %v3962
        %3964 = vmatprep.mubr.bf16.mxu0 %v3651
        %3965 = vmatmul.mubr.bf16.gmra.mrb[0].mxu0 %v3650
        %v3966 = vpop.f32.mrb[0].mxu0
        %v3967 = vadd.f32 %v3549, %v3966
        %v3968 = vpop.f32.mrb[0].mxu0
        %v3969 = vadd.f32 %v3549, %v3968
        %v3970 = vpop.f32.mrb[0].mxu0
        %v3971 = vadd.f32 %v3554, %v3970
        %v3972 = vpop.f32.mrb[0].mxu0
        %v3973 = vadd.f32 %v3554, %v3972
        %3974 = vmatprep.mubr.bf16.mxu0 %v3653
        %3975 = vmatmul.mubr.bf16.gmra.mrb[0].mxu0 %v3652
        %v3976 = vpop.f32.mrb[0].mxu0
        %v3977 = vadd.f32 %v3559, %v3976
        %v3978 = vpop.f32.mrb[0].mxu0
        %v3979 = vadd.f32 %v3559, %v3978
        %v3980 = vpop.f32.mrb[0].mxu0
        %v3981 = vadd.f32 %v3564, %v3980
        %v3982 = vpop.f32.mrb[0].mxu0
        %v3983 = vadd.f32 %v3564, %v3982
        %3984 = vmatprep.mubr.bf16.mxu0 %v3655
        %3985 = vmatmul.mubr.bf16.gmra.mrb[0].mxu0 %v3654
        %v3986 = vpop.f32.mrb[0].mxu0
        %v3987 = vadd.f32 %v3569, %v3986
        %v3988 = vpop.f32.mrb[0].mxu0
        %v3989 = vadd.f32 %v3569, %v3988
        %v3990 = vpop.f32.mrb[0].mxu0
        %v3991 = vadd.f32 %v3574, %v3990
        %v3992 = vpop.f32.mrb[0].mxu0
        %v3993 = vadd.f32 %v3574, %v3992
        %3994 = vmatprep.mubr.bf16.mxu0 %v3657
        %3995 = vmatmul.mubr.bf16.gmra.mrb[0].mxu0 %v3656
        %v3996 = vpop.f32.mrb[0].mxu0
        %v3997 = vadd.f32 %v3579, %v3996
        %v3998 = vpop.f32.mrb[0].mxu0
        %v3999 = vadd.f32 %v3579, %v3998
        %v4000 = vpop.f32.mrb[0].mxu0
        %v4001 = vadd.f32 %v3584, %v4000
        %v4002 = vpop.f32.mrb[0].mxu0
        %v4003 = vadd.f32 %v3584, %v4002
        %4004 = vmatprep.mubr.bf16.mxu0 %v3659
        %4005 = vmatmul.mubr.bf16.gmra.mrb[0].mxu0 %v3658
        %v4006 = vpop.f32.mrb[0].mxu0
        %v4007 = vadd.f32 %v3589, %v4006
        %v4008 = vpop.f32.mrb[0].mxu0
        %v4009 = vadd.f32 %v3589, %v4008
        %v4010 = vpop.f32.mrb[0].mxu0
        %v4011 = vadd.f32 %v3594, %v4010
        %v4012 = vpop.f32.mrb[0].mxu0
        %v4013 = vadd.f32 %v3594, %v4012
        %4014 = vdwg.mxu0
        %4015 = vmatprep.subr.bf16.mxu0 %v3379
        %4016 = vmatpush1.bf16.msra.mxu0 %v3378
        %4017 = vmatprep.subr.bf16.mxu0 %v3387
        %4018 = vmatpush1.bf16.msra.mxu0 %v3386
        %4019 = vmatprep.subr.bf16.mxu0 %v3395
        %4020 = vmatpush1.bf16.msra.mxu0 %v3394
        %4021 = vmatprep.subr.bf16.mxu0 %v3403
        %4022 = vmatpush1.bf16.msra.mxu0 %v3402
        %4023 = vmatprep.subr.bf16.mxu0 %v3411
        %4024 = vmatpush1.bf16.msra.mxu0 %v3410
        %4025 = vmatprep.subr.bf16.mxu0 %v3419
        %4026 = vmatpush1.bf16.msra.mxu0 %v3418
        %4027 = vmatprep.subr.bf16.mxu0 %v3427
        %4028 = vmatpush1.bf16.msra.mxu0 %v3426
        %4029 = vmatprep.subr.bf16.mxu0 %v3435
        %4030 = vmatpush1.bf16.msra.mxu0 %v3434
        %4031 = vmatprep.subr.bf16.mxu0 %v3443
        %4032 = vmatpush1.bf16.msra.mxu0 %v3442
        %4033 = vmatprep.subr.bf16.mxu0 %v3451
        %4034 = vmatpush1.bf16.msra.mxu0 %v3450
        %4035 = vmatprep.subr.bf16.mxu0 %v3459
        %4036 = vmatpush1.bf16.msra.mxu0 %v3458
        %4037 = vmatprep.subr.bf16.mxu0 %v3467
        %4038 = vmatpush1.bf16.msra.mxu0 %v3466
        %4039 = vmatprep.subr.bf16.mxu0 %v3475
        %4040 = vmatpush1.bf16.msra.mxu0 %v3474
        %4041 = vmatprep.subr.bf16.mxu0 %v3483
        %4042 = vmatpush1.bf16.msra.mxu0 %v3482
        %4043 = vmatprep.subr.bf16.mxu0 %v3491
        %4044 = vmatpush1.bf16.msra.mxu0 %v3490
        %4045 = vmatprep.subr.bf16.mxu0 %v3499
        %4046 = vmatpush1.bf16.msra.mxu0 %v3498
        %4047 = vmatprep.mubr.bf16.mxu0 %v3645
        %4048 = vmatmul.mubr.bf16.gmra.mrb[0].mxu0 %v3644
        %v4049 = vpop.f32.mrb[0].mxu0
        %v4050 = vadd.f32 %v3519, %v4049
        %v4051 = vpop.f32.mrb[0].mxu0
        %v4052 = vadd.f32 %v3519, %v4051
        %v4053 = vpop.f32.mrb[0].mxu0
        %v4054 = vadd.f32 %v3524, %v4053
        %v4055 = vpop.f32.mrb[0].mxu0
        %v4056 = vadd.f32 %v3524, %v4055
        %4057 = vmatprep.mubr.bf16.mxu0 %v3647
        %4058 = vmatmul.mubr.bf16.gmra.mrb[0].mxu0 %v3646
        %v4059 = vpop.f32.mrb[0].mxu0
        %v4060 = vadd.f32 %v3529, %v4059
        %v4061 = vpop.f32.mrb[0].mxu0
        %v4062 = vadd.f32 %v3529, %v4061
        %v4063 = vpop.f32.mrb[0].mxu0
        %v4064 = vadd.f32 %v3534, %v4063
        %v4065 = vpop.f32.mrb[0].mxu0
        %v4066 = vadd.f32 %v3534, %v4065
        %4067 = vmatprep.mubr.bf16.mxu0 %v3649
        %4068 = vmatmul.mubr.bf16.gmra.mrb[0].mxu0 %v3648
        %v4069 = vpop.f32.mrb[0].mxu0
        %v4070 = vadd.f32 %v3539, %v4069
        %v4071 = vpop.f32.mrb[0].mxu0
        %v4072 = vadd.f32 %v3539, %v4071
        %v4073 = vpop.f32.mrb[0].mxu0
        %v4074 = vadd.f32 %v3544, %v4073
        %v4075 = vpop.f32.mrb[0].mxu0
        %v4076 = vadd.f32 %v3544, %v4075
        %4077 = vmatprep.mubr.bf16.mxu0 %v3651
        %4078 = vmatmul.mubr.bf16.gmra.mrb[0].mxu0 %v3650
        %v4079 = vpop.f32.mrb[0].mxu0
        %v4080 = vadd.f32 %v3549, %v4079
        %v4081 = vpop.f32.mrb[0].mxu0
        %v4082 = vadd.f32 %v3549, %v4081
        %v4083 = vpop.f32.mrb[0].mxu0
        %v4084 = vadd.f32 %v3554, %v4083
        %v4085 = vpop.f32.mrb[0].mxu0
        %v4086 = vadd.f32 %v3554, %v4085
        %4087 = vmatprep.mubr.bf16.mxu0 %v3653
        %4088 = vmatmul.mubr.bf16.gmra.mrb[0].mxu0 %v3652
        %v4089 = vpop.f32.mrb[0].mxu0
        %v4090 = vadd.f32 %v3559, %v4089
        %v4091 = vpop.f32.mrb[0].mxu0
        %v4092 = vadd.f32 %v3559, %v4091
        %v4093 = vpop.f32.mrb[0].mxu0
        %v4094 = vadd.f32 %v3564, %v4093
        %v4095 = vpop.f32.mrb[0].mxu0
        %v4096 = vadd.f32 %v3564, %v4095
        %4097 = vmatprep.mubr.bf16.mxu0 %v3655
        %4098 = vmatmul.mubr.bf16.gmra.mrb[0].mxu0 %v3654
        %v4099 = vpop.f32.mrb[0].mxu0
        %v4100 = vadd.f32 %v3569, %v4099
        %v4101 = vpop.f32.mrb[0].mxu0
        %v4102 = vadd.f32 %v3569, %v4101
        %v4103 = vpop.f32.mrb[0].mxu0
        %v4104 = vadd.f32 %v3574, %v4103
        %v4105 = vpop.f32.mrb[0].mxu0
        %v4106 = vadd.f32 %v3574, %v4105
        %4107 = vmatprep.mubr.bf16.mxu0 %v3657
        %4108 = vmatmul.mubr.bf16.gmra.mrb[0].mxu0 %v3656
        %v4109 = vpop.f32.mrb[0].mxu0
        %v4110 = vadd.f32 %v3579, %v4109
        %v4111 = vpop.f32.mrb[0].mxu0
        %v4112 = vadd.f32 %v3579, %v4111
        %v4113 = vpop.f32.mrb[0].mxu0
        %v4114 = vadd.f32 %v3584, %v4113
        %v4115 = vpop.f32.mrb[0].mxu0
        %v4116 = vadd.f32 %v3584, %v4115
        %4117 = vmatprep.mubr.bf16.mxu0 %v3659
        %4118 = vmatmul.mubr.bf16.gmra.mrb[0].mxu0 %v3658
        %v4119 = vpop.f32.mrb[0].mxu0
        %v4120 = vadd.f32 %v3589, %v4119
        %v4121 = vpop.f32.mrb[0].mxu0
        %v4122 = vadd.f32 %v3589, %v4121
        %v4123 = vpop.f32.mrb[0].mxu0
        %v4124 = vadd.f32 %v3594, %v4123
        %v4125 = vpop.f32.mrb[0].mxu0
        %v4126 = vadd.f32 %v3594, %v4125
        %4127 = vdwg.mxu0
        %v4128 = vmax.f32 %v3711, 0.0
        %v4129 = vmax.f32 %v3713, 0.0
        %v4130 = vmax.f32 %v3824, 0.0
        %v4131 = vmax.f32 %v3826, 0.0
        %v4132 = vmax.f32 %v3937, 0.0
        %v4133 = vmax.f32 %v3939, 0.0
        %v4134 = vmax.f32 %v4050, 0.0
        %v4135 = vmax.f32 %v4052, 0.0
        %v4136 = vmax.f32 %v3715, 0.0
        %v4137 = vmax.f32 %v3717, 0.0
        %v4138 = vmax.f32 %v3828, 0.0
        %v4139 = vmax.f32 %v3830, 0.0
        %v4140 = vmax.f32 %v3941, 0.0
        %v4141 = vmax.f32 %v3943, 0.0
        %v4142 = vmax.f32 %v4054, 0.0
        %v4143 = vmax.f32 %v4056, 0.0
        %v4144 = vmax.f32 %v3721, 0.0
        %v4145 = vmax.f32 %v3723, 0.0
        %v4146 = vmax.f32 %v3834, 0.0
        %v4147 = vmax.f32 %v3836, 0.0
        %v4148 = vmax.f32 %v3947, 0.0
        %v4149 = vmax.f32 %v3949, 0.0
        %v4150 = vmax.f32 %v4060, 0.0
        %v4151 = vmax.f32 %v4062, 0.0
        %v4152 = vmax.f32 %v3725, 0.0
        %v4153 = vmax.f32 %v3727, 0.0
        %v4154 = vmax.f32 %v3838, 0.0
        %v4155 = vmax.f32 %v3840, 0.0
        %v4156 = vmax.f32 %v3951, 0.0
        %v4157 = vmax.f32 %v3953, 0.0
        %v4158 = vmax.f32 %v4064, 0.0
        %v4159 = vmax.f32 %v4066, 0.0
        %v4160 = vmax.f32 %v3731, 0.0
        %v4161 = vmax.f32 %v3733, 0.0
        %v4162 = vmax.f32 %v3844, 0.0
        %v4163 = vmax.f32 %v3846, 0.0
        %v4164 = vmax.f32 %v3957, 0.0
        %v4165 = vmax.f32 %v3959, 0.0
        %v4166 = vmax.f32 %v4070, 0.0
        %v4167 = vmax.f32 %v4072, 0.0
        %v4168 = vmax.f32 %v3735, 0.0
        %v4169 = vmax.f32 %v3737, 0.0
        %v4170 = vmax.f32 %v3848, 0.0
        %v4171 = vmax.f32 %v3850, 0.0
        %v4172 = vmax.f32 %v3961, 0.0
        %v4173 = vmax.f32 %v3963, 0.0
        %v4174 = vmax.f32 %v4074, 0.0
        %v4175 = vmax.f32 %v4076, 0.0
        %v4176 = vmax.f32 %v3741, 0.0
        %v4177 = vmax.f32 %v3743, 0.0
        %v4178 = vmax.f32 %v3854, 0.0
        %v4179 = vmax.f32 %v3856, 0.0
        %v4180 = vmax.f32 %v3967, 0.0
        %v4181 = vmax.f32 %v3969, 0.0
        %v4182 = vmax.f32 %v4080, 0.0
        %v4183 = vmax.f32 %v4082, 0.0
        %v4184 = vmax.f32 %v3745, 0.0
        %v4185 = vmax.f32 %v3747, 0.0
        %v4186 = vmax.f32 %v3858, 0.0
        %v4187 = vmax.f32 %v3860, 0.0
        %v4188 = vmax.f32 %v3971, 0.0
        %v4189 = vmax.f32 %v3973, 0.0
        %v4190 = vmax.f32 %v4084, 0.0
        %v4191 = vmax.f32 %v4086, 0.0
        %v4192 = vmax.f32 %v3751, 0.0
        %v4193 = vmax.f32 %v3753, 0.0
        %v4194 = vmax.f32 %v3864, 0.0
        %v4195 = vmax.f32 %v3866, 0.0
        %v4196 = vmax.f32 %v3977, 0.0
        %v4197 = vmax.f32 %v3979, 0.0
        %v4198 = vmax.f32 %v4090, 0.0
        %v4199 = vmax.f32 %v4092, 0.0
        %v4200 = vmax.f32 %v3755, 0.0
        %v4201 = vmax.f32 %v3757, 0.0
        %v4202 = vmax.f32 %v3868, 0.0
        %v4203 = vmax.f32 %v3870, 0.0
        %v4204 = vmax.f32 %v3981, 0.0
        %v4205 = vmax.f32 %v3983, 0.0
        %v4206 = vmax.f32 %v4094, 0.0
        %v4207 = vmax.f32 %v4096, 0.0
        %v4208 = vmax.f32 %v3761, 0.0
        %v4209 = vmax.f32 %v3763, 0.0
        %v4210 = vmax.f32 %v3874, 0.0
        %v4211 = vmax.f32 %v3876, 0.0
        %v4212 = vmax.f32 %v3987, 0.0
        %v4213 = vmax.f32 %v3989, 0.0
        %v4214 = vmax.f32 %v4100, 0.0
        %v4215 = vmax.f32 %v4102, 0.0
        %v4216 = vmax.f32 %v3765, 0.0
        %v4217 = vmax.f32 %v3767, 0.0
        %v4218 = vmax.f32 %v3878, 0.0
        %v4219 = vmax.f32 %v3880, 0.0
        %v4220 = vmax.f32 %v3991, 0.0
        %v4221 = vmax.f32 %v3993, 0.0
        %v4222 = vmax.f32 %v4104, 0.0
        %v4223 = vmax.f32 %v4106, 0.0
        %v4224 = vmax.f32 %v3771, 0.0
        %v4225 = vmax.f32 %v3773, 0.0
        %v4226 = vmax.f32 %v3884, 0.0
        %v4227 = vmax.f32 %v3886, 0.0
        %v4228 = vmax.f32 %v3997, 0.0
        %v4229 = vmax.f32 %v3999, 0.0
        %v4230 = vmax.f32 %v4110, 0.0
        %v4231 = vmax.f32 %v4112, 0.0
        %v4232 = vmax.f32 %v3775, 0.0
        %v4233 = vmax.f32 %v3777, 0.0
        %v4234 = vmax.f32 %v3888, 0.0
        %v4235 = vmax.f32 %v3890, 0.0
        %v4236 = vmax.f32 %v4001, 0.0
        %v4237 = vmax.f32 %v4003, 0.0
        %v4238 = vmax.f32 %v4114, 0.0
        %v4239 = vmax.f32 %v4116, 0.0
        %v4240 = vmax.f32 %v3781, 0.0
        %v4241 = vmax.f32 %v3783, 0.0
        %v4242 = vmax.f32 %v3894, 0.0
        %v4243 = vmax.f32 %v3896, 0.0
        %v4244 = vmax.f32 %v4007, 0.0
        %v4245 = vmax.f32 %v4009, 0.0
        %v4246 = vmax.f32 %v4120, 0.0
        %v4247 = vmax.f32 %v4122, 0.0
        %v4248 = vmax.f32 %v3785, 0.0
        %v4249 = vmax.f32 %v3787, 0.0
        %v4250 = vmax.f32 %v3898, 0.0
        %v4251 = vmax.f32 %v3900, 0.0
        %v4252 = vmax.f32 %v4011, 0.0
        %v4253 = vmax.f32 %v4013, 0.0
        %v4254 = vmax.f32 %v4124, 0.0
        %v4255 = vmax.f32 %v4126, 0.0
        %v4256 = vld [vmem:[%s9] sm:$0xff]
        %v4257 = vld [vmem:[%s9 + $0x8] sm:$0xff]
        %v4258 = vld [vmem:[%s9 + $0x10] sm:$0xff]
        %v4259 = vld [vmem:[%s9 + $0x18] sm:$0xff]
        %v4260 = vld [vmem:[%s9 + $0x20] sm:$0xff]
        %v4261 = vld [vmem:[%s9 + $0x28] sm:$0xff]
        %v4262 = vld [vmem:[%s9 + $0x30] sm:$0xff]
        %v4263 = vld [vmem:[%s9 + $0x38] sm:$0xff]
        %v4264 = vld [vmem:[%s9 + $0x40] sm:$0xff]
        %v4265 = vld [vmem:[%s9 + $0x48] sm:$0xff]
        %v4266 = vld [vmem:[%s9 + $0x50] sm:$0xff]
        %v4267 = vld [vmem:[%s9 + $0x58] sm:$0xff]
        %v4268 = vld [vmem:[%s9 + $0x60] sm:$0xff]
        %v4269 = vld [vmem:[%s9 + $0x68] sm:$0xff]
        %v4270 = vld [vmem:[%s9 + $0x70] sm:$0xff]
        %v4271 = vld [vmem:[%s9 + $0x78] sm:$0xff]
        %4273 = vset.pattern.permute.xlu0 0
        %4274 = vperm.xlu0 %4273, %v4256
        %v4275 = vpop.permute.xlu0 %4274
        %4278 = vset.pattern.permute.xlu0 0
        %4279 = vperm.xlu0 %4278, %v4257
        %v4280 = vpop.permute.xlu0 %4279
        %4283 = vset.pattern.permute.xlu0 0
        %4284 = vperm.xlu0 %4283, %v4258
        %v4285 = vpop.permute.xlu0 %4284
        %4288 = vset.pattern.permute.xlu0 0
        %4289 = vperm.xlu0 %4288, %v4259
        %v4290 = vpop.permute.xlu0 %4289
        %4293 = vset.pattern.permute.xlu0 0
        %4294 = vperm.xlu0 %4293, %v4260
        %v4295 = vpop.permute.xlu0 %4294
        %4298 = vset.pattern.permute.xlu0 0
        %4299 = vperm.xlu0 %4298, %v4261
        %v4300 = vpop.permute.xlu0 %4299
        %4303 = vset.pattern.permute.xlu0 0
        %4304 = vperm.xlu0 %4303, %v4262
        %v4305 = vpop.permute.xlu0 %4304
        %4308 = vset.pattern.permute.xlu0 0
        %4309 = vperm.xlu0 %4308, %v4263
        %v4310 = vpop.permute.xlu0 %4309
        %4313 = vset.pattern.permute.xlu0 0
        %4314 = vperm.xlu0 %4313, %v4264
        %v4315 = vpop.permute.xlu0 %4314
        %4318 = vset.pattern.permute.xlu0 0
        %4319 = vperm.xlu0 %4318, %v4265
        %v4320 = vpop.permute.xlu0 %4319
        %4323 = vset.pattern.permute.xlu0 0
        %4324 = vperm.xlu0 %4323, %v4266
        %v4325 = vpop.permute.xlu0 %4324
        %4328 = vset.pattern.permute.xlu0 0
        %4329 = vperm.xlu0 %4328, %v4267
        %v4330 = vpop.permute.xlu0 %4329
        %4333 = vset.pattern.permute.xlu0 0
        %4334 = vperm.xlu0 %4333, %v4268
        %v4335 = vpop.permute.xlu0 %4334
        %4338 = vset.pattern.permute.xlu0 0
        %4339 = vperm.xlu0 %4338, %v4269
        %v4340 = vpop.permute.xlu0 %4339
        %4343 = vset.pattern.permute.xlu0 0
        %4344 = vperm.xlu0 %4343, %v4270
        %v4345 = vpop.permute.xlu0 %4344
        %4348 = vset.pattern.permute.xlu0 0
        %4349 = vperm.xlu0 %4348, %v4271
        %v4350 = vpop.permute.xlu0 %4349
        %v4352 = vmul.f32 %v4128, %v4275
        %v4353 = vmul.f32 %v4129, %v4275
        %v4354 = vmul.f32 %v4130, %v4275
        %v4355 = vmul.f32 %v4131, %v4275
        %v4356 = vmul.f32 %v4132, %v4275
        %v4357 = vmul.f32 %v4133, %v4275
        %v4358 = vmul.f32 %v4134, %v4275
        %v4359 = vmul.f32 %v4135, %v4275
        %v4360 = vmul.f32 %v4136, %v4280
        %v4361 = vmul.f32 %v4137, %v4280
        %v4362 = vmul.f32 %v4138, %v4280
        %v4363 = vmul.f32 %v4139, %v4280
        %v4364 = vmul.f32 %v4140, %v4280
        %v4365 = vmul.f32 %v4141, %v4280
        %v4366 = vmul.f32 %v4142, %v4280
        %v4367 = vmul.f32 %v4143, %v4280
        %v4368 = vmul.f32 %v4144, %v4285
        %v4369 = vmul.f32 %v4145, %v4285
        %v4370 = vmul.f32 %v4146, %v4285
        %v4371 = vmul.f32 %v4147, %v4285
        %v4372 = vmul.f32 %v4148, %v4285
        %v4373 = vmul.f32 %v4149, %v4285
        %v4374 = vmul.f32 %v4150, %v4285
        %v4375 = vmul.f32 %v4151, %v4285
        %v4376 = vmul.f32 %v4152, %v4290
        %v4377 = vmul.f32 %v4153, %v4290
        %v4378 = vmul.f32 %v4154, %v4290
        %v4379 = vmul.f32 %v4155, %v4290
        %v4380 = vmul.f32 %v4156, %v4290
        %v4381 = vmul.f32 %v4157, %v4290
        %v4382 = vmul.f32 %v4158, %v4290
        %v4383 = vmul.f32 %v4159, %v4290
        %v4384 = vmul.f32 %v4160, %v4295
        %v4385 = vmul.f32 %v4161, %v4295
        %v4386 = vmul.f32 %v4162, %v4295
        %v4387 = vmul.f32 %v4163, %v4295
        %v4388 = vmul.f32 %v4164, %v4295
        %v4389 = vmul.f32 %v4165, %v4295
        %v4390 = vmul.f32 %v4166, %v4295
        %v4391 = vmul.f32 %v4167, %v4295
        %v4392 = vmul.f32 %v4168, %v4300
        %v4393 = vmul.f32 %v4169, %v4300
        %v4394 = vmul.f32 %v4170, %v4300
        %v4395 = vmul.f32 %v4171, %v4300
        %v4396 = vmul.f32 %v4172, %v4300
        %v4397 = vmul.f32 %v4173, %v4300
        %v4398 = vmul.f32 %v4174, %v4300
        %v4399 = vmul.f32 %v4175, %v4300
        %v4400 = vmul.f32 %v4176, %v4305
        %v4401 = vmul.f32 %v4177, %v4305
        %v4402 = vmul.f32 %v4178, %v4305
        %v4403 = vmul.f32 %v4179, %v4305
        %v4404 = vmul.f32 %v4180, %v4305
        %v4405 = vmul.f32 %v4181, %v4305
        %v4406 = vmul.f32 %v4182, %v4305
        %v4407 = vmul.f32 %v4183, %v4305
        %v4408 = vmul.f32 %v4184, %v4310
        %v4409 = vmul.f32 %v4185, %v4310
        %v4410 = vmul.f32 %v4186, %v4310
        %v4411 = vmul.f32 %v4187, %v4310
        %v4412 = vmul.f32 %v4188, %v4310
        %v4413 = vmul.f32 %v4189, %v4310
        %v4414 = vmul.f32 %v4190, %v4310
        %v4415 = vmul.f32 %v4191, %v4310
        %v4416 = vmul.f32 %v4192, %v4315
        %v4417 = vmul.f32 %v4193, %v4315
        %v4418 = vmul.f32 %v4194, %v4315
        %v4419 = vmul.f32 %v4195, %v4315
        %v4420 = vmul.f32 %v4196, %v4315
        %v4421 = vmul.f32 %v4197, %v4315
        %v4422 = vmul.f32 %v4198, %v4315
        %v4423 = vmul.f32 %v4199, %v4315
        %v4424 = vmul.f32 %v4200, %v4320
        %v4425 = vmul.f32 %v4201, %v4320
        %v4426 = vmul.f32 %v4202, %v4320
        %v4427 = vmul.f32 %v4203, %v4320
        %v4428 = vmul.f32 %v4204, %v4320
        %v4429 = vmul.f32 %v4205, %v4320
        %v4430 = vmul.f32 %v4206, %v4320
        %v4431 = vmul.f32 %v4207, %v4320
        %v4432 = vmul.f32 %v4208, %v4325
        %v4433 = vmul.f32 %v4209, %v4325
        %v4434 = vmul.f32 %v4210, %v4325
        %v4435 = vmul.f32 %v4211, %v4325
        %v4436 = vmul.f32 %v4212, %v4325
        %v4437 = vmul.f32 %v4213, %v4325
        %v4438 = vmul.f32 %v4214, %v4325
        %v4439 = vmul.f32 %v4215, %v4325
        %v4440 = vmul.f32 %v4216, %v4330
        %v4441 = vmul.f32 %v4217, %v4330
        %v4442 = vmul.f32 %v4218, %v4330
        %v4443 = vmul.f32 %v4219, %v4330
        %v4444 = vmul.f32 %v4220, %v4330
        %v4445 = vmul.f32 %v4221, %v4330
        %v4446 = vmul.f32 %v4222, %v4330
        %v4447 = vmul.f32 %v4223, %v4330
        %v4448 = vmul.f32 %v4224, %v4335
        %v4449 = vmul.f32 %v4225, %v4335
        %v4450 = vmul.f32 %v4226, %v4335
        %v4451 = vmul.f32 %v4227, %v4335
        %v4452 = vmul.f32 %v4228, %v4335
        %v4453 = vmul.f32 %v4229, %v4335
        %v4454 = vmul.f32 %v4230, %v4335
        %v4455 = vmul.f32 %v4231, %v4335
        %v4456 = vmul.f32 %v4232, %v4340
        %v4457 = vmul.f32 %v4233, %v4340
        %v4458 = vmul.f32 %v4234, %v4340
        %v4459 = vmul.f32 %v4235, %v4340
        %v4460 = vmul.f32 %v4236, %v4340
        %v4461 = vmul.f32 %v4237, %v4340
        %v4462 = vmul.f32 %v4238, %v4340
        %v4463 = vmul.f32 %v4239, %v4340
        %v4464 = vmul.f32 %v4240, %v4345
        %v4465 = vmul.f32 %v4241, %v4345
        %v4466 = vmul.f32 %v4242, %v4345
        %v4467 = vmul.f32 %v4243, %v4345
        %v4468 = vmul.f32 %v4244, %v4345
        %v4469 = vmul.f32 %v4245, %v4345
        %v4470 = vmul.f32 %v4246, %v4345
        %v4471 = vmul.f32 %v4247, %v4345
        %v4472 = vmul.f32 %v4248, %v4350
        %v4473 = vmul.f32 %v4249, %v4350
        %v4474 = vmul.f32 %v4250, %v4350
        %v4475 = vmul.f32 %v4251, %v4350
        %v4476 = vmul.f32 %v4252, %v4350
        %v4477 = vmul.f32 %v4253, %v4350
        %v4478 = vmul.f32 %v4254, %v4350
        %v4479 = vmul.f32 %v4255, %v4350
        %v4480 = vadd.f32 %v4352, %v4360
        %v4481 = vadd.f32 %v4480, %v4368
        %v4482 = vadd.f32 %v4481, %v4376
        %v4483 = vadd.f32 %v4482, %v4384
        %v4484 = vadd.f32 %v4483, %v4392
        %v4485 = vadd.f32 %v4484, %v4400
        %v4486 = vadd.f32 %v4485, %v4408
        %v4487 = vadd.f32 %v4486, %v4416
        %v4488 = vadd.f32 %v4487, %v4424
        %v4489 = vadd.f32 %v4488, %v4432
        %v4490 = vadd.f32 %v4489, %v4440
        %v4491 = vadd.f32 %v4490, %v4448
        %v4492 = vadd.f32 %v4491, %v4456
        %v4493 = vadd.f32 %v4492, %v4464
        %v4494 = vadd.f32 %v4493, %v4472
        %v4495 = vrot.slane %v4494, 4
        %v4496 = vadd.f32 %v4494, %v4495
        %v4497 = vrot.slane %v4496, 2
        %v4498 = vadd.f32 %v4496, %v4497
        %v4499 = vrot.slane %v4498, 1
        %v4500 = vadd.f32 %v4498, %v4499
        %v4501 = vadd.f32 %v4353, %v4361
        %v4502 = vadd.f32 %v4501, %v4369
        %v4503 = vadd.f32 %v4502, %v4377
        %v4504 = vadd.f32 %v4503, %v4385
        %v4505 = vadd.f32 %v4504, %v4393
        %v4506 = vadd.f32 %v4505, %v4401
        %v4507 = vadd.f32 %v4506, %v4409
        %v4508 = vadd.f32 %v4507, %v4417
        %v4509 = vadd.f32 %v4508, %v4425
        %v4510 = vadd.f32 %v4509, %v4433
        %v4511 = vadd.f32 %v4510, %v4441
        %v4512 = vadd.f32 %v4511, %v4449
        %v4513 = vadd.f32 %v4512, %v4457
        %v4514 = vadd.f32 %v4513, %v4465
        %v4515 = vadd.f32 %v4514, %v4473
        %v4516 = vrot.slane %v4515, 4
        %v4517 = vadd.f32 %v4515, %v4516
        %v4518 = vrot.slane %v4517, 2
        %v4519 = vadd.f32 %v4517, %v4518
        %v4520 = vrot.slane %v4519, 1
        %v4521 = vadd.f32 %v4519, %v4520
        %v4522 = vadd.f32 %v4354, %v4362
        %v4523 = vadd.f32 %v4522, %v4370
        %v4524 = vadd.f32 %v4523, %v4378
        %v4525 = vadd.f32 %v4524, %v4386
        %v4526 = vadd.f32 %v4525, %v4394
        %v4527 = vadd.f32 %v4526, %v4402
        %v4528 = vadd.f32 %v4527, %v4410
        %v4529 = vadd.f32 %v4528, %v4418
        %v4530 = vadd.f32 %v4529, %v4426
        %v4531 = vadd.f32 %v4530, %v4434
        %v4532 = vadd.f32 %v4531, %v4442
        %v4533 = vadd.f32 %v4532, %v4450
        %v4534 = vadd.f32 %v4533, %v4458
        %v4535 = vadd.f32 %v4534, %v4466
        %v4536 = vadd.f32 %v4535, %v4474
        %v4537 = vrot.slane %v4536, 4
        %v4538 = vadd.f32 %v4536, %v4537
        %v4539 = vrot.slane %v4538, 2
        %v4540 = vadd.f32 %v4538, %v4539
        %v4541 = vrot.slane %v4540, 1
        %v4542 = vadd.f32 %v4540, %v4541
        %v4543 = vadd.f32 %v4355, %v4363
        %v4544 = vadd.f32 %v4543, %v4371
        %v4545 = vadd.f32 %v4544, %v4379
        %v4546 = vadd.f32 %v4545, %v4387
        %v4547 = vadd.f32 %v4546, %v4395
        %v4548 = vadd.f32 %v4547, %v4403
        %v4549 = vadd.f32 %v4548, %v4411
        %v4550 = vadd.f32 %v4549, %v4419
        %v4551 = vadd.f32 %v4550, %v4427
        %v4552 = vadd.f32 %v4551, %v4435
        %v4553 = vadd.f32 %v4552, %v4443
        %v4554 = vadd.f32 %v4553, %v4451
        %v4555 = vadd.f32 %v4554, %v4459
        %v4556 = vadd.f32 %v4555, %v4467
        %v4557 = vadd.f32 %v4556, %v4475
        %v4558 = vrot.slane %v4557, 4
        %v4559 = vadd.f32 %v4557, %v4558
        %v4560 = vrot.slane %v4559, 2
        %v4561 = vadd.f32 %v4559, %v4560
        %v4562 = vrot.slane %v4561, 1
        %v4563 = vadd.f32 %v4561, %v4562
        %v4564 = vadd.f32 %v4356, %v4364
        %v4565 = vadd.f32 %v4564, %v4372
        %v4566 = vadd.f32 %v4565, %v4380
        %v4567 = vadd.f32 %v4566, %v4388
        %v4568 = vadd.f32 %v4567, %v4396
        %v4569 = vadd.f32 %v4568, %v4404
        %v4570 = vadd.f32 %v4569, %v4412
        %v4571 = vadd.f32 %v4570, %v4420
        %v4572 = vadd.f32 %v4571, %v4428
        %v4573 = vadd.f32 %v4572, %v4436
        %v4574 = vadd.f32 %v4573, %v4444
        %v4575 = vadd.f32 %v4574, %v4452
        %v4576 = vadd.f32 %v4575, %v4460
        %v4577 = vadd.f32 %v4576, %v4468
        %v4578 = vadd.f32 %v4577, %v4476
        %v4579 = vrot.slane %v4578, 4
        %v4580 = vadd.f32 %v4578, %v4579
        %v4581 = vrot.slane %v4580, 2
        %v4582 = vadd.f32 %v4580, %v4581
        %v4583 = vrot.slane %v4582, 1
        %v4584 = vadd.f32 %v4582, %v4583
        %v4585 = vadd.f32 %v4357, %v4365
        %v4586 = vadd.f32 %v4585, %v4373
        %v4587 = vadd.f32 %v4586, %v4381
        %v4588 = vadd.f32 %v4587, %v4389
        %v4589 = vadd.f32 %v4588, %v4397
        %v4590 = vadd.f32 %v4589, %v4405
        %v4591 = vadd.f32 %v4590, %v4413
        %v4592 = vadd.f32 %v4591, %v4421
        %v4593 = vadd.f32 %v4592, %v4429
        %v4594 = vadd.f32 %v4593, %v4437
        %v4595 = vadd.f32 %v4594, %v4445
        %v4596 = vadd.f32 %v4595, %v4453
        %v4597 = vadd.f32 %v4596, %v4461
        %v4598 = vadd.f32 %v4597, %v4469
        %v4599 = vadd.f32 %v4598, %v4477
        %v4600 = vrot.slane %v4599, 4
        %v4601 = vadd.f32 %v4599, %v4600
        %v4602 = vrot.slane %v4601, 2
        %v4603 = vadd.f32 %v4601, %v4602
        %v4604 = vrot.slane %v4603, 1
        %v4605 = vadd.f32 %v4603, %v4604
        %v4606 = vadd.f32 %v4358, %v4366
        %v4607 = vadd.f32 %v4606, %v4374
        %v4608 = vadd.f32 %v4607, %v4382
        %v4609 = vadd.f32 %v4608, %v4390
        %v4610 = vadd.f32 %v4609, %v4398
        %v4611 = vadd.f32 %v4610, %v4406
        %v4612 = vadd.f32 %v4611, %v4414
        %v4613 = vadd.f32 %v4612, %v4422
        %v4614 = vadd.f32 %v4613, %v4430
        %v4615 = vadd.f32 %v4614, %v4438
        %v4616 = vadd.f32 %v4615, %v4446
        %v4617 = vadd.f32 %v4616, %v4454
        %v4618 = vadd.f32 %v4617, %v4462
        %v4619 = vadd.f32 %v4618, %v4470
        %v4620 = vadd.f32 %v4619, %v4478
        %v4621 = vrot.slane %v4620, 4
        %v4622 = vadd.f32 %v4620, %v4621
        %v4623 = vrot.slane %v4622, 2
        %v4624 = vadd.f32 %v4622, %v4623
        %v4625 = vrot.slane %v4624, 1
        %v4626 = vadd.f32 %v4624, %v4625
        %v4627 = vadd.f32 %v4359, %v4367
        %v4628 = vadd.f32 %v4627, %v4375
        %v4629 = vadd.f32 %v4628, %v4383
        %v4630 = vadd.f32 %v4629, %v4391
        %v4631 = vadd.f32 %v4630, %v4399
        %v4632 = vadd.f32 %v4631, %v4407
        %v4633 = vadd.f32 %v4632, %v4415
        %v4634 = vadd.f32 %v4633, %v4423
        %v4635 = vadd.f32 %v4634, %v4431
        %v4636 = vadd.f32 %v4635, %v4439
        %v4637 = vadd.f32 %v4636, %v4447
        %v4638 = vadd.f32 %v4637, %v4455
        %v4639 = vadd.f32 %v4638, %v4463
        %v4640 = vadd.f32 %v4639, %v4471
        %v4641 = vadd.f32 %v4640, %v4479
        %v4642 = vrot.slane %v4641, 4
        %v4643 = vadd.f32 %v4641, %v4642
        %v4644 = vrot.slane %v4643, 2
        %v4645 = vadd.f32 %v4643, %v4644
        %v4646 = vrot.slane %v4645, 1
        %v4647 = vadd.f32 %v4645, %v4646
        %v4648 = vld [vmem:[#allocation2] sm:$0x1]
        %4650 = vset.pattern.permute.xlu0 0
        %4651 = vperm.xlu0 %4650, %v4648
        %v4652 = vpop.permute.xlu0 %4651
        %v4654 = vlaneseq
        %v4655 = vshrl.u32 %v4654, 7
        %v4656 = vsub.s32 0, %v4655
        %v4657 = vrot.slane %v4652, %v4656
        %v4658 = vadd.f32 %v4500, %v4657
        %v4659 = vadd.f32 %v4521, %v4657
        %v4660 = vadd.f32 %v4542, %v4657
        %v4661 = vadd.f32 %v4563, %v4657
        %v4662 = vadd.f32 %v4584, %v4657
        %v4663 = vadd.f32 %v4605, %v4657
        %v4664 = vadd.f32 %v4626, %v4657
        %v4665 = vadd.f32 %v4647, %v4657
        %v4666 = vxor.u32 %v4658, 2147483648
        %v4667 = vxor.u32 %v4659, 2147483648
        %v4668 = vxor.u32 %v4660, 2147483648
        %v4669 = vxor.u32 %v4661, 2147483648
        %v4670 = vxor.u32 %v4662, 2147483648
        %v4671 = vxor.u32 %v4663, 2147483648
        %v4672 = vxor.u32 %v4664, 2147483648
        %v4673 = vxor.u32 %v4665, 2147483648
        %v4674 = vmul.f32 %v4666, 1.442695
        %v4675 = vpow.pop %v4674
        %v4676 = vmul.f32 %v4667, 1.442695
        %v4677 = vpow.pop %v4676
        %v4678 = vmul.f32 %v4668, 1.442695
        %v4679 = vpow.pop %v4678
        %v4680 = vmul.f32 %v4669, 1.442695
        %v4681 = vpow.pop %v4680
        %v4682 = vmul.f32 %v4670, 1.442695
        %v4683 = vpow.pop %v4682
        %v4684 = vmul.f32 %v4671, 1.442695
        %v4685 = vpow.pop %v4684
        %v4686 = vmul.f32 %v4672, 1.442695
        %v4687 = vpow.pop %v4686
        %v4688 = vmul.f32 %v4673, 1.442695
        %v4689 = vpow.pop %v4688
        %v4690 = vadd.f32 %v4675, 1.0
        %v4691 = vadd.f32 %v4677, 1.0
        %v4692 = vadd.f32 %v4679, 1.0
        %v4693 = vadd.f32 %v4681, 1.0
        %v4694 = vadd.f32 %v4683, 1.0
        %v4695 = vadd.f32 %v4685, 1.0
        %v4696 = vadd.f32 %v4687, 1.0
        %v4697 = vadd.f32 %v4689, 1.0
        %v4698 = vrcp.pop %v4690
        %v4699 = vmul.f32 1.0, %v4698
        %v4700 = vrcp.pop %v4691
        %v4701 = vmul.f32 1.0, %v4700
        %v4702 = vrcp.pop %v4692
        %v4703 = vmul.f32 1.0, %v4702
        %v4704 = vrcp.pop %v4693
        %v4705 = vmul.f32 1.0, %v4704
        %v4706 = vrcp.pop %v4694
        %v4707 = vmul.f32 1.0, %v4706
        %v4708 = vrcp.pop %v4695
        %v4709 = vmul.f32 1.0, %v4708
        %v4710 = vrcp.pop %v4696
        %v4711 = vmul.f32 1.0, %v4710
        %v4712 = vrcp.pop %v4697
        %v4713 = vmul.f32 1.0, %v4712
        %v4722 = vcombine.low %v4699, %v4701
        %v4723 = vcombine.low %v4703, %v4705
        %v4724 = vcombine.low %v4707, %v4709
        %v4725 = vcombine.low %v4711, %v4713
        %v4727 = vunpack.c.l.s4 1966171168
        %v4728 = vunpack.c.0.s8 %v4727
        %v4729 = vlaneseq
        %v4730 = vshrl.u32 %v4729, 7
        %v4731 = vsub.s32 %v4728, %v4730
        %v4732 = vrot.slane %v4722, %v4731
        %v4734 = vunpack.c.l.s4 1966171168
        %v4735 = vunpack.c.0.s8 %v4734
        %v4736 = vlaneseq
        %v4737 = vshrl.u32 %v4736, 7
        %v4738 = vsub.s32 %v4735, %v4737
        %v4739 = vrot.slane %v4723, %v4738
        %v4741 = vunpack.c.l.s4 1966171168
        %v4742 = vunpack.c.0.s8 %v4741
        %v4743 = vlaneseq
        %v4744 = vshrl.u32 %v4743, 7
        %v4745 = vsub.s32 %v4742, %v4744
        %v4746 = vrot.slane %v4724, %v4745
        %v4748 = vunpack.c.l.s4 1966171168
        %v4749 = vunpack.c.0.s8 %v4748
        %v4750 = vlaneseq
        %v4751 = vshrl.u32 %v4750, 7
        %v4752 = vsub.s32 %v4749, %v4751
        %v4753 = vrot.slane %v4725, %v4752
        %v4754 = vcombine.low %v4732, %v4739
        %v4755 = vcombine.low %v4746, %v4753
        %v4757 = vunpack.c.l.s4 1966171168
        %v4758 = vunpack.c.0.s8 %v4757
        %v4759 = vlaneseq
        %v4760 = vshrl.u32 %v4759, 7
        %v4761 = vsub.s32 %v4758, %v4760
        %v4762 = vrot.slane %v4754, %v4761
        %v4764 = vunpack.c.l.s4 1966171168
        %v4765 = vunpack.c.0.s8 %v4764
        %v4766 = vlaneseq
        %v4767 = vshrl.u32 %v4766, 7
        %v4768 = vsub.s32 %v4765, %v4767
        %v4769 = vrot.slane %v4755, %v4768
        %v4770 = vcombine.low %v4762, %v4769
        %4772 = vst [vmem:[%s406] sm:$0xff] %v4770
        %s4773 = sand.u32 %s287, 1
        %s4774 = scalar_lea.sflag [#allocation4], %s4773
        %s4775 = sand.u32 %s287, 1
        %s4776 = smul.addr %s4775, 8
        %s4777 = scalar_lea.vmem [#allocation3], %s4776
        // Predicated region
        $region65: #{tpu_custom_call.1} parent=63 // pred_check
          %p4778 = pneg %p297
        $region66: #{tpu_custom_call.1} parent=63 // pred_check_branch
          %4780 = sbr.rel (%p4778) target = $region68
        $region67: #{tpu_custom_call.1} parent=63 // pred_region
          %s4781 = smul.u32 8, %s32
          %s4783 = ssub.s32 128, 128
          %4784 = vsyncadd %s4774, %s4783
          %s4785 = smul.addr %s31, 8
          %s4786 = sadd.s32 %s4781, %s4785
          %s4787 = smul.addr %s4786, 16
          %s4788 = scalar_lea.hbm %s11, %s4787
          %s4790 = sshll.u32 %s4777, 4
          %s4791 = int_to_ptr.vmem [resolvable:$true] %s4790
          %4793 = dma.vmem_to_hbm [thread:$0]  %s4791, 128, %s4788, %s4774
        $region68: #{tpu_custom_call.1} parent=63 // pred_fallthru
          _
      $region64: #{tpu_custom_call.1} parent=5 // pred_fallthru
        _
      %p4794 = scmp.le.s32.totalorder 2, %s22
      // Predicated region
      $region69: #{tpu_custom_call.1} parent=5 // pred_check
        %p4795 = pneg %p4794
      $region70: #{tpu_custom_call.1} parent=5 // pred_check_branch
        %4797 = sbr.rel (%p4795) target = $region72
      $region71: #{tpu_custom_call.1} parent=5 // pred_region
        %s4798 = ssub.s32 %s22, 2
        // Predicated region
        $region73: #{tpu_custom_call.1} parent=71 // pred_check
          %p4799 = pneg %p303
        $region74: #{tpu_custom_call.1} parent=71 // pred_check_branch
          %4801 = sbr.rel (%p4799) target = $region76
        $region75: #{tpu_custom_call.1} parent=71 // pred_region
          %s4802 = sand.u32 %s288, 1
          %s4803 = scalar_lea.sflag [#allocation4], %s4802
          %s4804 = sand.u32 %s288, 1
          %s4805 = smul.addr %s4804, 8
          %s4806 = scalar_lea.vmem [#allocation3], %s4805
          %4807 = dma.done %s4803, 128
        $region76: #{tpu_custom_call.1} parent=71 // pred_fallthru
          _
      $region72: #{tpu_custom_call.1} parent=5 // pred_fallthru
        _
    $region6: #{tpu_custom_call.1} parent=1 // loop_footer
      %s26 = sadd.s32 1, %s22
    $region7: #{tpu_custom_call.1} parent=1 // loop_footer_branch
      %21 = sbr.rel target = $region3
    $region8: #{tpu_custom_call.1} parent=1 // loop_exit
      _
    %4808 = vsyncpa [#allocation4], 1
    %s4809 = scalar_lea.sflag [#allocation4], 1
    %4810 = vsyncpa %s4809, 1

</llo_original>
